<compile_context>
chip_gen: v5e
topology: v5e:2x2
jax: 0.10.0
libtpu: 0.0.40
codegen_flags: <defaults>
</compile_context>

<pallas_src>
import functools

import jax
import jax.numpy as jnp
from jax import lax
from jax.experimental import pallas as pl
from jax.experimental.pallas import tpu as pltpu


# ---------------------------------------------------------------------------
# Kernel
# ---------------------------------------------------------------------------
def image_classifier_kernel(x_ref, ws_ref, bs_ref, wf_ref, bf_ref, wc_ref,
                            bc_ref, out_ref, pool_acc, *,
                            inv_p, p_true, chunk, stem_dtype, need_mask):
    """One (batch-tile, spatial-tile) grid step.

    x_ref   : [TB, C, TP]    input tile (bf16), C on sublanes, spatial on lanes
    ws_ref  : [C, CH, 1]     stem 1x1-conv weight
    bs_ref  : [1, CH, 1]     stem bias
    wf_ref  : [CH, NF]       projection to (padded) 1000-dim features (bf16)
    bf_ref  : [1, NF]        projection bias (f32, padded cols zero)
    wc_ref  : [NF, NC_PAD]   classifier nn.Linear(1000, 3), zero-padded (bf16)
    bc_ref  : [1, NC_PAD]    classifier bias, zero-padded (f32)
    out_ref : [TB, NC_PAD]   padded logits (resident across the spatial axis)
    pool_acc: VMEM [TB, CH]  f32 running spatial sum of SiLU(stem(x))
    """
    sp = pl.program_id(1)
    tp = x_ref.shape[-1]
    c_in = x_ref.shape[1]

    @pl.when(sp == 0)
    def _init():
        pool_acc[...] = jnp.zeros_like(pool_acc)

    ws = ws_ref[...].astype(stem_dtype)          # [C, CH, 1]
    bs = bs_ref[...].astype(stem_dtype)          # [1, CH, 1]

    def chunk_body(ci, acc):
        off = pl.multiple_of(ci * chunk, chunk)
        xc = x_ref[:, :, pl.ds(off, chunk)].astype(stem_dtype)   # [TB, C, chunk]
        # Stem: K = C (=3) contraction as VPU broadcast FMAs (too shallow for
        # an MXU issue).  h: [TB, CH, chunk], lane dense.
        h = xc[:, 0:1, :] * ws[0:1]
        for c in range(1, c_in):
            h = h + xc[:, c:c + 1, :] * ws[c:c + 1]
        h = h + bs
        h = h * jax.nn.sigmoid(h)                                # SiLU
        if need_mask:
            # Zero out spatial-padding lanes (SiLU(bias) != 0 would otherwise
            # pollute the global-average pool).
            lane = lax.broadcasted_iota(jnp.int32, (1, 1, chunk), 2)
            valid = (sp * tp + off + lane) < p_true
            h = jnp.where(valid, h, jnp.zeros_like(h))
        # Partial global-average-pool: lane-axis reduce, accumulate in f32.
        return acc + jnp.sum(h.astype(jnp.float32), axis=-1)     # [TB, CH]

    acc = lax.fori_loop(0, tp // chunk, chunk_body,
                        jnp.zeros(pool_acc.shape, jnp.float32), unroll=2)
    pool_acc[...] += acc

    # Head runs once per batch tile, on the last spatial step.
    @pl.when(sp == pl.num_programs(1) - 1)
    def _finalize():
        pooled = pool_acc[...] * inv_p                           # mean over true H*W
        feats = jnp.dot(pooled.astype(wf_ref.dtype), wf_ref[...],
                        preferred_element_type=jnp.float32) + bf_ref[...]
        # Dropout (inference mode) => identity.  Exact erf-GELU.
        g = 0.5 * feats * (1.0 + lax.erf(feats * 0.7071067811865476))
        logits = jnp.dot(g.astype(wc_ref.dtype), wc_ref[...],
                         preferred_element_type=jnp.float32) + bc_ref[...]
        out_ref[...] = logits.astype(out_ref.dtype)


# ---------------------------------------------------------------------------
# Generation-aware configuration & tile pickers
# ---------------------------------------------------------------------------
def _tpu_config():
    kind = ""
    try:
        kind = jax.devices()[0].device_kind.lower()
    except Exception:
        pass
    if "v5" in kind:
        # v5e: no packed-bf16 VPU/EUP -> f32 stem math; 128 MiB physical VMEM.
        return dict(stem_dtype=jnp.float32, vmem_limit=96 * 1024 * 1024,
                    max_tp=16384, max_tb=16)
    if "v6" in kind:
        # v6e: bf16 VPU/EUP; 128 MiB physical VMEM.
        return dict(stem_dtype=jnp.bfloat16, vmem_limit=96 * 1024 * 1024,
                    max_tp=16384, max_tb=16)
    # v7x (64 MiB VMEM / TensorCore) or unknown: conservative VMEM budget.
    return dict(stem_dtype=jnp.bfloat16, vmem_limit=48 * 1024 * 1024,
                max_tp=8192, max_tb=16)


def _pick_batch_tile(b, max_tb):
    """Multiple-of-8 batch tile; prefers >= 2 batch blocks so the 'parallel'
    batch grid axis can be split across TensorCores (v7x megacore)."""
    if b <= 8 or b % 8 != 0:
        return b                       # block == full dim (allowed)
    cands = [t for t in range(8, min(b, max_tb) + 1, 8) if b % t == 0]
    multi = [t for t in cands if b // t >= 2]
    if multi:
        return max(multi)
    return max(cands) if cands else b


def _pick_spatial_tiling(p, max_tp):
    """Return (P_pad, TP).  Pads the spatial extent to a multiple of 128 (or of
    TP) so typical non-multiple-of-128 H*W never collapses to one huge tile."""
    p128 = -(-p // 128) * 128
    cap = max(128, (min(max_tp, p128) // 128) * 128)
    t = cap
    while t >= 1024:                   # prefer an exact divisor of p128
        if p128 % t == 0:
            return p128, t
        t -= 128
    if p128 % cap == 0:
        return p128, cap
    if p128 <= cap:
        return p128, p128
    return -(-p128 // cap) * cap, cap  # pad further so one large tile divides


def _pick_chunk(tp, tb, ch, stem_dtype):
    """Lane chunk for the fused stem+SiLU+reduce loop, sized so the per-chunk
    h = [TB, CH, chunk] working set stays near the 64-vreg register file."""
    budget_elems = (32 * 1024 * 4) // jnp.dtype(stem_dtype).itemsize
    c = 256 if tb * ch * 256 <= budget_elems else 128
    c = min(c, tp)
    while tp % c != 0:
        c -= 128
    return c


# ---------------------------------------------------------------------------
# Wrapper
# ---------------------------------------------------------------------------
def image_classifier_forward(x_nchw, params, *, num_classes=3,
                             max_spatial_tile=None, max_batch_tile=None):
    """x_nchw: [B, C, H, W] float32 (PyTorch layout). Returns [B, num_classes] f32."""
    B, C, H, W = x_nchw.shape
    P = H * W
    ws, bs, wf, bf, wc, bc = params
    CH = ws.shape[1]
    NF = wf.shape[1]
    NC_PAD = wc.shape[1]

    cfg = _tpu_config()
    stem_dtype = cfg["stem_dtype"]
    max_tp = max_spatial_tile if max_spatial_tile is not None else cfg["max_tp"]
    max_tb = max_batch_tile if max_batch_tile is not None else cfg["max_tb"]

    TB = _pick_batch_tile(B, max_tb)
    P_pad, TP = _pick_spatial_tiling(P, max_tp)
    chunk = _pick_chunk(TP, TB, CH, stem_dtype)
    grid = (B // TB, P_pad // TP)

    # Keep NCHW; flatten spatial so H*W lands on lanes (no HBM transpose pass);
    # ship activations as bf16 to halve HBM traffic; zero-pad spatial to P_pad
    # (padded lanes masked in-kernel before the pool accumulation).
    x = x_nchw.reshape(B, C, P).astype(jnp.bfloat16)
    if P_pad != P:
        x = jnp.pad(x, ((0, 0), (0, 0), (0, P_pad - P)))

    # Stem params in the stem compute dtype; head matmul weights as bf16
    # (MXU-native on all generations); head biases stay f32.
    ws_k = ws.astype(stem_dtype)
    bs_k = bs.astype(stem_dtype)
    wf_k = wf.astype(jnp.bfloat16)
    wc_k = wc.astype(jnp.bfloat16)
    bf_k = bf.astype(jnp.float32)
    bc_k = bc.astype(jnp.float32)

    kernel = functools.partial(
        image_classifier_kernel, inv_p=1.0 / float(P), p_true=P, chunk=chunk,
        stem_dtype=stem_dtype, need_mask=(P_pad != P))

    cost = pl.CostEstimate(
        flops=int(2 * B * P_pad * C * CH + 4 * B * P_pad * CH
                  + 2 * B * CH * NF + 2 * B * NF * NC_PAD),
        transcendentals=int(2 * B * P_pad * CH + B * NF),
        bytes_accessed=int(x.size * x.dtype.itemsize
                           + sum(int(w.size) * jnp.dtype(w.dtype).itemsize
                                 for w in (ws_k, bs_k, wf_k, bf_k, wc_k, bc_k))
                           + B * NC_PAD * 4),
    )

    def _weight_spec(shape, mode):
        idx = lambda i, j: (0,) * len(shape)      # constant block -> resident
        if mode is None:
            return pl.BlockSpec(shape, idx)
        return pl.BlockSpec(shape, idx, pipeline_mode=mode)

    def _call(weight_mode):
        grid_spec = pltpu.PrefetchScalarGridSpec(
            num_scalar_prefetch=0,
            grid=grid,
            in_specs=[
                pl.BlockSpec((TB, C, TP), lambda i, j: (i, 0, j)),
                _weight_spec((C, CH, 1), weight_mode),
                _weight_spec((1, CH, 1), weight_mode),
                _weight_spec((CH, NF), weight_mode),
                _weight_spec((1, NF), weight_mode),
                _weight_spec((NF, NC_PAD), weight_mode),
                _weight_spec((1, NC_PAD), weight_mode),
            ],
            out_specs=pl.BlockSpec((TB, NC_PAD), lambda i, j: (i, 0)),
            scratch_shapes=[pltpu.VMEM((TB, CH), jnp.float32)],
        )
        return pl.pallas_call(
            kernel,
            out_shape=jax.ShapeDtypeStruct((B, NC_PAD), jnp.float32),
            grid_spec=grid_spec,
            compiler_params=pltpu.CompilerParams(
                dimension_semantics=("parallel", "arbitrary"),
                vmem_limit_bytes=cfg["vmem_limit"]),
            cost_estimate=cost,
        )(x, ws_k, bs_k, wf_k, bf_k, wc_k, bc_k)

    try:
        # Constant-index weight blocks don't need double buffering; single
        # buffering frees ~0.5-1 MiB VMEM (most valuable on v7x's 64 MiB).
        out_padded = _call(pl.Buffered(buffer_count=1))
    except Exception:
        out_padded = _call(None)       # fallback: default double buffering

    return out_padded[:, :num_classes]


# ---------------------------------------------------------------------------
# Params + pure-JAX reference (f32) for a correctness check
# ---------------------------------------------------------------------------
def init_params(key, c_in=3, c_hidden=32, n_feat=1000, n_classes=3,
                n_feat_pad=1024, n_cls_pad=128):
    """Surrogate backbone + faithful head weights, padded to lane-dense shapes
    (padding columns/rows are zero, so padded results are numerically exact)."""
    k = jax.random.split(key, 6)
    ws = (jax.random.normal(k[0], (c_in, c_hidden), jnp.float32) * 0.5
          ).reshape(c_in, c_hidden, 1)
    bs = jax.random.normal(k[1], (1, c_hidden, 1), jnp.float32) * 0.3
    wf = jnp.zeros((c_hidden, n_feat_pad), jnp.float32).at[:, :n_feat].set(
        jax.random.normal(k[2], (c_hidden, n_feat), jnp.float32) * 0.2)
    bf = jnp.zeros((1, n_feat_pad), jnp.float32).at[:, :n_feat].set(
        jax.random.normal(k[3], (1, n_feat), jnp.float32) * 0.05)
    # classifier = nn.Linear(1000, 3), zero-padded to (1024, 128)
    wc = jnp.zeros((n_feat_pad, n_cls_pad), jnp.float32).at[:n_feat, :n_classes].set(
        jax.random.normal(k[4], (n_feat, n_classes), jnp.float32)
        * (1.0 / float(n_feat) ** 0.5))
    bc = jnp.zeros((1, n_cls_pad), jnp.float32).at[:, :n_classes].set(
        jax.random.normal(k[5], (1, n_classes), jnp.float32) * 0.05)
    return (ws, bs, wf, bf, wc, bc)


def reference_forward(x_nchw, params, num_classes=3):
    """Pure-JAX f32 reference of the same surrogate forward."""
    B, C, H, W = x_nchw.shape
    ws, bs, wf, bf, wc, bc = params
    x = x_nchw.reshape(B, C, H * W).astype(jnp.float32)
    h = jnp.einsum("bcp,ch->bhp", x, ws[:, :, 0]) + bs[0, :, 0][None, :, None]
    h = h * jax.nn.sigmoid(h)                      # SiLU
    pooled = jnp.mean(h, axis=-1)                  # [B, CH]
    feats = pooled @ wf + bf[0]
    g = 0.5 * feats * (1.0 + lax.erf(feats * 0.7071067811865476))
    logits = g @ wc + bc[0]
    return logits[:, :num_classes]


if __name__ == "__main__":
    key = jax.random.PRNGKey(0)
    k_x, k_p = jax.random.split(key)

    # Small NCHW image batch; H*W = 576 is NOT a multiple of 128, so this also
    # exercises the spatial padding + in-kernel lane masking path.
    B, C, H, W = 2, 3, 24, 24
    x = jax.random.normal(k_x, (B, C, H, W), jnp.float32)
    params = init_params(k_p, c_in=C)

    # max_spatial_tile=512 -> spatial grid of 2 and a multi-chunk inner loop.
    out = image_classifier_forward(x, params, max_spatial_tile=512)
    out = jax.block_until_ready(out)

    ref = reference_forward(x, params)
    assert out.shape == (B, 3) and out.dtype == jnp.float32
    assert bool(jnp.all(jnp.isfinite(out)))
    assert bool(jnp.allclose(out, ref, atol=2e-2, rtol=5e-2)), (out, ref)
    print("KERNEL_OK")
</pallas_src>

<mosaic_0001>
module attributes {stable_mosaic.version = 11 : i64} {
  func.func @image_classifier_kernel(%arg0: i32, %arg1: i32, %arg2: memref<2x3x512xbf16, #tpu.memory_space<vmem>>, %arg3: memref<3x32x1xbf16, #tpu.memory_space<vmem>>, %arg4: memref<1x32x1xbf16, #tpu.memory_space<vmem>>, %arg5: memref<32x1024xbf16, #tpu.memory_space<vmem>>, %arg6: memref<1x1024xf32, #tpu.memory_space<vmem>>, %arg7: memref<1024x128xbf16, #tpu.memory_space<vmem>>, %arg8: memref<1x128xf32, #tpu.memory_space<vmem>>, %arg9: memref<2x128xf32, #tpu.memory_space<vmem>>, %arg10: memref<2x32xf32, #tpu.memory_space<vmem>>) attributes {dimension_semantics = [#tpu.dimension_semantics<parallel>, #tpu.dimension_semantics<arbitrary>], iteration_bounds = array<i64: 1, 2>, scalar_prefetch = 0 : i64, scratch_operands = 1 : i64, tpu.core_type = #tpu.core_type<tc>, window_params = [{transform_indices = @transform_0, window_bounds = array<i64: 2, 3, 512>}, {pipeline_mode = #tpu.pipeline_mode<synchronous>, transform_indices = @transform_1, window_bounds = array<i64: 3, 32, 1>}, {pipeline_mode = #tpu.pipeline_mode<synchronous>, transform_indices = @transform_2, window_bounds = array<i64: 1, 32, 1>}, {pipeline_mode = #tpu.pipeline_mode<synchronous>, transform_indices = @transform_3, window_bounds = array<i64: 32, 1024>}, {pipeline_mode = #tpu.pipeline_mode<synchronous>, transform_indices = @transform_4, window_bounds = array<i64: 1, 1024>}, {pipeline_mode = #tpu.pipeline_mode<synchronous>, transform_indices = @transform_5, window_bounds = array<i64: 1024, 128>}, {pipeline_mode = #tpu.pipeline_mode<synchronous>, transform_indices = @transform_6, window_bounds = array<i64: 1, 128>}, {transform_indices = @transform_7, window_bounds = array<i64: 2, 128>}]} {
    %c0_i32 = arith.constant 0 : i32
    %0 = arith.cmpi eq, %arg1, %c0_i32 : i32
    %1 = arith.extui %0 : i1 to i32
    %c0_i32_0 = arith.constant 0 : i32
    %2 = arith.cmpi ne, %1, %c0_i32_0 : i32
    scf.if %2 {
      %cst_26 = arith.constant 0.000000e+00 : f32
      %98 = vector.broadcast %cst_26 : f32 to vector<2x32xf32>
      %c0_27 = arith.constant 0 : index
      %c0_28 = arith.constant 0 : index
      %99 = vector.load %arg10[%c0_27, %c0_28] : memref<2x32xf32, #tpu.memory_space<vmem>>, vector<2x32xf32>
      tpu.vector_store %arg10[%c0_27, %c0_28], %98 {strides = array<i32>} : memref<2x32xf32, #tpu.memory_space<vmem>>, vector<2x32xf32>,
    } else {
    }
    %c0 = arith.constant 0 : index
    %c0_1 = arith.constant 0 : index
    %c0_2 = arith.constant 0 : index
    %3 = vector.load %arg3[%c0, %c0_1, %c0_2] : memref<3x32x1xbf16, #tpu.memory_space<vmem>>, vector<3x32x1xbf16>
    %c0_3 = arith.constant 0 : index
    %c0_4 = arith.constant 0 : index
    %c0_5 = arith.constant 0 : index
    %4 = vector.load %arg4[%c0_3, %c0_4, %c0_5] : memref<1x32x1xbf16, #tpu.memory_space<vmem>>, vector<1x32x1xbf16>
    %cst = arith.constant 0.000000e+00 : f32
    %5 = vector.broadcast %cst : f32 to vector<2x32xf32>
    %c0_i32_6 = arith.constant 0 : i32
    %c256_i32 = arith.constant 256 : i32
    %6 = arith.muli %c0_i32_6, %c256_i32 : i32
    %7 = tpu.assume_multiple %6, 256 : i32
    %c0_7 = arith.constant 0 : index
    %c0_8 = arith.constant 0 : index
    %8 = arith.index_cast %7 : i32 to index
    %9 = vector.load %arg2[%c0_7, %c0_8, %8] : memref<2x3x512xbf16, #tpu.memory_space<vmem>>, vector<2x3x256xbf16>
    %10 = vector.extract_strided_slice %9 {offsets = [0, 0, 0], sizes = [2, 1, 256], strides = [1, 1, 1]} : vector<2x3x256xbf16> to vector<2x1x256xbf16>
    %11 = vector.extract_strided_slice %3 {offsets = [0, 0, 0], sizes = [1, 32, 1], strides = [1, 1, 1]} : vector<3x32x1xbf16> to vector<1x32x1xbf16>
    %12 = vector.broadcast %10 : vector<2x1x256xbf16> to vector<2x32x256xbf16>
    %13 = vector.broadcast %11 : vector<1x32x1xbf16> to vector<2x32x256xbf16>
    %14 = arith.mulf %12, %13 : vector<2x32x256xbf16>
    %15 = vector.extract_strided_slice %9 {offsets = [0, 1, 0], sizes = [2, 1, 256], strides = [1, 1, 1]} : vector<2x3x256xbf16> to vector<2x1x256xbf16>
    %16 = vector.extract_strided_slice %3 {offsets = [1, 0, 0], sizes = [1, 32, 1], strides = [1, 1, 1]} : vector<3x32x1xbf16> to vector<1x32x1xbf16>
    %17 = vector.broadcast %15 : vector<2x1x256xbf16> to vector<2x32x256xbf16>
    %18 = vector.broadcast %16 : vector<1x32x1xbf16> to vector<2x32x256xbf16>
    %19 = arith.mulf %17, %18 : vector<2x32x256xbf16>
    %20 = arith.addf %14, %19 : vector<2x32x256xbf16>
    %21 = vector.extract_strided_slice %9 {offsets = [0, 2, 0], sizes = [2, 1, 256], strides = [1, 1, 1]} : vector<2x3x256xbf16> to vector<2x1x256xbf16>
    %22 = vector.extract_strided_slice %3 {offsets = [2, 0, 0], sizes = [1, 32, 1], strides = [1, 1, 1]} : vector<3x32x1xbf16> to vector<1x32x1xbf16>
    %23 = vector.broadcast %21 : vector<2x1x256xbf16> to vector<2x32x256xbf16>
    %24 = vector.broadcast %22 : vector<1x32x1xbf16> to vector<2x32x256xbf16>
    %25 = arith.mulf %23, %24 : vector<2x32x256xbf16>
    %26 = arith.addf %20, %25 : vector<2x32x256xbf16>
    %27 = vector.broadcast %4 : vector<1x32x1xbf16> to vector<2x32x256xbf16>
    %28 = arith.addf %26, %27 : vector<2x32x256xbf16>
    %29 = arith.negf %28 : vector<2x32x256xbf16>
    %30 = math.exp %29 : vector<2x32x256xbf16>
    %cst_9 = arith.constant 1.000000e+00 : bf16
    %31 = vector.broadcast %cst_9 : bf16 to vector<2x32x256xbf16>
    %32 = arith.addf %31, %30 : vector<2x32x256xbf16>
    %33 = arith.divf %31, %32 : vector<2x32x256xbf16>
    %34 = arith.mulf %28, %33 : vector<2x32x256xbf16>
    %35 = tpu.iota {dimensions = array<i32: 2>} : vector<1x1x256xi32>
    %c512_i32 = arith.constant 512 : i32
    %36 = arith.muli %arg1, %c512_i32 : i32
    %37 = arith.addi %36, %7 : i32
    %38 = vector.broadcast %37 : i32 to vector<1x1x256xi32>
    %39 = arith.addi %38, %35 : vector<1x1x256xi32>
    %c576_i32 = arith.constant 576 : i32
    %40 = vector.broadcast %c576_i32 : i32 to vector<1x1x256xi32>
    %41 = arith.cmpi slt, %39, %40 : vector<1x1x256xi32>
    %cst_10 = arith.constant 0.000000e+00 : bf16
    %42 = vector.broadcast %cst_10 : bf16 to vector<2x32x256xbf16>
    %43 = vector.shape_cast %41 : vector<1x1x256xi1> to vector<1x1x256xi1>
    %44 = vector.broadcast %43 : vector<1x1x256xi1> to vector<2x32x256xi1>
    %45 = arith.select %44, %34, %42 : vector<2x32x256xi1>, vector<2x32x256xbf16>
    %46 = arith.extf %45 : vector<2x32x256xbf16> to vector<2x32x256xf32>
    %cst_11 = arith.constant dense<0.000000e+00> : vector<2x32xf32>
    %47 = vector.multi_reduction <add>, %46, %cst_11 [2] : vector<2x32x256xf32> to vector<2x32xf32>
    %48 = arith.addf %5, %47 : vector<2x32xf32>
    %c1_i32 = arith.constant 1 : i32
    %c256_i32_12 = arith.constant 256 : i32
    %49 = arith.muli %c1_i32, %c256_i32_12 : i32
    %50 = tpu.assume_multiple %49, 256 : i32
    %c0_13 = arith.constant 0 : index
    %c0_14 = arith.constant 0 : index
    %51 = arith.index_cast %50 : i32 to index
    %52 = vector.load %arg2[%c0_13, %c0_14, %51] : memref<2x3x512xbf16, #tpu.memory_space<vmem>>, vector<2x3x256xbf16>
    %53 = vector.extract_strided_slice %52 {offsets = [0, 0, 0], sizes = [2, 1, 256], strides = [1, 1, 1]} : vector<2x3x256xbf16> to vector<2x1x256xbf16>
    %54 = vector.extract_strided_slice %3 {offsets = [0, 0, 0], sizes = [1, 32, 1], strides = [1, 1, 1]} : vector<3x32x1xbf16> to vector<1x32x1xbf16>
    %55 = vector.broadcast %53 : vector<2x1x256xbf16> to vector<2x32x256xbf16>
    %56 = vector.broadcast %54 : vector<1x32x1xbf16> to vector<2x32x256xbf16>
    %57 = arith.mulf %55, %56 : vector<2x32x256xbf16>
    %58 = vector.extract_strided_slice %52 {offsets = [0, 1, 0], sizes = [2, 1, 256], strides = [1, 1, 1]} : vector<2x3x256xbf16> to vector<2x1x256xbf16>
    %59 = vector.extract_strided_slice %3 {offsets = [1, 0, 0], sizes = [1, 32, 1], strides = [1, 1, 1]} : vector<3x32x1xbf16> to vector<1x32x1xbf16>
    %60 = vector.broadcast %58 : vector<2x1x256xbf16> to vector<2x32x256xbf16>
    %61 = vector.broadcast %59 : vector<1x32x1xbf16> to vector<2x32x256xbf16>
    %62 = arith.mulf %60, %61 : vector<2x32x256xbf16>
    %63 = arith.addf %57, %62 : vector<2x32x256xbf16>
    %64 = vector.extract_strided_slice %52 {offsets = [0, 2, 0], sizes = [2, 1, 256], strides = [1, 1, 1]} : vector<2x3x256xbf16> to vector<2x1x256xbf16>
    %65 = vector.extract_strided_slice %3 {offsets = [2, 0, 0], sizes = [1, 32, 1], strides = [1, 1, 1]} : vector<3x32x1xbf16> to vector<1x32x1xbf16>
    %66 = vector.broadcast %64 : vector<2x1x256xbf16> to vector<2x32x256xbf16>
    %67 = vector.broadcast %65 : vector<1x32x1xbf16> to vector<2x32x256xbf16>
    %68 = arith.mulf %66, %67 : vector<2x32x256xbf16>
    %69 = arith.addf %63, %68 : vector<2x32x256xbf16>
    %70 = vector.broadcast %4 : vector<1x32x1xbf16> to vector<2x32x256xbf16>
    %71 = arith.addf %69, %70 : vector<2x32x256xbf16>
    %72 = arith.negf %71 : vector<2x32x256xbf16>
    %73 = math.exp %72 : vector<2x32x256xbf16>
    %cst_15 = arith.constant 1.000000e+00 : bf16
    %74 = vector.broadcast %cst_15 : bf16 to vector<2x32x256xbf16>
    %75 = arith.addf %74, %73 : vector<2x32x256xbf16>
    %76 = arith.divf %74, %75 : vector<2x32x256xbf16>
    %77 = arith.mulf %71, %76 : vector<2x32x256xbf16>
    %78 = tpu.iota {dimensions = array<i32: 2>} : vector<1x1x256xi32>
    %c512_i32_16 = arith.constant 512 : i32
    %79 = arith.muli %arg1, %c512_i32_16 : i32
    %80 = arith.addi %79, %50 : i32
    %81 = vector.broadcast %80 : i32 to vector<1x1x256xi32>
    %82 = arith.addi %81, %78 : vector<1x1x256xi32>
    %c576_i32_17 = arith.constant 576 : i32
    %83 = vector.broadcast %c576_i32_17 : i32 to vector<1x1x256xi32>
    %84 = arith.cmpi slt, %82, %83 : vector<1x1x256xi32>
    %cst_18 = arith.constant 0.000000e+00 : bf16
    %85 = vector.broadcast %cst_18 : bf16 to vector<2x32x256xbf16>
    %86 = vector.shape_cast %84 : vector<1x1x256xi1> to vector<1x1x256xi1>
    %87 = vector.broadcast %86 : vector<1x1x256xi1> to vector<2x32x256xi1>
    %88 = arith.select %87, %77, %85 : vector<2x32x256xi1>, vector<2x32x256xbf16>
    %89 = arith.extf %88 : vector<2x32x256xbf16> to vector<2x32x256xf32>
    %cst_19 = arith.constant dense<0.000000e+00> : vector<2x32xf32>
    %90 = vector.multi_reduction <add>, %89, %cst_19 [2] : vector<2x32x256xf32> to vector<2x32xf32>
    %91 = arith.addf %48, %90 : vector<2x32xf32>
    %c2_i32 = arith.constant 2 : i32
    %c0_20 = arith.constant 0 : index
    %c0_21 = arith.constant 0 : index
    %92 = vector.load %arg10[%c0_20, %c0_21] : memref<2x32xf32, #tpu.memory_space<vmem>>, vector<2x32xf32>
    %93 = arith.addf %92, %91 : vector<2x32xf32>
    %c0_22 = arith.constant 0 : index
    %c0_23 = arith.constant 0 : index
    %94 = vector.load %arg10[%c0_22, %c0_23] : memref<2x32xf32, #tpu.memory_space<vmem>>, vector<2x32xf32>
    tpu.vector_store %arg10[%c0_22, %c0_23], %93 {strides = array<i32>} : memref<2x32xf32, #tpu.memory_space<vmem>>, vector<2x32xf32>,
    %c1_i32_24 = arith.constant 1 : i32
    %95 = arith.cmpi eq, %arg1, %c1_i32_24 : i32
    %96 = arith.extui %95 : i1 to i32
    %c0_i32_25 = arith.constant 0 : i32
    %97 = arith.cmpi ne, %96, %c0_i32_25 : i32
    scf.if %97 {
      %c0_26 = arith.constant 0 : index
      %c0_27 = arith.constant 0 : index
      %98 = vector.load %arg10[%c0_26, %c0_27] : memref<2x32xf32, #tpu.memory_space<vmem>>, vector<2x32xf32>
      %cst_28 = arith.constant 0.00173611112 : f32
      %99 = vector.broadcast %cst_28 : f32 to vector<2x32xf32>
      %100 = arith.mulf %98, %99 : vector<2x32xf32>
      %101 = arith.truncf %100 : vector<2x32xf32> to vector<2x32xbf16>
      %c0_29 = arith.constant 0 : index
      %c0_30 = arith.constant 0 : index
      %102 = vector.load %arg5[%c0_29, %c0_30] : memref<32x1024xbf16, #tpu.memory_space<vmem>>, vector<32x1024xbf16>
      %cst_31 = arith.constant dense<0.000000e+00> : vector<2x1024xf32>
      %103 = tpu.matmul %101, %102, %cst_31 {dimension_numbers = #tpu.dot_dimension_numbers<[1], [0], [0], [1], [0, 0, 1, 1], [], []>} : vector<2x32xbf16>, vector<32x1024xbf16>, vector<2x1024xf32> -> vector<2x1024xf32>
      %c0_32 = arith.constant 0 : index
      %c0_33 = arith.constant 0 : index
      %104 = vector.load %arg6[%c0_32, %c0_33] : memref<1x1024xf32, #tpu.memory_space<vmem>>, vector<1x1024xf32>
      %105 = vector.broadcast %104 : vector<1x1024xf32> to vector<2x1024xf32>
      %106 = arith.addf %103, %105 : vector<2x1024xf32>
      %cst_34 = arith.constant 5.000000e-01 : f32
      %107 = vector.broadcast %cst_34 : f32 to vector<2x1024xf32>
      %108 = arith.mulf %107, %106 : vector<2x1024xf32>
      %cst_35 = arith.constant 0.707106769 : f32
      %109 = vector.broadcast %cst_35 : f32 to vector<2x1024xf32>
      %110 = arith.mulf %106, %109 : vector<2x1024xf32>
      %111 = math.erf %110 : vector<2x1024xf32>
      %cst_36 = arith.constant 1.000000e+00 : f32
      %112 = vector.broadcast %cst_36 : f32 to vector<2x1024xf32>
      %113 = arith.addf %112, %111 : vector<2x1024xf32>
      %114 = arith.mulf %108, %113 : vector<2x1024xf32>
      %115 = arith.truncf %114 : vector<2x1024xf32> to vector<2x1024xbf16>
      %c0_37 = arith.constant 0 : index
      %c0_38 = arith.constant 0 : index
      %116 = vector.load %arg7[%c0_37, %c0_38] : memref<1024x128xbf16, #tpu.memory_space<vmem>>, vector<1024x128xbf16>
      %cst_39 = arith.constant dense<0.000000e+00> : vector<2x128xf32>
      %117 = tpu.matmul %115, %116, %cst_39 {dimension_numbers = #tpu.dot_dimension_numbers<[1], [0], [0], [1], [0, 0, 1, 1], [], []>} : vector<2x1024xbf16>, vector<1024x128xbf16>, vector<2x128xf32> -> vector<2x128xf32>
      %c0_40 = arith.constant 0 : index
      %c0_41 = arith.constant 0 : index
      %118 = vector.load %arg8[%c0_40, %c0_41] : memref<1x128xf32, #tpu.memory_space<vmem>>, vector<1x128xf32>
      %119 = vector.broadcast %118 : vector<1x128xf32> to vector<2x128xf32>
      %120 = arith.addf %117, %119 : vector<2x128xf32>
      %c0_42 = arith.constant 0 : index
      %c0_43 = arith.constant 0 : index
      %121 = vector.load %arg9[%c0_42, %c0_43] : memref<2x128xf32, #tpu.memory_space<vmem>>, vector<2x128xf32>
      tpu.vector_store %arg9[%c0_42, %c0_43], %120 {strides = array<i32>} : memref<2x128xf32, #tpu.memory_space<vmem>>, vector<2x128xf32>,
    } else {
    }
    return
  }
  func.func @transform_0(%arg0: i32, %arg1: i32) -> (i32, i32, i32) {
    %c0_i32 = arith.constant 0 : i32
    %c0_i32_0 = arith.constant 0 : i32
    return %arg0, %c0_i32, %arg1 : i32, i32, i32
  }
  func.func @transform_1(%arg0: i32, %arg1: i32) -> (i32, i32, i32) {
    %c0_i32 = arith.constant 0 : i32
    %c0_i32_0 = arith.constant 0 : i32
    %c0_i32_1 = arith.constant 0 : i32
    %c0_i32_2 = arith.constant 0 : i32
    return %c0_i32, %c0_i32_0, %c0_i32_1 : i32, i32, i32
  }
  func.func @transform_2(%arg0: i32, %arg1: i32) -> (i32, i32, i32) {
    %c0_i32 = arith.constant 0 : i32
    %c0_i32_0 = arith.constant 0 : i32
    %c0_i32_1 = arith.constant 0 : i32
    %c0_i32_2 = arith.constant 0 : i32
    return %c0_i32, %c0_i32_0, %c0_i32_1 : i32, i32, i32
  }
  func.func @transform_3(%arg0: i32, %arg1: i32) -> (i32, i32) {
    %c0_i32 = arith.constant 0 : i32
    %c0_i32_0 = arith.constant 0 : i32
    %c0_i32_1 = arith.constant 0 : i32
    return %c0_i32, %c0_i32_0 : i32, i32
  }
  func.func @transform_4(%arg0: i32, %arg1: i32) -> (i32, i32) {
    %c0_i32 = arith.constant 0 : i32
    %c0_i32_0 = arith.constant 0 : i32
    %c0_i32_1 = arith.constant 0 : i32
    return %c0_i32, %c0_i32_0 : i32, i32
  }
  func.func @transform_5(%arg0: i32, %arg1: i32) -> (i32, i32) {
    %c0_i32 = arith.constant 0 : i32
    %c0_i32_0 = arith.constant 0 : i32
    %c0_i32_1 = arith.constant 0 : i32
    return %c0_i32, %c0_i32_0 : i32, i32
  }
  func.func @transform_6(%arg0: i32, %arg1: i32) -> (i32, i32) {
    %c0_i32 = arith.constant 0 : i32
    %c0_i32_0 = arith.constant 0 : i32
    %c0_i32_1 = arith.constant 0 : i32
    return %c0_i32, %c0_i32_0 : i32, i32
  }
  func.func @transform_7(%arg0: i32, %arg1: i32) -> (i32, i32) {
    %c0_i32 = arith.constant 0 : i32
    %c0_i32_0 = arith.constant 0 : i32
    return %arg0, %c0_i32 : i32, i32
  }
}

module attributes {stable_mosaic.version = 11 : i64} {
  func.func @image_classifier_kernel(%arg0: i32, %arg1: i32, %arg2: memref<2x3x512xbf16, #tpu.memory_space<vmem>>, %arg3: memref<3x32x1xbf16, #tpu.memory_space<vmem>>, %arg4: memref<1x32x1xbf16, #tpu.memory_space<vmem>>, %arg5: memref<32x1024xbf16, #tpu.memory_space<vmem>>, %arg6: memref<1x1024xf32, #tpu.memory_space<vmem>>, %arg7: memref<1024x128xbf16, #tpu.memory_space<vmem>>, %arg8: memref<1x128xf32, #tpu.memory_space<vmem>>, %arg9: memref<2x128xf32, #tpu.memory_space<vmem>>, %arg10: memref<2x32xf32, #tpu.memory_space<vmem>>) attributes {dimension_semantics = [#tpu.dimension_semantics<parallel>, #tpu.dimension_semantics<arbitrary>], iteration_bounds = array<i64: 1, 2>, scalar_prefetch = 0 : i64, scratch_operands = 1 : i64, tpu.core_type = #tpu.core_type<tc>, window_params = [{transform_indices = @transform_0, window_bounds = array<i64: 2, 3, 512>}, {pipeline_mode = #tpu.pipeline_mode<synchronous>, transform_indices = @transform_1, window_bounds = array<i64: 3, 32, 1>}, {pipeline_mode = #tpu.pipeline_mode<synchronous>, transform_indices = @transform_2, window_bounds = array<i64: 1, 32, 1>}, {pipeline_mode = #tpu.pipeline_mode<synchronous>, transform_indices = @transform_3, window_bounds = array<i64: 32, 1024>}, {pipeline_mode = #tpu.pipeline_mode<synchronous>, transform_indices = @transform_4, window_bounds = array<i64: 1, 1024>}, {pipeline_mode = #tpu.pipeline_mode<synchronous>, transform_indices = @transform_5, window_bounds = array<i64: 1024, 128>}, {pipeline_mode = #tpu.pipeline_mode<synchronous>, transform_indices = @transform_6, window_bounds = array<i64: 1, 128>}, {transform_indices = @transform_7, window_bounds = array<i64: 2, 128>}]} {
    %c0_i32 = arith.constant 0 : i32
    %0 = arith.cmpi eq, %arg1, %c0_i32 : i32
    %1 = arith.extui %0 : i1 to i32
    %c0_i32_0 = arith.constant 0 : i32
    %2 = arith.cmpi ne, %1, %c0_i32_0 : i32
    scf.if %2 {
      %cst_26 = arith.constant 0.000000e+00 : f32
      %98 = vector.broadcast %cst_26 : f32 to vector<2x32xf32>
      %c0_27 = arith.constant 0 : index
      %c0_28 = arith.constant 0 : index
      %99 = vector.load %arg10[%c0_27, %c0_28] : memref<2x32xf32, #tpu.memory_space<vmem>>, vector<2x32xf32>
      tpu.vector_store %arg10[%c0_27, %c0_28], %98 {strides = array<i32>} : memref<2x32xf32, #tpu.memory_space<vmem>>, vector<2x32xf32>,
    } else {
    }
    %c0 = arith.constant 0 : index
    %c0_1 = arith.constant 0 : index
    %c0_2 = arith.constant 0 : index
    %3 = vector.load %arg3[%c0, %c0_1, %c0_2] : memref<3x32x1xbf16, #tpu.memory_space<vmem>>, vector<3x32x1xbf16>
    %c0_3 = arith.constant 0 : index
    %c0_4 = arith.constant 0 : index
    %c0_5 = arith.constant 0 : index
    %4 = vector.load %arg4[%c0_3, %c0_4, %c0_5] : memref<1x32x1xbf16, #tpu.memory_space<vmem>>, vector<1x32x1xbf16>
    %cst = arith.constant 0.000000e+00 : f32
    %5 = vector.broadcast %cst : f32 to vector<2x32xf32>
    %c0_i32_6 = arith.constant 0 : i32
    %c256_i32 = arith.constant 256 : i32
    %6 = arith.muli %c0_i32_6, %c256_i32 : i32
    %7 = tpu.assume_multiple %6, 256 : i32
    %c0_7 = arith.constant 0 : index
    %c0_8 = arith.constant 0 : index
    %8 = arith.index_cast %7 : i32 to index
    %9 = vector.load %arg2[%c0_7, %c0_8, %8] : memref<2x3x512xbf16, #tpu.memory_space<vmem>>, vector<2x3x256xbf16>
    %10 = vector.extract_strided_slice %9 {offsets = [0, 0, 0], sizes = [2, 1, 256], strides = [1, 1, 1]} : vector<2x3x256xbf16> to vector<2x1x256xbf16>
    %11 = vector.extract_strided_slice %3 {offsets = [0, 0, 0], sizes = [1, 32, 1], strides = [1, 1, 1]} : vector<3x32x1xbf16> to vector<1x32x1xbf16>
    %12 = vector.broadcast %10 : vector<2x1x256xbf16> to vector<2x32x256xbf16>
    %13 = vector.broadcast %11 : vector<1x32x1xbf16> to vector<2x32x256xbf16>
    %14 = arith.mulf %12, %13 : vector<2x32x256xbf16>
    %15 = vector.extract_strided_slice %9 {offsets = [0, 1, 0], sizes = [2, 1, 256], strides = [1, 1, 1]} : vector<2x3x256xbf16> to vector<2x1x256xbf16>
    %16 = vector.extract_strided_slice %3 {offsets = [1, 0, 0], sizes = [1, 32, 1], strides = [1, 1, 1]} : vector<3x32x1xbf16> to vector<1x32x1xbf16>
    %17 = vector.broadcast %15 : vector<2x1x256xbf16> to vector<2x32x256xbf16>
    %18 = vector.broadcast %16 : vector<1x32x1xbf16> to vector<2x32x256xbf16>
    %19 = arith.mulf %17, %18 : vector<2x32x256xbf16>
    %20 = arith.addf %14, %19 : vector<2x32x256xbf16>
    %21 = vector.extract_strided_slice %9 {offsets = [0, 2, 0], sizes = [2, 1, 256], strides = [1, 1, 1]} : vector<2x3x256xbf16> to vector<2x1x256xbf16>
    %22 = vector.extract_strided_slice %3 {offsets = [2, 0, 0], sizes = [1, 32, 1], strides = [1, 1, 1]} : vector<3x32x1xbf16> to vector<1x32x1xbf16>
    %23 = vector.broadcast %21 : vector<2x1x256xbf16> to vector<2x32x256xbf16>
    %24 = vector.broadcast %22 : vector<1x32x1xbf16> to vector<2x32x256xbf16>
    %25 = arith.mulf %23, %24 : vector<2x32x256xbf16>
    %26 = arith.addf %20, %25 : vector<2x32x256xbf16>
    %27 = vector.broadcast %4 : vector<1x32x1xbf16> to vector<2x32x256xbf16>
    %28 = arith.addf %26, %27 : vector<2x32x256xbf16>
    %29 = arith.negf %28 : vector<2x32x256xbf16>
    %30 = math.exp %29 : vector<2x32x256xbf16>
    %cst_9 = arith.constant 1.000000e+00 : bf16
    %31 = vector.broadcast %cst_9 : bf16 to vector<2x32x256xbf16>
    %32 = arith.addf %31, %30 : vector<2x32x256xbf16>
    %33 = arith.divf %31, %32 : vector<2x32x256xbf16>
    %34 = arith.mulf %28, %33 : vector<2x32x256xbf16>
    %35 = tpu.iota {dimensions = array<i32: 2>} : vector<1x1x256xi32>
    %c512_i32 = arith.constant 512 : i32
    %36 = arith.muli %arg1, %c512_i32 : i32
    %37 = arith.addi %36, %7 : i32
    %38 = vector.broadcast %37 : i32 to vector<1x1x256xi32>
    %39 = arith.addi %38, %35 : vector<1x1x256xi32>
    %c576_i32 = arith.constant 576 : i32
    %40 = vector.broadcast %c576_i32 : i32 to vector<1x1x256xi32>
    %41 = arith.cmpi slt, %39, %40 : vector<1x1x256xi32>
    %cst_10 = arith.constant 0.000000e+00 : bf16
    %42 = vector.broadcast %cst_10 : bf16 to vector<2x32x256xbf16>
    %43 = vector.shape_cast %41 : vector<1x1x256xi1> to vector<1x1x256xi1>
    %44 = vector.broadcast %43 : vector<1x1x256xi1> to vector<2x32x256xi1>
    %45 = arith.select %44, %34, %42 : vector<2x32x256xi1>, vector<2x32x256xbf16>
    %46 = arith.extf %45 : vector<2x32x256xbf16> to vector<2x32x256xf32>
    %cst_11 = arith.constant dense<0.000000e+00> : vector<2x32xf32>
    %47 = vector.multi_reduction <add>, %46, %cst_11 [2] : vector<2x32x256xf32> to vector<2x32xf32>
    %48 = arith.addf %5, %47 : vector<2x32xf32>
    %c1_i32 = arith.constant 1 : i32
    %c256_i32_12 = arith.constant 256 : i32
    %49 = arith.muli %c1_i32, %c256_i32_12 : i32
    %50 = tpu.assume_multiple %49, 256 : i32
    %c0_13 = arith.constant 0 : index
    %c0_14 = arith.constant 0 : index
    %51 = arith.index_cast %50 : i32 to index
    %52 = vector.load %arg2[%c0_13, %c0_14, %51] : memref<2x3x512xbf16, #tpu.memory_space<vmem>>, vector<2x3x256xbf16>
    %53 = vector.extract_strided_slice %52 {offsets = [0, 0, 0], sizes = [2, 1, 256], strides = [1, 1, 1]} : vector<2x3x256xbf16> to vector<2x1x256xbf16>
    %54 = vector.extract_strided_slice %3 {offsets = [0, 0, 0], sizes = [1, 32, 1], strides = [1, 1, 1]} : vector<3x32x1xbf16> to vector<1x32x1xbf16>
    %55 = vector.broadcast %53 : vector<2x1x256xbf16> to vector<2x32x256xbf16>
    %56 = vector.broadcast %54 : vector<1x32x1xbf16> to vector<2x32x256xbf16>
    %57 = arith.mulf %55, %56 : vector<2x32x256xbf16>
    %58 = vector.extract_strided_slice %52 {offsets = [0, 1, 0], sizes = [2, 1, 256], strides = [1, 1, 1]} : vector<2x3x256xbf16> to vector<2x1x256xbf16>
    %59 = vector.extract_strided_slice %3 {offsets = [1, 0, 0], sizes = [1, 32, 1], strides = [1, 1, 1]} : vector<3x32x1xbf16> to vector<1x32x1xbf16>
    %60 = vector.broadcast %58 : vector<2x1x256xbf16> to vector<2x32x256xbf16>
    %61 = vector.broadcast %59 : vector<1x32x1xbf16> to vector<2x32x256xbf16>
    %62 = arith.mulf %60, %61 : vector<2x32x256xbf16>
    %63 = arith.addf %57, %62 : vector<2x32x256xbf16>
    %64 = vector.extract_strided_slice %52 {offsets = [0, 2, 0], sizes = [2, 1, 256], strides = [1, 1, 1]} : vector<2x3x256xbf16> to vector<2x1x256xbf16>
    %65 = vector.extract_strided_slice %3 {offsets = [2, 0, 0], sizes = [1, 32, 1], strides = [1, 1, 1]} : vector<3x32x1xbf16> to vector<1x32x1xbf16>
    %66 = vector.broadcast %64 : vector<2x1x256xbf16> to vector<2x32x256xbf16>
    %67 = vector.broadcast %65 : vector<1x32x1xbf16> to vector<2x32x256xbf16>
    %68 = arith.mulf %66, %67 : vector<2x32x256xbf16>
    %69 = arith.addf %63, %68 : vector<2x32x256xbf16>
    %70 = vector.broadcast %4 : vector<1x32x1xbf16> to vector<2x32x256xbf16>
    %71 = arith.addf %69, %70 : vector<2x32x256xbf16>
    %72 = arith.negf %71 : vector<2x32x256xbf16>
    %73 = math.exp %72 : vector<2x32x256xbf16>
    %cst_15 = arith.constant 1.000000e+00 : bf16
    %74 = vector.broadcast %cst_15 : bf16 to vector<2x32x256xbf16>
    %75 = arith.addf %74, %73 : vector<2x32x256xbf16>
    %76 = arith.divf %74, %75 : vector<2x32x256xbf16>
    %77 = arith.mulf %71, %76 : vector<2x32x256xbf16>
    %78 = tpu.iota {dimensions = array<i32: 2>} : vector<1x1x256xi32>
    %c512_i32_16 = arith.constant 512 : i32
    %79 = arith.muli %arg1, %c512_i32_16 : i32
    %80 = arith.addi %79, %50 : i32
    %81 = vector.broadcast %80 : i32 to vector<1x1x256xi32>
    %82 = arith.addi %81, %78 : vector<1x1x256xi32>
    %c576_i32_17 = arith.constant 576 : i32
    %83 = vector.broadcast %c576_i32_17 : i32 to vector<1x1x256xi32>
    %84 = arith.cmpi slt, %82, %83 : vector<1x1x256xi32>
    %cst_18 = arith.constant 0.000000e+00 : bf16
    %85 = vector.broadcast %cst_18 : bf16 to vector<2x32x256xbf16>
    %86 = vector.shape_cast %84 : vector<1x1x256xi1> to vector<1x1x256xi1>
    %87 = vector.broadcast %86 : vector<1x1x256xi1> to vector<2x32x256xi1>
    %88 = arith.select %87, %77, %85 : vector<2x32x256xi1>, vector<2x32x256xbf16>
    %89 = arith.extf %88 : vector<2x32x256xbf16> to vector<2x32x256xf32>
    %cst_19 = arith.constant dense<0.000000e+00> : vector<2x32xf32>
    %90 = vector.multi_reduction <add>, %89, %cst_19 [2] : vector<2x32x256xf32> to vector<2x32xf32>
    %91 = arith.addf %48, %90 : vector<2x32xf32>
    %c2_i32 = arith.constant 2 : i32
    %c0_20 = arith.constant 0 : index
    %c0_21 = arith.constant 0 : index
    %92 = vector.load %arg10[%c0_20, %c0_21] : memref<2x32xf32, #tpu.memory_space<vmem>>, vector<2x32xf32>
    %93 = arith.addf %92, %91 : vector<2x32xf32>
    %c0_22 = arith.constant 0 : index
    %c0_23 = arith.constant 0 : index
    %94 = vector.load %arg10[%c0_22, %c0_23] : memref<2x32xf32, #tpu.memory_space<vmem>>, vector<2x32xf32>
    tpu.vector_store %arg10[%c0_22, %c0_23], %93 {strides = array<i32>} : memref<2x32xf32, #tpu.memory_space<vmem>>, vector<2x32xf32>,
    %c1_i32_24 = arith.constant 1 : i32
    %95 = arith.cmpi eq, %arg1, %c1_i32_24 : i32
    %96 = arith.extui %95 : i1 to i32
    %c0_i32_25 = arith.constant 0 : i32
    %97 = arith.cmpi ne, %96, %c0_i32_25 : i32
    scf.if %97 {
      %c0_26 = arith.constant 0 : index
      %c0_27 = arith.constant 0 : index
      %98 = vector.load %arg10[%c0_26, %c0_27] : memref<2x32xf32, #tpu.memory_space<vmem>>, vector<2x32xf32>
      %cst_28 = arith.constant 0.00173611112 : f32
      %99 = vector.broadcast %cst_28 : f32 to vector<2x32xf32>
      %100 = arith.mulf %98, %99 : vector<2x32xf32>
      %101 = arith.truncf %100 : vector<2x32xf32> to vector<2x32xbf16>
      %c0_29 = arith.constant 0 : index
      %c0_30 = arith.constant 0 : index
      %102 = vector.load %arg5[%c0_29, %c0_30] : memref<32x1024xbf16, #tpu.memory_space<vmem>>, vector<32x1024xbf16>
      %cst_31 = arith.constant dense<0.000000e+00> : vector<2x1024xf32>
      %103 = tpu.matmul %101, %102, %cst_31 {dimension_numbers = #tpu.dot_dimension_numbers<[1], [0], [0], [1], [0, 0, 1, 1], [], []>} : vector<2x32xbf16>, vector<32x1024xbf16>, vector<2x1024xf32> -> vector<2x1024xf32>
      %c0_32 = arith.constant 0 : index
      %c0_33 = arith.constant 0 : index
      %104 = vector.load %arg6[%c0_32, %c0_33] : memref<1x1024xf32, #tpu.memory_space<vmem>>, vector<1x1024xf32>
      %105 = vector.broadcast %104 : vector<1x1024xf32> to vector<2x1024xf32>
      %106 = arith.addf %103, %105 : vector<2x1024xf32>
      %cst_34 = arith.constant 5.000000e-01 : f32
      %107 = vector.broadcast %cst_34 : f32 to vector<2x1024xf32>
      %108 = arith.mulf %107, %106 : vector<2x1024xf32>
      %cst_35 = arith.constant 0.707106769 : f32
      %109 = vector.broadcast %cst_35 : f32 to vector<2x1024xf32>
      %110 = arith.mulf %106, %109 : vector<2x1024xf32>
      %111 = math.erf %110 : vector<2x1024xf32>
      %cst_36 = arith.constant 1.000000e+00 : f32
      %112 = vector.broadcast %cst_36 : f32 to vector<2x1024xf32>
      %113 = arith.addf %112, %111 : vector<2x1024xf32>
      %114 = arith.mulf %108, %113 : vector<2x1024xf32>
      %115 = arith.truncf %114 : vector<2x1024xf32> to vector<2x1024xbf16>
      %c0_37 = arith.constant 0 : index
      %c0_38 = arith.constant 0 : index
      %116 = vector.load %arg7[%c0_37, %c0_38] : memref<1024x128xbf16, #tpu.memory_space<vmem>>, vector<1024x128xbf16>
      %cst_39 = arith.constant dense<0.000000e+00> : vector<2x128xf32>
      %117 = tpu.matmul %115, %116, %cst_39 {dimension_numbers = #tpu.dot_dimension_numbers<[1], [0], [0], [1], [0, 0, 1, 1], [], []>} : vector<2x1024xbf16>, vector<1024x128xbf16>, vector<2x128xf32> -> vector<2x128xf32>
      %c0_40 = arith.constant 0 : index
      %c0_41 = arith.constant 0 : index
      %118 = vector.load %arg8[%c0_40, %c0_41] : memref<1x128xf32, #tpu.memory_space<vmem>>, vector<1x128xf32>
      %119 = vector.broadcast %118 : vector<1x128xf32> to vector<2x128xf32>
      %120 = arith.addf %117, %119 : vector<2x128xf32>
      %c0_42 = arith.constant 0 : index
      %c0_43 = arith.constant 0 : index
      %121 = vector.load %arg9[%c0_42, %c0_43] : memref<2x128xf32, #tpu.memory_space<vmem>>, vector<2x128xf32>
      tpu.vector_store %arg9[%c0_42, %c0_43], %120 {strides = array<i32>} : memref<2x128xf32, #tpu.memory_space<vmem>>, vector<2x128xf32>,
    } else {
    }
    return
  }
  func.func @transform_0(%arg0: i32, %arg1: i32) -> (i32, i32, i32) {
    %c0_i32 = arith.constant 0 : i32
    %c0_i32_0 = arith.constant 0 : i32
    return %arg0, %c0_i32, %arg1 : i32, i32, i32
  }
  func.func @transform_1(%arg0: i32, %arg1: i32) -> (i32, i32, i32) {
    %c0_i32 = arith.constant 0 : i32
    %c0_i32_0 = arith.constant 0 : i32
    %c0_i32_1 = arith.constant 0 : i32
    %c0_i32_2 = arith.constant 0 : i32
    return %c0_i32, %c0_i32_0, %c0_i32_1 : i32, i32, i32
  }
  func.func @transform_2(%arg0: i32, %arg1: i32) -> (i32, i32, i32) {
    %c0_i32 = arith.constant 0 : i32
    %c0_i32_0 = arith.constant 0 : i32
    %c0_i32_1 = arith.constant 0 : i32
    %c0_i32_2 = arith.constant 0 : i32
    return %c0_i32, %c0_i32_0, %c0_i32_1 : i32, i32, i32
  }
  func.func @transform_3(%arg0: i32, %arg1: i32) -> (i32, i32) {
    %c0_i32 = arith.constant 0 : i32
    %c0_i32_0 = arith.constant 0 : i32
    %c0_i32_1 = arith.constant 0 : i32
    return %c0_i32, %c0_i32_0 : i32, i32
  }
  func.func @transform_4(%arg0: i32, %arg1: i32) -> (i32, i32) {
    %c0_i32 = arith.constant 0 : i32
    %c0_i32_0 = arith.constant 0 : i32
    %c0_i32_1 = arith.constant 0 : i32
    return %c0_i32, %c0_i32_0 : i32, i32
  }
  func.func @transform_5(%arg0: i32, %arg1: i32) -> (i32, i32) {
    %c0_i32 = arith.constant 0 : i32
    %c0_i32_0 = arith.constant 0 : i32
    %c0_i32_1 = arith.constant 0 : i32
    return %c0_i32, %c0_i32_0 : i32, i32
  }
  func.func @transform_6(%arg0: i32, %arg1: i32) -> (i32, i32) {
    %c0_i32 = arith.constant 0 : i32
    %c0_i32_0 = arith.constant 0 : i32
    %c0_i32_1 = arith.constant 0 : i32
    return %c0_i32, %c0_i32_0 : i32, i32
  }
  func.func @transform_7(%arg0: i32, %arg1: i32) -> (i32, i32) {
    %c0_i32 = arith.constant 0 : i32
    %c0_i32_0 = arith.constant 0 : i32
    return %arg0, %c0_i32 : i32, i32
  }
}

</mosaic_0001>

<llo_original>
// kernel: tpu_custom_call.1
$region0: #{tpu_custom_call.1}
  #allocation0 [shape = 'u32[]', space=smem, size = 0x4, offset = 0x4, fixed_abs, tag = 'smem constant byte address 0x4 - core index']
  #allocation1 [shape = 'u32[72,128]{1,0:T(1,128)}', space=vmem, size = 0x9000, scoped, tag = 'internal scratch']
  #allocation2 [shape = 'f32[2,32]{1,0:T(2,128)}', space=vmem, size = 0x400, scoped, tag = 'scratch operand']
  %s0 = inlined_call_operand.vmem [shape: bf16[2,3,1024], index: 0, kind: input, shape index: {}]
  %s1 = inlined_call_operand.vmem [shape: bf16[3,32,1], index: 1, kind: input, shape index: {}]
  %s2 = inlined_call_operand.vmem [shape: bf16[1,32,1], index: 2, kind: input, shape index: {}]
  %s3 = inlined_call_operand.hbm [shape: bf16[32,1024], index: 3, kind: input, shape index: {}]
  %s4 = inlined_call_operand.vmem [shape: f32[1,1024], index: 4, kind: input, shape index: {}]
  %s5 = inlined_call_operand.hbm [shape: bf16[1024,128], index: 5, kind: input, shape index: {}]
  %s6 = inlined_call_operand.vmem [shape: f32[1,128], index: 6, kind: input, shape index: {}]
  %s7 = inlined_call_operand.hbm [shape: f32[2,128], index: 7, kind: output, shape index: {}]
  %s8 = sld [smem:[#allocation0]]
  $region115: #{tpu_custom_call.1} parent=0
    _
  %s10 = ssub.s32 1, %s8
  %s11 = scalar_select 0, %s10, %s8
  $region1: #{tpu_custom_call.1} parent=0
    #allocation3 [shape = 'u8[16384]{0}', space=vmem, size = 0x4000, scoped, tag = 'input window, operand 0']
    #allocation4 [shape = 'u8[65536]{0}', space=vmem, size = 0x10000, scoped, tag = 'input window, operand 3, single buffered']
    #allocation5 [shape = 's32[2]{0}', space=sflag, size = 0x8, scoped, tag = 'scoped memory for tpu_custom_call.1']
    #allocation6 [shape = 's32[2]{0}', space=sflag, size = 0x8, scoped, tag = 'scoped memory for tpu_custom_call.1']
    #allocation7 [shape = 'u8[262144]{0}', space=vmem, size = 0x40000, scoped, tag = 'input window, operand 5, single buffered']
    #allocation8 [shape = 's32[1]{0}', space=sflag, size = 0x4, scoped, tag = 'scoped memory for tpu_custom_call.1']
    #allocation9 [shape = 'u8[1024]{0}', space=vmem, size = 0x400, scoped, tag = 'output window, operand 0, single buffered']
    %12 = vsyncpa [#allocation5], 0
    %13 = vsyncpa [#allocation8], 0
    %14 = vsyncpa [#allocation6], 0
    loop: start=0, step=1, limit=4
    $region2: #{tpu_custom_call.1} parent=1 // loop_pre_header
      _
    $region3: #{tpu_custom_call.1} parent=1 // loop_header
      %s16 = sphi 0, %s20
      %p17 = scmp.ge.s32.totalorder %s16, 4
      %s23 = sphi 0, %s35
      %s24 = sphi 0, %s31
      %s25 = sphi 0, %s23
      %s26 = sphi 0, %s24
      %s27 = sphi 0, %s25
      %s28 = sphi 0, %s26
      %s40 = sphi 0, %s42
      %s43 = sphi 0, %s40
      %s44 = sphi 0, %s43
      %s60 = sphi 0, %s44
      %s64 = sphi 0, %s64
      %s66 = sphi 0, %s64
      %s67 = sphi 0, %s66
      %s81 = sphi 0, %s67
      %s85 = sphi 0, %s85
      %s87 = sphi 0, %s85
      %s88 = sphi 0, %s87
      %s102 = sphi 0, %s88
      %s106 = sphi 0, %s106
      %s108 = sphi 0, %s106
      %s109 = sphi 0, %s108
      %s123 = sphi 0, %s109
      %s127 = sphi 0, %s127
      %s129 = sphi 0, %s127
      %s130 = sphi 0, %s129
      %s144 = sphi 0, %s130
      %s148 = sphi 0, %s148
      %s150 = sphi 0, %s148
      %s151 = sphi 0, %s150
      %s165 = sphi 0, %s151
      %s169 = sphi 0, %s169
      %s171 = sphi 0, %s169
      %s172 = sphi 0, %s171
      %s186 = sphi 0, %s172
      %s192 = sphi 0, %s194
      %s195 = sphi 0, %s192
      %s196 = sphi 0, %s195
      %s212 = sphi 0, %s196
    $region4: #{tpu_custom_call.1} parent=1 // loop_header_branch
      %19 = sbr.rel (%p17) target = $region8
    $region5: #{tpu_custom_call.1} parent=1 // loop_body
      %s21 = ssub.s32 %s16, 1
      %s22 = ssub.s32 %s16, 2
      %s29 = sadd.s32 1, %s24
      %p30 = scmp.ge.s32.totalorder %s29, 2
      %s31 = scalar_select %p30, 0, %s29
      %s32 = sadd.s32 1, %s23
      %s33 = scalar_select %p30, %s32, %s23
      %p34 = scmp.ge.s32.totalorder %s33, 1
      %s35 = scalar_select %p34, 0, %s33
      %s36 = ssub.s32 %s23, %s35
      %s37 = ssub.s32 %s24, %s31
      %s38 = sor.u32 %s36, %s37
      %p39 = scmp.eq.s32.totalorder %s38, 0
      %s41 = sadd.s32 %s40, 1
      %s42 = scalar_select %p39, %s40, %s41
      %p45 = pneg %p39
      %p46 = scmp.eq.s32.totalorder %s16, 1
      %p47 = por %p45, %p46
      %p48 = scmp.ne.s32.totalorder %s40, %s43
      %p49 = scmp.eq.s32.totalorder %s16, 0
      %p50 = por %p48, %p49
      %p51 = scmp.ne.s32.totalorder %s40, %s43
      %p52 = scmp.eq.s32.totalorder %s21, 1
      %p53 = por %p51, %p52
      %p54 = scmp.ne.s32.totalorder %s43, %s44
      %p55 = scmp.eq.s32.totalorder %s21, 0
      %p56 = por %p54, %p55
      %p57 = scmp.ne.s32.totalorder %s43, %s44
      %p58 = scmp.eq.s32.totalorder %s22, 1
      %p59 = por %p57, %p58
      %p61 = scmp.ne.s32.totalorder %s44, %s60
      %p62 = scmp.eq.s32.totalorder %s22, 0
      %p63 = por %p61, %p62
      %s65 = sadd.s32 %s64, 1
      %p68 = scmp.eq.s32.totalorder %s16, 1
      %p69 = scmp.ne.s32.totalorder %s64, %s66
      %p70 = scmp.eq.s32.totalorder %s16, 0
      %p71 = por %p69, %p70
      %p72 = scmp.ne.s32.totalorder %s64, %s66
      %p73 = scmp.eq.s32.totalorder %s21, 1
      %p74 = por %p72, %p73
      %p75 = scmp.ne.s32.totalorder %s66, %s67
      %p76 = scmp.eq.s32.totalorder %s21, 0
      %p77 = por %p75, %p76
      %p78 = scmp.ne.s32.totalorder %s66, %s67
      %p79 = scmp.eq.s32.totalorder %s22, 1
      %p80 = por %p78, %p79
      %p82 = scmp.ne.s32.totalorder %s67, %s81
      %p83 = scmp.eq.s32.totalorder %s22, 0
      %p84 = por %p82, %p83
      %s86 = sadd.s32 %s85, 1
      %p89 = scmp.eq.s32.totalorder %s16, 1
      %p90 = scmp.ne.s32.totalorder %s85, %s87
      %p91 = scmp.eq.s32.totalorder %s16, 0
      %p92 = por %p90, %p91
      %p93 = scmp.ne.s32.totalorder %s85, %s87
      %p94 = scmp.eq.s32.totalorder %s21, 1
      %p95 = por %p93, %p94
      %p96 = scmp.ne.s32.totalorder %s87, %s88
      %p97 = scmp.eq.s32.totalorder %s21, 0
      %p98 = por %p96, %p97
      %p99 = scmp.ne.s32.totalorder %s87, %s88
      %p100 = scmp.eq.s32.totalorder %s22, 1
      %p101 = por %p99, %p100
      %p103 = scmp.ne.s32.totalorder %s88, %s102
      %p104 = scmp.eq.s32.totalorder %s22, 0
      %p105 = por %p103, %p104
      %s107 = sadd.s32 %s106, 1
      %p110 = scmp.eq.s32.totalorder %s16, 1
      %p111 = scmp.ne.s32.totalorder %s106, %s108
      %p112 = scmp.eq.s32.totalorder %s16, 0
      %p113 = por %p111, %p112
      %p114 = scmp.ne.s32.totalorder %s106, %s108
      %p115 = scmp.eq.s32.totalorder %s21, 1
      %p116 = por %p114, %p115
      %p117 = scmp.ne.s32.totalorder %s108, %s109
      %p118 = scmp.eq.s32.totalorder %s21, 0
      %p119 = por %p117, %p118
      %p120 = scmp.ne.s32.totalorder %s108, %s109
      %p121 = scmp.eq.s32.totalorder %s22, 1
      %p122 = por %p120, %p121
      %p124 = scmp.ne.s32.totalorder %s109, %s123
      %p125 = scmp.eq.s32.totalorder %s22, 0
      %p126 = por %p124, %p125
      %s128 = sadd.s32 %s127, 1
      %p131 = scmp.eq.s32.totalorder %s16, 1
      %p132 = scmp.ne.s32.totalorder %s127, %s129
      %p133 = scmp.eq.s32.totalorder %s16, 0
      %p134 = por %p132, %p133
      %p135 = scmp.ne.s32.totalorder %s127, %s129
      %p136 = scmp.eq.s32.totalorder %s21, 1
      %p137 = por %p135, %p136
      %p138 = scmp.ne.s32.totalorder %s129, %s130
      %p139 = scmp.eq.s32.totalorder %s21, 0
      %p140 = por %p138, %p139
      %p141 = scmp.ne.s32.totalorder %s129, %s130
      %p142 = scmp.eq.s32.totalorder %s22, 1
      %p143 = por %p141, %p142
      %p145 = scmp.ne.s32.totalorder %s130, %s144
      %p146 = scmp.eq.s32.totalorder %s22, 0
      %p147 = por %p145, %p146
      %s149 = sadd.s32 %s148, 1
      %p152 = scmp.eq.s32.totalorder %s16, 1
      %p153 = scmp.ne.s32.totalorder %s148, %s150
      %p154 = scmp.eq.s32.totalorder %s16, 0
      %p155 = por %p153, %p154
      %p156 = scmp.ne.s32.totalorder %s148, %s150
      %p157 = scmp.eq.s32.totalorder %s21, 1
      %p158 = por %p156, %p157
      %p159 = scmp.ne.s32.totalorder %s150, %s151
      %p160 = scmp.eq.s32.totalorder %s21, 0
      %p161 = por %p159, %p160
      %p162 = scmp.ne.s32.totalorder %s150, %s151
      %p163 = scmp.eq.s32.totalorder %s22, 1
      %p164 = por %p162, %p163
      %p166 = scmp.ne.s32.totalorder %s151, %s165
      %p167 = scmp.eq.s32.totalorder %s22, 0
      %p168 = por %p166, %p167
      %s170 = sadd.s32 %s169, 1
      %p173 = scmp.eq.s32.totalorder %s16, 1
      %p174 = scmp.ne.s32.totalorder %s169, %s171
      %p175 = scmp.eq.s32.totalorder %s16, 0
      %p176 = por %p174, %p175
      %p177 = scmp.ne.s32.totalorder %s169, %s171
      %p178 = scmp.eq.s32.totalorder %s21, 1
      %p179 = por %p177, %p178
      %p180 = scmp.ne.s32.totalorder %s171, %s172
      %p181 = scmp.eq.s32.totalorder %s21, 0
      %p182 = por %p180, %p181
      %p183 = scmp.ne.s32.totalorder %s171, %s172
      %p184 = scmp.eq.s32.totalorder %s22, 1
      %p185 = por %p183, %p184
      %p187 = scmp.ne.s32.totalorder %s172, %s186
      %p188 = scmp.eq.s32.totalorder %s22, 0
      %p189 = por %p187, %p188
      %s190 = ssub.s32 %s23, %s35
      %p191 = scmp.eq.s32.totalorder %s190, 0
      %s193 = sadd.s32 %s192, 1
      %s194 = scalar_select %p191, %s192, %s193
      %p197 = pneg %p191
      %p198 = scmp.eq.s32.totalorder %s16, 1
      %p199 = por %p197, %p198
      %p200 = scmp.ne.s32.totalorder %s192, %s195
      %p201 = scmp.eq.s32.totalorder %s16, 0
      %p202 = por %p200, %p201
      %p203 = scmp.ne.s32.totalorder %s192, %s195
      %p204 = scmp.eq.s32.totalorder %s21, 1
      %p205 = por %p203, %p204
      %p206 = scmp.ne.s32.totalorder %s195, %s196
      %p207 = scmp.eq.s32.totalorder %s21, 0
      %p208 = por %p206, %p207
      %p209 = scmp.ne.s32.totalorder %s195, %s196
      %p210 = scmp.eq.s32.totalorder %s22, 1
      %p211 = por %p209, %p210
      %p213 = scmp.ne.s32.totalorder %s196, %s212
      %p214 = scmp.eq.s32.totalorder %s22, 0
      %p215 = por %p213, %p214
      %p216 = scmp.le.s32.totalorder 1, %s16
      %p217 = scmp.lt.s32.totalorder %s16, 3
      %p218 = pnand %p216, %p217
      %p219 = pneg %p218
      // Predicated region
      $region9: #{tpu_custom_call.1} parent=5 // pred_check
        _
      $region10: #{tpu_custom_call.1} parent=5 // pred_check_branch
        %221 = sbr.rel (%p218) target = $region12
      $region11: #{tpu_custom_call.1} parent=5 // pred_region
        %s222 = ssub.s32 %s16, 1
        // Predicated region
        $region13: #{tpu_custom_call.1} parent=11 // pred_check
          %p223 = pneg %p77
        $region14: #{tpu_custom_call.1} parent=11 // pred_check_branch
          %225 = sbr.rel (%p223) target = $region16
        $region15: #{tpu_custom_call.1} parent=11 // pred_region
          _
        $region16: #{tpu_custom_call.1} parent=11 // pred_fallthru
          _
        // Predicated region
        $region17: #{tpu_custom_call.1} parent=11 // pred_check
          %p226 = pneg %p98
        $region18: #{tpu_custom_call.1} parent=11 // pred_check_branch
          %228 = sbr.rel (%p226) target = $region20
        $region19: #{tpu_custom_call.1} parent=11 // pred_region
          _
        $region20: #{tpu_custom_call.1} parent=11 // pred_fallthru
          _
        // Predicated region
        $region21: #{tpu_custom_call.1} parent=11 // pred_check
          %p229 = pneg %p119
        $region22: #{tpu_custom_call.1} parent=11 // pred_check_branch
          %231 = sbr.rel (%p229) target = $region24
        $region23: #{tpu_custom_call.1} parent=11 // pred_region
          %233 = vsyncadd [#allocation5], 0
          %s234 = sshll.u32 %s3, 4
          %s235 = int_to_ptr.hbm [resolvable:$true] %s234
          %s236 = sshll.u32 [#allocation4], 4
          %s237 = int_to_ptr.vmem [resolvable:$true] %s236
          %242 = dma.hbm_to_vmem [thread:$0]  %s235, 2048, %s237, [#allocation5], 512, 512, 32
        $region24: #{tpu_custom_call.1} parent=11 // pred_fallthru
          _
        // Predicated region
        $region25: #{tpu_custom_call.1} parent=11 // pred_check
          %p243 = pneg %p140
        $region26: #{tpu_custom_call.1} parent=11 // pred_check_branch
          %245 = sbr.rel (%p243) target = $region28
        $region27: #{tpu_custom_call.1} parent=11 // pred_region
          _
        $region28: #{tpu_custom_call.1} parent=11 // pred_fallthru
          _
        // Predicated region
        $region29: #{tpu_custom_call.1} parent=11 // pred_check
          %p246 = pneg %p161
        $region30: #{tpu_custom_call.1} parent=11 // pred_check_branch
          %248 = sbr.rel (%p246) target = $region32
        $region31: #{tpu_custom_call.1} parent=11 // pred_region
          %250 = vsyncadd [#allocation8], 0
          %s251 = sshll.u32 %s5, 4
          %s252 = int_to_ptr.hbm [resolvable:$true] %s251
          %s253 = sshll.u32 [#allocation7], 4
          %s254 = int_to_ptr.vmem [resolvable:$true] %s253
          %259 = dma.hbm_to_vmem [thread:$0]  %s252, 8192, %s254, [#allocation8], 64, 64, 4
        $region32: #{tpu_custom_call.1} parent=11 // pred_fallthru
          _
        // Predicated region
        $region33: #{tpu_custom_call.1} parent=11 // pred_check
          %p260 = pneg %p182
        $region34: #{tpu_custom_call.1} parent=11 // pred_check_branch
          %262 = sbr.rel (%p260) target = $region36
        $region35: #{tpu_custom_call.1} parent=11 // pred_region
          _
        $region36: #{tpu_custom_call.1} parent=11 // pred_fallthru
          _
      $region12: #{tpu_custom_call.1} parent=5 // pred_fallthru
        _
      %p263 = scmp.lt.s32.totalorder %s16, 2
      // Predicated region
      $region37: #{tpu_custom_call.1} parent=5 // pred_check
        %p264 = pneg %p263
      $region38: #{tpu_custom_call.1} parent=5 // pred_check_branch
        %266 = sbr.rel (%p264) target = $region40
      $region39: #{tpu_custom_call.1} parent=5 // pred_region
        // Predicated region
        $region41: #{tpu_custom_call.1} parent=39 // pred_check
          %p267 = pneg %p50
        $region42: #{tpu_custom_call.1} parent=39 // pred_check_branch
          %269 = sbr.rel (%p267) target = $region44
        $region43: #{tpu_custom_call.1} parent=39 // pred_region
          %s270 = sand.u32 %s40, 1
          %s271 = sand.u32 %s40, 1
          %s272 = smul.addr %s271, 16
          %s273 = scalar_lea.vmem [#allocation3], %s272
          %s274 = smul.u32 2, %s23
          %s275 = smul.u32 4, %s24
          %s276 = smul.addr %s274, 8
          %s277 = sadd.s32 %s275, %s276
          %s278 = smul.addr %s277, 2
          %s279 = scalar_lea.vmem %s0, %s278
          // Predicated region
          $region45: #{tpu_custom_call.1} parent=43 // pred_check
            _
          $region46: #{tpu_custom_call.1} parent=43 // pred_check_branch
            %281 = sbr.rel (0) target = $region48
          $region47: #{tpu_custom_call.1} parent=43 // pred_region
            // Predicated region
            $region49: #{tpu_custom_call.1} parent=47 // pred_check
              _
            $region50: #{tpu_custom_call.1} parent=47 // pred_check_branch
              %283 = sbr.rel (0) target = $region52
            $region51: #{tpu_custom_call.1} parent=47 // pred_region
              // Predicated region
              $region64: #{tpu_custom_call.1} parent=51 // pred_check
                _
              $region65: #{tpu_custom_call.1} parent=51 // pred_check_branch
                %301 = sbr.rel (0) target = $region67
              $region66: #{tpu_custom_call.1} parent=51 // pred_region
                loop: start=0, step=1, limit=1
                $region68: #{tpu_custom_call.1} parent=66 // loop_pre_header
                  _
                $region69: #{tpu_custom_call.1} parent=66 // loop_header
                  %s303 = sphi 0, %s307
                  %p304 = scmp.ge.s32.totalorder %s303, 1
                  %s308 = sphi %s279, %s279
                  %s309 = sphi %s273, %s273
                $region70: #{tpu_custom_call.1} parent=66 // loop_header_branch
                  %306 = sbr.rel (%p304) target = $region74
                $region71: #{tpu_custom_call.1} parent=66 // loop_body
                  %v310 = vld [vmem:[%s308] sm:$0xff]
                  %311 = vst [vmem:[%s309] sm:$0xff] %v310
                  %v312 = vld [vmem:[%s308 + $0x10] sm:$0xff]
                  %313 = vst [vmem:[%s309 + $0x8] sm:$0xff] %v312
                $region72: #{tpu_custom_call.1} parent=66 // loop_footer
                  %s307 = sadd.s32 1, %s303
                $region73: #{tpu_custom_call.1} parent=66 // loop_footer_branch
                  %302 = sbr.rel target = $region69
                $region74: #{tpu_custom_call.1} parent=66 // loop_exit
                  _
              $region67: #{tpu_custom_call.1} parent=51 // pred_fallthru
                _
              // Predicated region
              $region75: #{tpu_custom_call.1} parent=51 // pred_check
                _
              $region76: #{tpu_custom_call.1} parent=51 // pred_check_branch
                %315 = sbr.rel target = $region78
              $region77: #{tpu_custom_call.1} parent=51 // pred_region
                _
              $region78: #{tpu_custom_call.1} parent=51 // pred_fallthru
                _
            $region52: #{tpu_custom_call.1} parent=47 // pred_fallthru
              _
            // Predicated region
            $region53: #{tpu_custom_call.1} parent=47 // pred_check
              _
            $region54: #{tpu_custom_call.1} parent=47 // pred_check_branch
              %285 = sbr.rel target = $region56
            $region55: #{tpu_custom_call.1} parent=47 // pred_region
              %s287 = ssub.s32 256, 1
              loop: start=0, step=1, limit=1
              $region57: #{tpu_custom_call.1} parent=55 // loop_pre_header
                _
              $region58: #{tpu_custom_call.1} parent=55 // loop_header
                %s289 = sphi 0, %s293
                %p290 = scmp.ge.s32.totalorder %s289, 1
                %s294 = sphi %s279, %s279
                %s295 = sphi %s273, %s273
              $region59: #{tpu_custom_call.1} parent=55 // loop_header_branch
                %292 = sbr.rel (%p290) target = $region63
              $region60: #{tpu_custom_call.1} parent=55 // loop_body
                %v296 = vld [vmem:[%s294] sm:%s287]
                %297 = vst [vmem:[%s295] sm:%s287] %v296
                %v298 = vld [vmem:[%s294 + $0x10] sm:%s287]
                %299 = vst [vmem:[%s295 + $0x8] sm:%s287] %v298
              $region61: #{tpu_custom_call.1} parent=55 // loop_footer
                %s293 = sadd.s32 1, %s289
              $region62: #{tpu_custom_call.1} parent=55 // loop_footer_branch
                %288 = sbr.rel target = $region58
              $region63: #{tpu_custom_call.1} parent=55 // loop_exit
                _
            $region56: #{tpu_custom_call.1} parent=47 // pred_fallthru
              _
          $region48: #{tpu_custom_call.1} parent=43 // pred_fallthru
            _
          %316 = vnop
        $region44: #{tpu_custom_call.1} parent=39 // pred_fallthru
          _
      $region40: #{tpu_custom_call.1} parent=5 // pred_fallthru
        _
      %p317 = scmp.le.s32.totalorder 1, %s16
      %p318 = scmp.lt.s32.totalorder %s16, 3
      %p319 = pnand %p317, %p318
      %p320 = pneg %p319
      // Predicated region
      $region79: #{tpu_custom_call.1} parent=5 // pred_check
        _
      $region80: #{tpu_custom_call.1} parent=5 // pred_check_branch
        %322 = sbr.rel (%p319) target = $region82
      $region81: #{tpu_custom_call.1} parent=5 // pred_region
        %s323 = ssub.s32 %s16, 1
        %s324 = sand.u32 %s43, 1
        %s325 = sand.u32 %s43, 1
        %s326 = smul.addr %s325, 16
        %s327 = scalar_lea.vmem [#allocation3], %s326
        // Predicated region
        $region83: #{tpu_custom_call.1} parent=81 // pred_check
          %p328 = pneg %p56
        $region84: #{tpu_custom_call.1} parent=81 // pred_check_branch
          %330 = sbr.rel (%p328) target = $region86
        $region85: #{tpu_custom_call.1} parent=81 // pred_region
          _
        $region86: #{tpu_custom_call.1} parent=81 // pred_fallthru
          _
        // Predicated region
        $region87: #{tpu_custom_call.1} parent=81 // pred_check
          %p331 = pneg %p119
        $region88: #{tpu_custom_call.1} parent=81 // pred_check_branch
          %333 = sbr.rel (%p331) target = $region90
        $region89: #{tpu_custom_call.1} parent=81 // pred_region
          %335 = dma.done [#allocation5], 2048
        $region90: #{tpu_custom_call.1} parent=81 // pred_fallthru
          _
        // Predicated region
        $region91: #{tpu_custom_call.1} parent=81 // pred_check
          %p336 = pneg %p161
        $region92: #{tpu_custom_call.1} parent=81 // pred_check_branch
          %338 = sbr.rel (%p336) target = $region94
        $region93: #{tpu_custom_call.1} parent=81 // pred_region
          %340 = dma.done [#allocation8], 8192
        $region94: #{tpu_custom_call.1} parent=81 // pred_fallthru
          _
        %s341 = sand.u32 %s43, 1
        %s342 = sand.u32 %s43, 1
        %s343 = smul.addr %s342, 16
        %s344 = scalar_lea.vmem [#allocation3], %s343
        %p345 = pneg %p56
        %p346 = pneg %p53
        %p347 = pneg %p77
        %p348 = pneg %p74
        %p349 = pneg %p98
        %p350 = pneg %p95
        %p351 = pneg %p119
        %p352 = pneg %p116
        %p353 = pneg %p140
        %p354 = pneg %p137
        %p355 = pneg %p161
        %p356 = pneg %p158
        %p357 = pneg %p182
        %p358 = pneg %p179
        %p359 = pneg %p208
        %p360 = pneg %p205
        %s361 = smul.u32 2, %s25
        %s362 = smul.u32 4, %s26
        %p365 = scmp.eq.s32.totalorder %s26, 0
        // Predicated region
        $region95: #{tpu_custom_call.1} parent=81 // pred_check
          %p366 = pneg %p365
        $region96: #{tpu_custom_call.1} parent=81 // pred_check_branch
          %368 = sbr.rel (%p366) target = $region98
        $region97: #{tpu_custom_call.1} parent=81 // pred_region
          %vm369 = vcmask 254976
          %370 = vst.msk [vmem:[#allocation2] sm:$0x3] %vm369, 0.0
        $region98: #{tpu_custom_call.1} parent=81 // pred_fallthru
          _
        %v371 = vld [vmem:[%s1] sm:$0xf]
        %v372 = vld [vmem:[%s1 + $0x4] sm:$0xf]
        %v373 = vld [vmem:[%s1 + $0x8] sm:$0xf]
        %v374 = vld [vmem:[%s1 + $0xc] sm:$0xf]
        %v375 = vld [vmem:[%s1 + $0x10] sm:$0xf]
        %v376 = vld [vmem:[%s1 + $0x14] sm:$0xf]
        %v377 = vld [vmem:[%s1 + $0x18] sm:$0xf]
        %v378 = vld [vmem:[%s1 + $0x1c] sm:$0xf]
        %v379 = vld [vmem:[%s1 + $0x20] sm:$0xf]
        %v380 = vld [vmem:[%s1 + $0x24] sm:$0xf]
        %v381 = vld [vmem:[%s1 + $0x28] sm:$0xf]
        %v382 = vld [vmem:[%s1 + $0x2c] sm:$0xf]
        %v383 = vld [vmem:[%s2] sm:$0xf]
        %v384 = vld [vmem:[%s2 + $0x4] sm:$0xf]
        %v385 = vld [vmem:[%s2 + $0x8] sm:$0xf]
        %v386 = vld [vmem:[%s2 + $0xc] sm:$0xf]
        %v387 = vld [vmem:[%s327] sm:$0xf]
        %v388 = vld [vmem:[%s327 + $0x8] sm:$0xf]
        %390 = vst [vmem:[#allocation1] ss:$4 sm:$0xff] %v387
        %v391 = vld.sshfl [vmem:[#allocation1] sm:$0xff pattern:$0x73625140]
        %v392 = vld.sshfl [vmem:[#allocation1 + $0x8] sm:$0xff pattern:$0x73625140]
        %s394 = scalar_lea.vmem [#allocation1], 32
        %395 = vst [vmem:[%s394] ss:$4 sm:$0xff] %v388
        %v396 = vld.sshfl [vmem:[#allocation1 + $0x20] sm:$0xff pattern:$0x73625140]
        %v397 = vld.sshfl [vmem:[#allocation1 + $0x28] sm:$0xff pattern:$0x73625140]
        %v398 = vpack.i.b16 %v391, %v391
        %v400 = vperm.slane %v398, 0
        %v401 = vpack.i.b16 %v392, %v392
        %v403 = vperm.slane %v401, 0
        %v404 = vpack.i.b16 %v396, %v396
        %v406 = vperm.slane %v404, 0
        %v407 = vpack.i.b16 %v397, %v397
        %v409 = vperm.slane %v407, 0
        %411 = vset.pattern.permute.xlu0 0
        %412 = vperm.xlu0 %411, %v371
        %v413 = vpop.permute.xlu0 %412
        %v416 = vunpack.c.l.s4 839922192
        %v417 = vunpack.c.0.s8 %v416
        %v418 = vperm.slane %v413, %v417
        %420 = vset.pattern.permute.xlu0 0
        %421 = vperm.xlu0 %420, %v372
        %v422 = vpop.permute.xlu0 %421
        %v425 = vunpack.c.l.s4 839922192
        %v426 = vunpack.c.0.s8 %v425
        %v427 = vperm.slane %v422, %v426
        %429 = vset.pattern.permute.xlu0 0
        %430 = vperm.xlu0 %429, %v373
        %v431 = vpop.permute.xlu0 %430
        %v434 = vunpack.c.l.s4 839922192
        %v435 = vunpack.c.0.s8 %v434
        %v436 = vperm.slane %v431, %v435
        %438 = vset.pattern.permute.xlu0 0
        %439 = vperm.xlu0 %438, %v374
        %v440 = vpop.permute.xlu0 %439
        %v443 = vunpack.c.l.s4 839922192
        %v444 = vunpack.c.0.s8 %v443
        %v445 = vperm.slane %v440, %v444
        %v446 = vunpack.c.l.bf16 %v400
        %v447 = vunpack.c.l.bf16 %v403
        %v448 = vunpack.c.l.bf16 %v406
        %v449 = vunpack.c.l.bf16 %v409
        %v450 = vunpack.c.l.bf16 %v418
        %v451 = vunpack.c.l.bf16 %v427
        %v452 = vunpack.c.l.bf16 %v436
        %v453 = vunpack.c.l.bf16 %v445
        %v454 = vmul.f32 %v446, %v450
        %v455 = vmul.f32 %v447, %v450
        %v456 = vmul.f32 %v446, %v451
        %v457 = vmul.f32 %v447, %v451
        %v458 = vmul.f32 %v446, %v452
        %v459 = vmul.f32 %v447, %v452
        %v460 = vmul.f32 %v446, %v453
        %v461 = vmul.f32 %v447, %v453
        %v462 = vmul.f32 %v448, %v450
        %v463 = vmul.f32 %v449, %v450
        %v464 = vmul.f32 %v448, %v451
        %v465 = vmul.f32 %v449, %v451
        %v466 = vmul.f32 %v448, %v452
        %v467 = vmul.f32 %v449, %v452
        %v468 = vmul.f32 %v448, %v453
        %v469 = vmul.f32 %v449, %v453
        %v470 = vpack.c.bf16 %v455, %v454
        %v471 = vpack.c.bf16 %v457, %v456
        %v472 = vpack.c.bf16 %v459, %v458
        %v473 = vpack.c.bf16 %v461, %v460
        %v474 = vpack.c.bf16 %v463, %v462
        %v475 = vpack.c.bf16 %v465, %v464
        %v476 = vpack.c.bf16 %v467, %v466
        %v477 = vpack.c.bf16 %v469, %v468
        %478 = vst [vmem:[#allocation1] ss:$4 sm:$0xff] %v387
        %v479 = vld.sshfl [vmem:[#allocation1] sm:$0xff pattern:$0x73625140]
        %v480 = vld.sshfl [vmem:[#allocation1 + $0x8] sm:$0xff pattern:$0x73625140]
        %s481 = scalar_lea.vmem [#allocation1], 32
        %482 = vst [vmem:[%s481] ss:$4 sm:$0xff] %v388
        %v483 = vld.sshfl [vmem:[#allocation1 + $0x20] sm:$0xff pattern:$0x73625140]
        %v484 = vld.sshfl [vmem:[#allocation1 + $0x28] sm:$0xff pattern:$0x73625140]
        %v485 = vshrl.u32 %v479, 16
        %v486 = vpack.i.b16 %v485, %v485
        %v488 = vperm.slane %v486, 0
        %v489 = vshrl.u32 %v480, 16
        %v490 = vpack.i.b16 %v489, %v489
        %v492 = vperm.slane %v490, 0
        %v493 = vshrl.u32 %v483, 16
        %v494 = vpack.i.b16 %v493, %v493
        %v496 = vperm.slane %v494, 0
        %v497 = vshrl.u32 %v484, 16
        %v498 = vpack.i.b16 %v497, %v497
        %v500 = vperm.slane %v498, 0
        %502 = vset.pattern.permute.xlu0 0
        %503 = vperm.xlu0 %502, %v375
        %v504 = vpop.permute.xlu0 %503
        %v507 = vunpack.c.l.s4 839922192
        %v508 = vunpack.c.0.s8 %v507
        %v509 = vperm.slane %v504, %v508
        %511 = vset.pattern.permute.xlu0 0
        %512 = vperm.xlu0 %511, %v376
        %v513 = vpop.permute.xlu0 %512
        %v516 = vunpack.c.l.s4 839922192
        %v517 = vunpack.c.0.s8 %v516
        %v518 = vperm.slane %v513, %v517
        %520 = vset.pattern.permute.xlu0 0
        %521 = vperm.xlu0 %520, %v377
        %v522 = vpop.permute.xlu0 %521
        %v525 = vunpack.c.l.s4 839922192
        %v526 = vunpack.c.0.s8 %v525
        %v527 = vperm.slane %v522, %v526
        %529 = vset.pattern.permute.xlu0 0
        %530 = vperm.xlu0 %529, %v378
        %v531 = vpop.permute.xlu0 %530
        %v534 = vunpack.c.l.s4 839922192
        %v535 = vunpack.c.0.s8 %v534
        %v536 = vperm.slane %v531, %v535
        %v537 = vunpack.c.l.bf16 %v488
        %v538 = vunpack.c.l.bf16 %v492
        %v539 = vunpack.c.l.bf16 %v496
        %v540 = vunpack.c.l.bf16 %v500
        %v541 = vunpack.c.l.bf16 %v509
        %v542 = vunpack.c.l.bf16 %v518
        %v543 = vunpack.c.l.bf16 %v527
        %v544 = vunpack.c.l.bf16 %v536
        %v545 = vmul.f32 %v537, %v541
        %v546 = vmul.f32 %v538, %v541
        %v547 = vmul.f32 %v537, %v542
        %v548 = vmul.f32 %v538, %v542
        %v549 = vmul.f32 %v537, %v543
        %v550 = vmul.f32 %v538, %v543
        %v551 = vmul.f32 %v537, %v544
        %v552 = vmul.f32 %v538, %v544
        %v553 = vmul.f32 %v539, %v541
        %v554 = vmul.f32 %v540, %v541
        %v555 = vmul.f32 %v539, %v542
        %v556 = vmul.f32 %v540, %v542
        %v557 = vmul.f32 %v539, %v543
        %v558 = vmul.f32 %v540, %v543
        %v559 = vmul.f32 %v539, %v544
        %v560 = vmul.f32 %v540, %v544
        %v561 = vpack.c.bf16 %v546, %v545
        %v562 = vpack.c.bf16 %v548, %v547
        %v563 = vpack.c.bf16 %v550, %v549
        %v564 = vpack.c.bf16 %v552, %v551
        %v565 = vpack.c.bf16 %v554, %v553
        %v566 = vpack.c.bf16 %v556, %v555
        %v567 = vpack.c.bf16 %v558, %v557
        %v568 = vpack.c.bf16 %v560, %v559
        %v569 = vunpack.c.l.bf16 %v470
        %v570 = vunpack.c.h.bf16 %v470
        %v571 = vunpack.c.l.bf16 %v471
        %v572 = vunpack.c.h.bf16 %v471
        %v573 = vunpack.c.l.bf16 %v472
        %v574 = vunpack.c.h.bf16 %v472
        %v575 = vunpack.c.l.bf16 %v473
        %v576 = vunpack.c.h.bf16 %v473
        %v577 = vunpack.c.l.bf16 %v474
        %v578 = vunpack.c.h.bf16 %v474
        %v579 = vunpack.c.l.bf16 %v475
        %v580 = vunpack.c.h.bf16 %v475
        %v581 = vunpack.c.l.bf16 %v476
        %v582 = vunpack.c.h.bf16 %v476
        %v583 = vunpack.c.l.bf16 %v477
        %v584 = vunpack.c.h.bf16 %v477
        %v585 = vunpack.c.l.bf16 %v561
        %v586 = vunpack.c.h.bf16 %v561
        %v587 = vunpack.c.l.bf16 %v562
        %v588 = vunpack.c.h.bf16 %v562
        %v589 = vunpack.c.l.bf16 %v563
        %v590 = vunpack.c.h.bf16 %v563
        %v591 = vunpack.c.l.bf16 %v564
        %v592 = vunpack.c.h.bf16 %v564
        %v593 = vunpack.c.l.bf16 %v565
        %v594 = vunpack.c.h.bf16 %v565
        %v595 = vunpack.c.l.bf16 %v566
        %v596 = vunpack.c.h.bf16 %v566
        %v597 = vunpack.c.l.bf16 %v567
        %v598 = vunpack.c.h.bf16 %v567
        %v599 = vunpack.c.l.bf16 %v568
        %v600 = vunpack.c.h.bf16 %v568
        %v601 = vadd.f32 %v569, %v585
        %v602 = vadd.f32 %v570, %v586
        %v603 = vadd.f32 %v571, %v587
        %v604 = vadd.f32 %v572, %v588
        %v605 = vadd.f32 %v573, %v589
        %v606 = vadd.f32 %v574, %v590
        %v607 = vadd.f32 %v575, %v591
        %v608 = vadd.f32 %v576, %v592
        %v609 = vadd.f32 %v577, %v593
        %v610 = vadd.f32 %v578, %v594
        %v611 = vadd.f32 %v579, %v595
        %v612 = vadd.f32 %v580, %v596
        %v613 = vadd.f32 %v581, %v597
        %v614 = vadd.f32 %v582, %v598
        %v615 = vadd.f32 %v583, %v599
        %v616 = vadd.f32 %v584, %v600
        %v617 = vpack.c.bf16 %v602, %v601
        %v618 = vpack.c.bf16 %v604, %v603
        %v619 = vpack.c.bf16 %v606, %v605
        %v620 = vpack.c.bf16 %v608, %v607
        %v621 = vpack.c.bf16 %v610, %v609
        %v622 = vpack.c.bf16 %v612, %v611
        %v623 = vpack.c.bf16 %v614, %v613
        %v624 = vpack.c.bf16 %v616, %v615
        %625 = vst [vmem:[#allocation1] ss:$4 sm:$0xff] %v387
        %v626 = vld.sshfl [vmem:[#allocation1] sm:$0xff pattern:$0x73625140]
        %v627 = vld.sshfl [vmem:[#allocation1 + $0x8] sm:$0xff pattern:$0x73625140]
        %s628 = scalar_lea.vmem [#allocation1], 32
        %629 = vst [vmem:[%s628] ss:$4 sm:$0xff] %v388
        %v630 = vld.sshfl [vmem:[#allocation1 + $0x20] sm:$0xff pattern:$0x73625140]
        %v631 = vld.sshfl [vmem:[#allocation1 + $0x28] sm:$0xff pattern:$0x73625140]
        %v632 = vpack.i.b16 %v626, %v626
        %v634 = vperm.slane %v632, 1
        %v635 = vpack.i.b16 %v627, %v627
        %v637 = vperm.slane %v635, 1
        %v638 = vpack.i.b16 %v630, %v630
        %v640 = vperm.slane %v638, 1
        %v641 = vpack.i.b16 %v631, %v631
        %v643 = vperm.slane %v641, 1
        %645 = vset.pattern.permute.xlu0 0
        %646 = vperm.xlu0 %645, %v379
        %v647 = vpop.permute.xlu0 %646
        %v650 = vunpack.c.l.s4 839922192
        %v651 = vunpack.c.0.s8 %v650
        %v652 = vperm.slane %v647, %v651
        %654 = vset.pattern.permute.xlu0 0
        %655 = vperm.xlu0 %654, %v380
        %v656 = vpop.permute.xlu0 %655
        %v659 = vunpack.c.l.s4 839922192
        %v660 = vunpack.c.0.s8 %v659
        %v661 = vperm.slane %v656, %v660
        %663 = vset.pattern.permute.xlu0 0
        %664 = vperm.xlu0 %663, %v381
        %v665 = vpop.permute.xlu0 %664
        %v668 = vunpack.c.l.s4 839922192
        %v669 = vunpack.c.0.s8 %v668
        %v670 = vperm.slane %v665, %v669
        %672 = vset.pattern.permute.xlu0 0
        %673 = vperm.xlu0 %672, %v382
        %v674 = vpop.permute.xlu0 %673
        %v677 = vunpack.c.l.s4 839922192
        %v678 = vunpack.c.0.s8 %v677
        %v679 = vperm.slane %v674, %v678
        %v680 = vunpack.c.l.bf16 %v634
        %v681 = vunpack.c.l.bf16 %v637
        %v682 = vunpack.c.l.bf16 %v640
        %v683 = vunpack.c.l.bf16 %v643
        %v684 = vunpack.c.l.bf16 %v652
        %v685 = vunpack.c.l.bf16 %v661
        %v686 = vunpack.c.l.bf16 %v670
        %v687 = vunpack.c.l.bf16 %v679
        %v688 = vmul.f32 %v680, %v684
        %v689 = vmul.f32 %v681, %v684
        %v690 = vmul.f32 %v680, %v685
        %v691 = vmul.f32 %v681, %v685
        %v692 = vmul.f32 %v680, %v686
        %v693 = vmul.f32 %v681, %v686
        %v694 = vmul.f32 %v680, %v687
        %v695 = vmul.f32 %v681, %v687
        %v696 = vmul.f32 %v682, %v684
        %v697 = vmul.f32 %v683, %v684
        %v698 = vmul.f32 %v682, %v685
        %v699 = vmul.f32 %v683, %v685
        %v700 = vmul.f32 %v682, %v686
        %v701 = vmul.f32 %v683, %v686
        %v702 = vmul.f32 %v682, %v687
        %v703 = vmul.f32 %v683, %v687
        %v704 = vpack.c.bf16 %v689, %v688
        %v705 = vpack.c.bf16 %v691, %v690
        %v706 = vpack.c.bf16 %v693, %v692
        %v707 = vpack.c.bf16 %v695, %v694
        %v708 = vpack.c.bf16 %v697, %v696
        %v709 = vpack.c.bf16 %v699, %v698
        %v710 = vpack.c.bf16 %v701, %v700
        %v711 = vpack.c.bf16 %v703, %v702
        %v712 = vunpack.c.l.bf16 %v617
        %v713 = vunpack.c.h.bf16 %v617
        %v714 = vunpack.c.l.bf16 %v618
        %v715 = vunpack.c.h.bf16 %v618
        %v716 = vunpack.c.l.bf16 %v619
        %v717 = vunpack.c.h.bf16 %v619
        %v718 = vunpack.c.l.bf16 %v620
        %v719 = vunpack.c.h.bf16 %v620
        %v720 = vunpack.c.l.bf16 %v621
        %v721 = vunpack.c.h.bf16 %v621
        %v722 = vunpack.c.l.bf16 %v622
        %v723 = vunpack.c.h.bf16 %v622
        %v724 = vunpack.c.l.bf16 %v623
        %v725 = vunpack.c.h.bf16 %v623
        %v726 = vunpack.c.l.bf16 %v624
        %v727 = vunpack.c.h.bf16 %v624
        %v728 = vunpack.c.l.bf16 %v704
        %v729 = vunpack.c.h.bf16 %v704
        %v730 = vunpack.c.l.bf16 %v705
        %v731 = vunpack.c.h.bf16 %v705
        %v732 = vunpack.c.l.bf16 %v706
        %v733 = vunpack.c.h.bf16 %v706
        %v734 = vunpack.c.l.bf16 %v707
        %v735 = vunpack.c.h.bf16 %v707
        %v736 = vunpack.c.l.bf16 %v708
        %v737 = vunpack.c.h.bf16 %v708
        %v738 = vunpack.c.l.bf16 %v709
        %v739 = vunpack.c.h.bf16 %v709
        %v740 = vunpack.c.l.bf16 %v710
        %v741 = vunpack.c.h.bf16 %v710
        %v742 = vunpack.c.l.bf16 %v711
        %v743 = vunpack.c.h.bf16 %v711
        %v744 = vadd.f32 %v712, %v728
        %v745 = vadd.f32 %v713, %v729
        %v746 = vadd.f32 %v714, %v730
        %v747 = vadd.f32 %v715, %v731
        %v748 = vadd.f32 %v716, %v732
        %v749 = vadd.f32 %v717, %v733
        %v750 = vadd.f32 %v718, %v734
        %v751 = vadd.f32 %v719, %v735
        %v752 = vadd.f32 %v720, %v736
        %v753 = vadd.f32 %v721, %v737
        %v754 = vadd.f32 %v722, %v738
        %v755 = vadd.f32 %v723, %v739
        %v756 = vadd.f32 %v724, %v740
        %v757 = vadd.f32 %v725, %v741
        %v758 = vadd.f32 %v726, %v742
        %v759 = vadd.f32 %v727, %v743
        %v760 = vpack.c.bf16 %v745, %v744
        %v761 = vpack.c.bf16 %v747, %v746
        %v762 = vpack.c.bf16 %v749, %v748
        %v763 = vpack.c.bf16 %v751, %v750
        %v764 = vpack.c.bf16 %v753, %v752
        %v765 = vpack.c.bf16 %v755, %v754
        %v766 = vpack.c.bf16 %v757, %v756
        %v767 = vpack.c.bf16 %v759, %v758
        %769 = vset.pattern.permute.xlu0 0
        %770 = vperm.xlu0 %769, %v383
        %v771 = vpop.permute.xlu0 %770
        %v774 = vunpack.c.l.s4 839922192
        %v775 = vunpack.c.0.s8 %v774
        %v776 = vperm.slane %v771, %v775
        %778 = vset.pattern.permute.xlu0 0
        %779 = vperm.xlu0 %778, %v384
        %v780 = vpop.permute.xlu0 %779
        %v783 = vunpack.c.l.s4 839922192
        %v784 = vunpack.c.0.s8 %v783
        %v785 = vperm.slane %v780, %v784
        %787 = vset.pattern.permute.xlu0 0
        %788 = vperm.xlu0 %787, %v385
        %v789 = vpop.permute.xlu0 %788
        %v792 = vunpack.c.l.s4 839922192
        %v793 = vunpack.c.0.s8 %v792
        %v794 = vperm.slane %v789, %v793
        %796 = vset.pattern.permute.xlu0 0
        %797 = vperm.xlu0 %796, %v386
        %v798 = vpop.permute.xlu0 %797
        %v801 = vunpack.c.l.s4 839922192
        %v802 = vunpack.c.0.s8 %v801
        %v803 = vperm.slane %v798, %v802
        %v804 = vunpack.c.l.bf16 %v760
        %v805 = vunpack.c.h.bf16 %v760
        %v806 = vunpack.c.l.bf16 %v761
        %v807 = vunpack.c.h.bf16 %v761
        %v808 = vunpack.c.l.bf16 %v762
        %v809 = vunpack.c.h.bf16 %v762
        %v810 = vunpack.c.l.bf16 %v763
        %v811 = vunpack.c.h.bf16 %v763
        %v812 = vunpack.c.l.bf16 %v764
        %v813 = vunpack.c.h.bf16 %v764
        %v814 = vunpack.c.l.bf16 %v765
        %v815 = vunpack.c.h.bf16 %v765
        %v816 = vunpack.c.l.bf16 %v766
        %v817 = vunpack.c.h.bf16 %v766
        %v818 = vunpack.c.l.bf16 %v767
        %v819 = vunpack.c.h.bf16 %v767
        %v820 = vunpack.c.l.bf16 %v776
        %v821 = vunpack.c.l.bf16 %v785
        %v822 = vunpack.c.l.bf16 %v794
        %v823 = vunpack.c.l.bf16 %v803
        %v824 = vadd.f32 %v804, %v820
        %v825 = vadd.f32 %v805, %v820
        %v826 = vadd.f32 %v806, %v821
        %v827 = vadd.f32 %v807, %v821
        %v828 = vadd.f32 %v808, %v822
        %v829 = vadd.f32 %v809, %v822
        %v830 = vadd.f32 %v810, %v823
        %v831 = vadd.f32 %v811, %v823
        %v832 = vadd.f32 %v812, %v820
        %v833 = vadd.f32 %v813, %v820
        %v834 = vadd.f32 %v814, %v821
        %v835 = vadd.f32 %v815, %v821
        %v836 = vadd.f32 %v816, %v822
        %v837 = vadd.f32 %v817, %v822
        %v838 = vadd.f32 %v818, %v823
        %v839 = vadd.f32 %v819, %v823
        %v840 = vpack.c.bf16 %v825, %v824
        %v841 = vpack.c.bf16 %v827, %v826
        %v842 = vpack.c.bf16 %v829, %v828
        %v843 = vpack.c.bf16 %v831, %v830
        %v844 = vpack.c.bf16 %v833, %v832
        %v845 = vpack.c.bf16 %v835, %v834
        %v846 = vpack.c.bf16 %v837, %v836
        %v847 = vpack.c.bf16 %v839, %v838
        %v848 = vxor.u32 %v840, 2147516416
        %v849 = vxor.u32 %v841, 2147516416
        %v850 = vxor.u32 %v842, 2147516416
        %v851 = vxor.u32 %v843, 2147516416
        %v852 = vxor.u32 %v844, 2147516416
        %v853 = vxor.u32 %v845, 2147516416
        %v854 = vxor.u32 %v846, 2147516416
        %v855 = vxor.u32 %v847, 2147516416
        %v856 = vunpack.c.l.bf16 %v848
        %v857 = vunpack.c.h.bf16 %v848
        %v858 = vunpack.c.l.bf16 %v849
        %v859 = vunpack.c.h.bf16 %v849
        %v860 = vunpack.c.l.bf16 %v850
        %v861 = vunpack.c.h.bf16 %v850
        %v862 = vunpack.c.l.bf16 %v851
        %v863 = vunpack.c.h.bf16 %v851
        %v864 = vunpack.c.l.bf16 %v852
        %v865 = vunpack.c.h.bf16 %v852
        %v866 = vunpack.c.l.bf16 %v853
        %v867 = vunpack.c.h.bf16 %v853
        %v868 = vunpack.c.l.bf16 %v854
        %v869 = vunpack.c.h.bf16 %v854
        %v870 = vunpack.c.l.bf16 %v855
        %v871 = vunpack.c.h.bf16 %v855
        %v872 = vmul.f32 %v856, 1.442695
        %v873 = vpow.pop %v872
        %v874 = vmul.f32 %v857, 1.442695
        %v875 = vpow.pop %v874
        %v876 = vmul.f32 %v858, 1.442695
        %v877 = vpow.pop %v876
        %v878 = vmul.f32 %v859, 1.442695
        %v879 = vpow.pop %v878
        %v880 = vmul.f32 %v860, 1.442695
        %v881 = vpow.pop %v880
        %v882 = vmul.f32 %v861, 1.442695
        %v883 = vpow.pop %v882
        %v884 = vmul.f32 %v862, 1.442695
        %v885 = vpow.pop %v884
        %v886 = vmul.f32 %v863, 1.442695
        %v887 = vpow.pop %v886
        %v888 = vmul.f32 %v864, 1.442695
        %v889 = vpow.pop %v888
        %v890 = vmul.f32 %v865, 1.442695
        %v891 = vpow.pop %v890
        %v892 = vmul.f32 %v866, 1.442695
        %v893 = vpow.pop %v892
        %v894 = vmul.f32 %v867, 1.442695
        %v895 = vpow.pop %v894
        %v896 = vmul.f32 %v868, 1.442695
        %v897 = vpow.pop %v896
        %v898 = vmul.f32 %v869, 1.442695
        %v899 = vpow.pop %v898
        %v900 = vmul.f32 %v870, 1.442695
        %v901 = vpow.pop %v900
        %v902 = vmul.f32 %v871, 1.442695
        %v903 = vpow.pop %v902
        %v904 = vpack.c.bf16 %v875, %v873
        %v905 = vpack.c.bf16 %v879, %v877
        %v906 = vpack.c.bf16 %v883, %v881
        %v907 = vpack.c.bf16 %v887, %v885
        %v908 = vpack.c.bf16 %v891, %v889
        %v909 = vpack.c.bf16 %v895, %v893
        %v910 = vpack.c.bf16 %v899, %v897
        %v911 = vpack.c.bf16 %v903, %v901
        %v912 = vunpack.c.l.bf16 %v904
        %v913 = vunpack.c.h.bf16 %v904
        %v914 = vunpack.c.l.bf16 %v905
        %v915 = vunpack.c.h.bf16 %v905
        %v916 = vunpack.c.l.bf16 %v906
        %v917 = vunpack.c.h.bf16 %v906
        %v918 = vunpack.c.l.bf16 %v907
        %v919 = vunpack.c.h.bf16 %v907
        %v920 = vunpack.c.l.bf16 %v908
        %v921 = vunpack.c.h.bf16 %v908
        %v922 = vunpack.c.l.bf16 %v909
        %v923 = vunpack.c.h.bf16 %v909
        %v924 = vunpack.c.l.bf16 %v910
        %v925 = vunpack.c.h.bf16 %v910
        %v926 = vunpack.c.l.bf16 %v911
        %v927 = vunpack.c.h.bf16 %v911
        %v928 = vadd.f32 %v912, 1.0
        %v929 = vadd.f32 %v913, 1.0
        %v930 = vadd.f32 %v914, 1.0
        %v931 = vadd.f32 %v915, 1.0
        %v932 = vadd.f32 %v916, 1.0
        %v933 = vadd.f32 %v917, 1.0
        %v934 = vadd.f32 %v918, 1.0
        %v935 = vadd.f32 %v919, 1.0
        %v936 = vadd.f32 %v920, 1.0
        %v937 = vadd.f32 %v921, 1.0
        %v938 = vadd.f32 %v922, 1.0
        %v939 = vadd.f32 %v923, 1.0
        %v940 = vadd.f32 %v924, 1.0
        %v941 = vadd.f32 %v925, 1.0
        %v942 = vadd.f32 %v926, 1.0
        %v943 = vadd.f32 %v927, 1.0
        %v944 = vpack.c.bf16 %v929, %v928
        %v945 = vpack.c.bf16 %v931, %v930
        %v946 = vpack.c.bf16 %v933, %v932
        %v947 = vpack.c.bf16 %v935, %v934
        %v948 = vpack.c.bf16 %v937, %v936
        %v949 = vpack.c.bf16 %v939, %v938
        %v950 = vpack.c.bf16 %v941, %v940
        %v951 = vpack.c.bf16 %v943, %v942
        %v952 = vunpack.c.h.bf16 1065369472
        %v953 = vunpack.c.l.bf16 1065369472
        %v954 = vunpack.c.h.bf16 %v944
        %v955 = vunpack.c.l.bf16 %v944
        %v956 = vrcp.pop %v954
        %v957 = vmul.f32 %v952, %v956
        %v958 = vrcp.pop %v955
        %v959 = vmul.f32 %v953, %v958
        %v960 = vpack.c.bf16 %v957, %v959
        %v961 = vunpack.c.h.bf16 %v945
        %v962 = vunpack.c.l.bf16 %v945
        %v963 = vrcp.pop %v961
        %v964 = vmul.f32 %v952, %v963
        %v965 = vrcp.pop %v962
        %v966 = vmul.f32 %v953, %v965
        %v967 = vpack.c.bf16 %v964, %v966
        %v968 = vunpack.c.h.bf16 %v946
        %v969 = vunpack.c.l.bf16 %v946
        %v970 = vrcp.pop %v968
        %v971 = vmul.f32 %v952, %v970
        %v972 = vrcp.pop %v969
        %v973 = vmul.f32 %v953, %v972
        %v974 = vpack.c.bf16 %v971, %v973
        %v975 = vunpack.c.h.bf16 %v947
        %v976 = vunpack.c.l.bf16 %v947
        %v977 = vrcp.pop %v975
        %v978 = vmul.f32 %v952, %v977
        %v979 = vrcp.pop %v976
        %v980 = vmul.f32 %v953, %v979
        %v981 = vpack.c.bf16 %v978, %v980
        %v982 = vunpack.c.h.bf16 %v948
        %v983 = vunpack.c.l.bf16 %v948
        %v984 = vrcp.pop %v982
        %v985 = vmul.f32 %v952, %v984
        %v986 = vrcp.pop %v983
        %v987 = vmul.f32 %v953, %v986
        %v988 = vpack.c.bf16 %v985, %v987
        %v989 = vunpack.c.h.bf16 %v949
        %v990 = vunpack.c.l.bf16 %v949
        %v991 = vrcp.pop %v989
        %v992 = vmul.f32 %v952, %v991
        %v993 = vrcp.pop %v990
        %v994 = vmul.f32 %v953, %v993
        %v995 = vpack.c.bf16 %v992, %v994
        %v996 = vunpack.c.h.bf16 %v950
        %v997 = vunpack.c.l.bf16 %v950
        %v998 = vrcp.pop %v996
        %v999 = vmul.f32 %v952, %v998
        %v1000 = vrcp.pop %v997
        %v1001 = vmul.f32 %v953, %v1000
        %v1002 = vpack.c.bf16 %v999, %v1001
        %v1003 = vunpack.c.h.bf16 %v951
        %v1004 = vunpack.c.l.bf16 %v951
        %v1005 = vrcp.pop %v1003
        %v1006 = vmul.f32 %v952, %v1005
        %v1007 = vrcp.pop %v1004
        %v1008 = vmul.f32 %v953, %v1007
        %v1009 = vpack.c.bf16 %v1006, %v1008
        %v1010 = vunpack.c.l.bf16 %v840
        %v1011 = vunpack.c.h.bf16 %v840
        %v1012 = vunpack.c.l.bf16 %v841
        %v1013 = vunpack.c.h.bf16 %v841
        %v1014 = vunpack.c.l.bf16 %v842
        %v1015 = vunpack.c.h.bf16 %v842
        %v1016 = vunpack.c.l.bf16 %v843
        %v1017 = vunpack.c.h.bf16 %v843
        %v1018 = vunpack.c.l.bf16 %v844
        %v1019 = vunpack.c.h.bf16 %v844
        %v1020 = vunpack.c.l.bf16 %v845
        %v1021 = vunpack.c.h.bf16 %v845
        %v1022 = vunpack.c.l.bf16 %v846
        %v1023 = vunpack.c.h.bf16 %v846
        %v1024 = vunpack.c.l.bf16 %v847
        %v1025 = vunpack.c.h.bf16 %v847
        %v1026 = vunpack.c.l.bf16 %v960
        %v1027 = vunpack.c.h.bf16 %v960
        %v1028 = vunpack.c.l.bf16 %v967
        %v1029 = vunpack.c.h.bf16 %v967
        %v1030 = vunpack.c.l.bf16 %v974
        %v1031 = vunpack.c.h.bf16 %v974
        %v1032 = vunpack.c.l.bf16 %v981
        %v1033 = vunpack.c.h.bf16 %v981
        %v1034 = vunpack.c.l.bf16 %v988
        %v1035 = vunpack.c.h.bf16 %v988
        %v1036 = vunpack.c.l.bf16 %v995
        %v1037 = vunpack.c.h.bf16 %v995
        %v1038 = vunpack.c.l.bf16 %v1002
        %v1039 = vunpack.c.h.bf16 %v1002
        %v1040 = vunpack.c.l.bf16 %v1009
        %v1041 = vunpack.c.h.bf16 %v1009
        %v1042 = vmul.f32 %v1010, %v1026
        %v1043 = vmul.f32 %v1011, %v1027
        %v1044 = vmul.f32 %v1012, %v1028
        %v1045 = vmul.f32 %v1013, %v1029
        %v1046 = vmul.f32 %v1014, %v1030
        %v1047 = vmul.f32 %v1015, %v1031
        %v1048 = vmul.f32 %v1016, %v1032
        %v1049 = vmul.f32 %v1017, %v1033
        %v1050 = vmul.f32 %v1018, %v1034
        %v1051 = vmul.f32 %v1019, %v1035
        %v1052 = vmul.f32 %v1020, %v1036
        %v1053 = vmul.f32 %v1021, %v1037
        %v1054 = vmul.f32 %v1022, %v1038
        %v1055 = vmul.f32 %v1023, %v1039
        %v1056 = vmul.f32 %v1024, %v1040
        %v1057 = vmul.f32 %v1025, %v1041
        %v1058 = vpack.c.bf16 %v1043, %v1042
        %v1059 = vpack.c.bf16 %v1045, %v1044
        %v1060 = vpack.c.bf16 %v1047, %v1046
        %v1061 = vpack.c.bf16 %v1049, %v1048
        %v1062 = vpack.c.bf16 %v1051, %v1050
        %v1063 = vpack.c.bf16 %v1053, %v1052
        %v1064 = vpack.c.bf16 %v1055, %v1054
        %v1065 = vpack.c.bf16 %v1057, %v1056
        %v1066 = vlaneseq
        %v1067 = vand.u32 %v1066, 127
        %v1068 = vadd.s32 %v1067, 128
        %s1069 = smul.u32 %s26, 512
        %s1070 = sadd.s32 %s1069, 0
        %v1071 = vstv %s1070
        %v1072 = vadd.s32 %v1071, %v1067
        %v1073 = vadd.s32 %v1071, %v1068
        %vm1074 = vcmp.lt.s32.totalorder %v1072, 576
        %vm1075 = vcmp.lt.s32.totalorder %v1073, 576
        %v1076 = vsel %vm1074, 1, 0
        %v1077 = vsel %vm1075, 1, 0
        %vm1078 = vcmp.eq.s32.totalorder %v1076, 1
        %vm1079 = vcmp.eq.s32.totalorder %v1077, 1
        %vm1080 = vmpackc.low %vm1079, %vm1078
        %v1081 = vsel %vm1080, %v1058, 0
        %v1082 = vsel %vm1080, %v1059, 0
        %v1083 = vsel %vm1080, %v1060, 0
        %v1084 = vsel %vm1080, %v1061, 0
        %v1085 = vsel %vm1080, %v1062, 0
        %v1086 = vsel %vm1080, %v1063, 0
        %v1087 = vsel %vm1080, %v1064, 0
        %v1088 = vsel %vm1080, %v1065, 0
        %v1089 = vunpack.c.l.bf16 %v1081
        %v1090 = vunpack.c.h.bf16 %v1081
        %v1091 = vunpack.c.l.bf16 %v1082
        %v1092 = vunpack.c.h.bf16 %v1082
        %v1093 = vunpack.c.l.bf16 %v1083
        %v1094 = vunpack.c.h.bf16 %v1083
        %v1095 = vunpack.c.l.bf16 %v1084
        %v1096 = vunpack.c.h.bf16 %v1084
        %v1097 = vunpack.c.l.bf16 %v1085
        %v1098 = vunpack.c.h.bf16 %v1085
        %v1099 = vunpack.c.l.bf16 %v1086
        %v1100 = vunpack.c.h.bf16 %v1086
        %v1101 = vunpack.c.l.bf16 %v1087
        %v1102 = vunpack.c.h.bf16 %v1087
        %v1103 = vunpack.c.l.bf16 %v1088
        %v1104 = vunpack.c.h.bf16 %v1088
        %v1105 = vadd.f32 %v1089, %v1090
        %1106 = vadd.xlane.f32.xlu0 %v1105
        %v1107 = vpop.xlane.xlu0 %1106
        %v1108 = vadd.f32 %v1091, %v1092
        %1109 = vadd.xlane.f32.xlu0 %v1108
        %v1110 = vpop.xlane.xlu0 %1109
        %v1111 = vadd.f32 %v1093, %v1094
        %1112 = vadd.xlane.f32.xlu0 %v1111
        %v1113 = vpop.xlane.xlu0 %1112
        %v1114 = vadd.f32 %v1095, %v1096
        %1115 = vadd.xlane.f32.xlu0 %v1114
        %v1116 = vpop.xlane.xlu0 %1115
        %v1117 = vadd.f32 %v1097, %v1098
        %1118 = vadd.xlane.f32.xlu0 %v1117
        %v1119 = vpop.xlane.xlu0 %1118
        %v1120 = vadd.f32 %v1099, %v1100
        %1121 = vadd.xlane.f32.xlu0 %v1120
        %v1122 = vpop.xlane.xlu0 %1121
        %v1123 = vadd.f32 %v1101, %v1102
        %1124 = vadd.xlane.f32.xlu0 %v1123
        %v1125 = vpop.xlane.xlu0 %1124
        %v1126 = vadd.f32 %v1103, %v1104
        %1127 = vadd.xlane.f32.xlu0 %v1126
        %v1128 = vpop.xlane.xlu0 %1127
        %v1129 = vadd.f32 %v1107, 0.0
        %v1130 = vadd.f32 %v1110, 0.0
        %v1131 = vadd.f32 %v1113, 0.0
        %v1132 = vadd.f32 %v1116, 0.0
        %v1133 = vadd.f32 %v1119, 0.0
        %v1134 = vadd.f32 %v1122, 0.0
        %v1135 = vadd.f32 %v1125, 0.0
        %v1136 = vadd.f32 %v1128, 0.0
        %s1137 = scalar_lea.vmem %s327, 4 [#allocation3]
        %v1138 = vld [vmem:[%s1137] sm:$0xf]
        %v1139 = vld [vmem:[%s1137 + $0x8] sm:$0xf]
        %1141 = vst [vmem:[#allocation1] ss:$4 sm:$0xff] %v1138
        %v1142 = vld.sshfl [vmem:[#allocation1] sm:$0xff pattern:$0x73625140]
        %v1143 = vld.sshfl [vmem:[#allocation1 + $0x8] sm:$0xff pattern:$0x73625140]
        %s1145 = scalar_lea.vmem [#allocation1], 32
        %1146 = vst [vmem:[%s1145] ss:$4 sm:$0xff] %v1139
        %v1147 = vld.sshfl [vmem:[#allocation1 + $0x20] sm:$0xff pattern:$0x73625140]
        %v1148 = vld.sshfl [vmem:[#allocation1 + $0x28] sm:$0xff pattern:$0x73625140]
        %v1149 = vpack.i.b16 %v1142, %v1142
        %v1151 = vperm.slane %v1149, 0
        %v1152 = vpack.i.b16 %v1143, %v1143
        %v1154 = vperm.slane %v1152, 0
        %v1155 = vpack.i.b16 %v1147, %v1147
        %v1157 = vperm.slane %v1155, 0
        %v1158 = vpack.i.b16 %v1148, %v1148
        %v1160 = vperm.slane %v1158, 0
        %v1161 = vunpack.c.l.bf16 %v1151
        %v1162 = vunpack.c.l.bf16 %v1154
        %v1163 = vunpack.c.l.bf16 %v1157
        %v1164 = vunpack.c.l.bf16 %v1160
        %v1165 = vmul.f32 %v1161, %v450
        %v1166 = vmul.f32 %v1162, %v450
        %v1167 = vmul.f32 %v1161, %v451
        %v1168 = vmul.f32 %v1162, %v451
        %v1169 = vmul.f32 %v1161, %v452
        %v1170 = vmul.f32 %v1162, %v452
        %v1171 = vmul.f32 %v1161, %v453
        %v1172 = vmul.f32 %v1162, %v453
        %v1173 = vmul.f32 %v1163, %v450
        %v1174 = vmul.f32 %v1164, %v450
        %v1175 = vmul.f32 %v1163, %v451
        %v1176 = vmul.f32 %v1164, %v451
        %v1177 = vmul.f32 %v1163, %v452
        %v1178 = vmul.f32 %v1164, %v452
        %v1179 = vmul.f32 %v1163, %v453
        %v1180 = vmul.f32 %v1164, %v453
        %v1181 = vpack.c.bf16 %v1166, %v1165
        %v1182 = vpack.c.bf16 %v1168, %v1167
        %v1183 = vpack.c.bf16 %v1170, %v1169
        %v1184 = vpack.c.bf16 %v1172, %v1171
        %v1185 = vpack.c.bf16 %v1174, %v1173
        %v1186 = vpack.c.bf16 %v1176, %v1175
        %v1187 = vpack.c.bf16 %v1178, %v1177
        %v1188 = vpack.c.bf16 %v1180, %v1179
        %1189 = vst [vmem:[#allocation1] ss:$4 sm:$0xff] %v1138
        %v1190 = vld.sshfl [vmem:[#allocation1] sm:$0xff pattern:$0x73625140]
        %v1191 = vld.sshfl [vmem:[#allocation1 + $0x8] sm:$0xff pattern:$0x73625140]
        %s1192 = scalar_lea.vmem [#allocation1], 32
        %1193 = vst [vmem:[%s1192] ss:$4 sm:$0xff] %v1139
        %v1194 = vld.sshfl [vmem:[#allocation1 + $0x20] sm:$0xff pattern:$0x73625140]
        %v1195 = vld.sshfl [vmem:[#allocation1 + $0x28] sm:$0xff pattern:$0x73625140]
        %v1196 = vshrl.u32 %v1190, 16
        %v1197 = vpack.i.b16 %v1196, %v1196
        %v1199 = vperm.slane %v1197, 0
        %v1200 = vshrl.u32 %v1191, 16
        %v1201 = vpack.i.b16 %v1200, %v1200
        %v1203 = vperm.slane %v1201, 0
        %v1204 = vshrl.u32 %v1194, 16
        %v1205 = vpack.i.b16 %v1204, %v1204
        %v1207 = vperm.slane %v1205, 0
        %v1208 = vshrl.u32 %v1195, 16
        %v1209 = vpack.i.b16 %v1208, %v1208
        %v1211 = vperm.slane %v1209, 0
        %v1212 = vunpack.c.l.bf16 %v1199
        %v1213 = vunpack.c.l.bf16 %v1203
        %v1214 = vunpack.c.l.bf16 %v1207
        %v1215 = vunpack.c.l.bf16 %v1211
        %v1216 = vmul.f32 %v1212, %v541
        %v1217 = vmul.f32 %v1213, %v541
        %v1218 = vmul.f32 %v1212, %v542
        %v1219 = vmul.f32 %v1213, %v542
        %v1220 = vmul.f32 %v1212, %v543
        %v1221 = vmul.f32 %v1213, %v543
        %v1222 = vmul.f32 %v1212, %v544
        %v1223 = vmul.f32 %v1213, %v544
        %v1224 = vmul.f32 %v1214, %v541
        %v1225 = vmul.f32 %v1215, %v541
        %v1226 = vmul.f32 %v1214, %v542
        %v1227 = vmul.f32 %v1215, %v542
        %v1228 = vmul.f32 %v1214, %v543
        %v1229 = vmul.f32 %v1215, %v543
        %v1230 = vmul.f32 %v1214, %v544
        %v1231 = vmul.f32 %v1215, %v544
        %v1232 = vpack.c.bf16 %v1217, %v1216
        %v1233 = vpack.c.bf16 %v1219, %v1218
        %v1234 = vpack.c.bf16 %v1221, %v1220
        %v1235 = vpack.c.bf16 %v1223, %v1222
        %v1236 = vpack.c.bf16 %v1225, %v1224
        %v1237 = vpack.c.bf16 %v1227, %v1226
        %v1238 = vpack.c.bf16 %v1229, %v1228
        %v1239 = vpack.c.bf16 %v1231, %v1230
        %v1240 = vunpack.c.l.bf16 %v1181
        %v1241 = vunpack.c.h.bf16 %v1181
        %v1242 = vunpack.c.l.bf16 %v1182
        %v1243 = vunpack.c.h.bf16 %v1182
        %v1244 = vunpack.c.l.bf16 %v1183
        %v1245 = vunpack.c.h.bf16 %v1183
        %v1246 = vunpack.c.l.bf16 %v1184
        %v1247 = vunpack.c.h.bf16 %v1184
        %v1248 = vunpack.c.l.bf16 %v1185
        %v1249 = vunpack.c.h.bf16 %v1185
        %v1250 = vunpack.c.l.bf16 %v1186
        %v1251 = vunpack.c.h.bf16 %v1186
        %v1252 = vunpack.c.l.bf16 %v1187
        %v1253 = vunpack.c.h.bf16 %v1187
        %v1254 = vunpack.c.l.bf16 %v1188
        %v1255 = vunpack.c.h.bf16 %v1188
        %v1256 = vunpack.c.l.bf16 %v1232
        %v1257 = vunpack.c.h.bf16 %v1232
        %v1258 = vunpack.c.l.bf16 %v1233
        %v1259 = vunpack.c.h.bf16 %v1233
        %v1260 = vunpack.c.l.bf16 %v1234
        %v1261 = vunpack.c.h.bf16 %v1234
        %v1262 = vunpack.c.l.bf16 %v1235
        %v1263 = vunpack.c.h.bf16 %v1235
        %v1264 = vunpack.c.l.bf16 %v1236
        %v1265 = vunpack.c.h.bf16 %v1236
        %v1266 = vunpack.c.l.bf16 %v1237
        %v1267 = vunpack.c.h.bf16 %v1237
        %v1268 = vunpack.c.l.bf16 %v1238
        %v1269 = vunpack.c.h.bf16 %v1238
        %v1270 = vunpack.c.l.bf16 %v1239
        %v1271 = vunpack.c.h.bf16 %v1239
        %v1272 = vadd.f32 %v1240, %v1256
        %v1273 = vadd.f32 %v1241, %v1257
        %v1274 = vadd.f32 %v1242, %v1258
        %v1275 = vadd.f32 %v1243, %v1259
        %v1276 = vadd.f32 %v1244, %v1260
        %v1277 = vadd.f32 %v1245, %v1261
        %v1278 = vadd.f32 %v1246, %v1262
        %v1279 = vadd.f32 %v1247, %v1263
        %v1280 = vadd.f32 %v1248, %v1264
        %v1281 = vadd.f32 %v1249, %v1265
        %v1282 = vadd.f32 %v1250, %v1266
        %v1283 = vadd.f32 %v1251, %v1267
        %v1284 = vadd.f32 %v1252, %v1268
        %v1285 = vadd.f32 %v1253, %v1269
        %v1286 = vadd.f32 %v1254, %v1270
        %v1287 = vadd.f32 %v1255, %v1271
        %v1288 = vpack.c.bf16 %v1273, %v1272
        %v1289 = vpack.c.bf16 %v1275, %v1274
        %v1290 = vpack.c.bf16 %v1277, %v1276
        %v1291 = vpack.c.bf16 %v1279, %v1278
        %v1292 = vpack.c.bf16 %v1281, %v1280
        %v1293 = vpack.c.bf16 %v1283, %v1282
        %v1294 = vpack.c.bf16 %v1285, %v1284
        %v1295 = vpack.c.bf16 %v1287, %v1286
        %1296 = vst [vmem:[#allocation1] ss:$4 sm:$0xff] %v1138
        %v1297 = vld.sshfl [vmem:[#allocation1] sm:$0xff pattern:$0x73625140]
        %v1298 = vld.sshfl [vmem:[#allocation1 + $0x8] sm:$0xff pattern:$0x73625140]
        %s1299 = scalar_lea.vmem [#allocation1], 32
        %1300 = vst [vmem:[%s1299] ss:$4 sm:$0xff] %v1139
        %v1301 = vld.sshfl [vmem:[#allocation1 + $0x20] sm:$0xff pattern:$0x73625140]
        %v1302 = vld.sshfl [vmem:[#allocation1 + $0x28] sm:$0xff pattern:$0x73625140]
        %v1303 = vpack.i.b16 %v1297, %v1297
        %v1305 = vperm.slane %v1303, 1
        %v1306 = vpack.i.b16 %v1298, %v1298
        %v1308 = vperm.slane %v1306, 1
        %v1309 = vpack.i.b16 %v1301, %v1301
        %v1311 = vperm.slane %v1309, 1
        %v1312 = vpack.i.b16 %v1302, %v1302
        %v1314 = vperm.slane %v1312, 1
        %v1315 = vunpack.c.l.bf16 %v1305
        %v1316 = vunpack.c.l.bf16 %v1308
        %v1317 = vunpack.c.l.bf16 %v1311
        %v1318 = vunpack.c.l.bf16 %v1314
        %v1319 = vmul.f32 %v1315, %v684
        %v1320 = vmul.f32 %v1316, %v684
        %v1321 = vmul.f32 %v1315, %v685
        %v1322 = vmul.f32 %v1316, %v685
        %v1323 = vmul.f32 %v1315, %v686
        %v1324 = vmul.f32 %v1316, %v686
        %v1325 = vmul.f32 %v1315, %v687
        %v1326 = vmul.f32 %v1316, %v687
        %v1327 = vmul.f32 %v1317, %v684
        %v1328 = vmul.f32 %v1318, %v684
        %v1329 = vmul.f32 %v1317, %v685
        %v1330 = vmul.f32 %v1318, %v685
        %v1331 = vmul.f32 %v1317, %v686
        %v1332 = vmul.f32 %v1318, %v686
        %v1333 = vmul.f32 %v1317, %v687
        %v1334 = vmul.f32 %v1318, %v687
        %v1335 = vpack.c.bf16 %v1320, %v1319
        %v1336 = vpack.c.bf16 %v1322, %v1321
        %v1337 = vpack.c.bf16 %v1324, %v1323
        %v1338 = vpack.c.bf16 %v1326, %v1325
        %v1339 = vpack.c.bf16 %v1328, %v1327
        %v1340 = vpack.c.bf16 %v1330, %v1329
        %v1341 = vpack.c.bf16 %v1332, %v1331
        %v1342 = vpack.c.bf16 %v1334, %v1333
        %v1343 = vunpack.c.l.bf16 %v1288
        %v1344 = vunpack.c.h.bf16 %v1288
        %v1345 = vunpack.c.l.bf16 %v1289
        %v1346 = vunpack.c.h.bf16 %v1289
        %v1347 = vunpack.c.l.bf16 %v1290
        %v1348 = vunpack.c.h.bf16 %v1290
        %v1349 = vunpack.c.l.bf16 %v1291
        %v1350 = vunpack.c.h.bf16 %v1291
        %v1351 = vunpack.c.l.bf16 %v1292
        %v1352 = vunpack.c.h.bf16 %v1292
        %v1353 = vunpack.c.l.bf16 %v1293
        %v1354 = vunpack.c.h.bf16 %v1293
        %v1355 = vunpack.c.l.bf16 %v1294
        %v1356 = vunpack.c.h.bf16 %v1294
        %v1357 = vunpack.c.l.bf16 %v1295
        %v1358 = vunpack.c.h.bf16 %v1295
        %v1359 = vunpack.c.l.bf16 %v1335
        %v1360 = vunpack.c.h.bf16 %v1335
        %v1361 = vunpack.c.l.bf16 %v1336
        %v1362 = vunpack.c.h.bf16 %v1336
        %v1363 = vunpack.c.l.bf16 %v1337
        %v1364 = vunpack.c.h.bf16 %v1337
        %v1365 = vunpack.c.l.bf16 %v1338
        %v1366 = vunpack.c.h.bf16 %v1338
        %v1367 = vunpack.c.l.bf16 %v1339
        %v1368 = vunpack.c.h.bf16 %v1339
        %v1369 = vunpack.c.l.bf16 %v1340
        %v1370 = vunpack.c.h.bf16 %v1340
        %v1371 = vunpack.c.l.bf16 %v1341
        %v1372 = vunpack.c.h.bf16 %v1341
        %v1373 = vunpack.c.l.bf16 %v1342
        %v1374 = vunpack.c.h.bf16 %v1342
        %v1375 = vadd.f32 %v1343, %v1359
        %v1376 = vadd.f32 %v1344, %v1360
        %v1377 = vadd.f32 %v1345, %v1361
        %v1378 = vadd.f32 %v1346, %v1362
        %v1379 = vadd.f32 %v1347, %v1363
        %v1380 = vadd.f32 %v1348, %v1364
        %v1381 = vadd.f32 %v1349, %v1365
        %v1382 = vadd.f32 %v1350, %v1366
        %v1383 = vadd.f32 %v1351, %v1367
        %v1384 = vadd.f32 %v1352, %v1368
        %v1385 = vadd.f32 %v1353, %v1369
        %v1386 = vadd.f32 %v1354, %v1370
        %v1387 = vadd.f32 %v1355, %v1371
        %v1388 = vadd.f32 %v1356, %v1372
        %v1389 = vadd.f32 %v1357, %v1373
        %v1390 = vadd.f32 %v1358, %v1374
        %v1391 = vpack.c.bf16 %v1376, %v1375
        %v1392 = vpack.c.bf16 %v1378, %v1377
        %v1393 = vpack.c.bf16 %v1380, %v1379
        %v1394 = vpack.c.bf16 %v1382, %v1381
        %v1395 = vpack.c.bf16 %v1384, %v1383
        %v1396 = vpack.c.bf16 %v1386, %v1385
        %v1397 = vpack.c.bf16 %v1388, %v1387
        %v1398 = vpack.c.bf16 %v1390, %v1389
        %v1399 = vunpack.c.l.bf16 %v1391
        %v1400 = vunpack.c.h.bf16 %v1391
        %v1401 = vunpack.c.l.bf16 %v1392
        %v1402 = vunpack.c.h.bf16 %v1392
        %v1403 = vunpack.c.l.bf16 %v1393
        %v1404 = vunpack.c.h.bf16 %v1393
        %v1405 = vunpack.c.l.bf16 %v1394
        %v1406 = vunpack.c.h.bf16 %v1394
        %v1407 = vunpack.c.l.bf16 %v1395
        %v1408 = vunpack.c.h.bf16 %v1395
        %v1409 = vunpack.c.l.bf16 %v1396
        %v1410 = vunpack.c.h.bf16 %v1396
        %v1411 = vunpack.c.l.bf16 %v1397
        %v1412 = vunpack.c.h.bf16 %v1397
        %v1413 = vunpack.c.l.bf16 %v1398
        %v1414 = vunpack.c.h.bf16 %v1398
        %v1415 = vadd.f32 %v1399, %v820
        %v1416 = vadd.f32 %v1400, %v820
        %v1417 = vadd.f32 %v1401, %v821
        %v1418 = vadd.f32 %v1402, %v821
        %v1419 = vadd.f32 %v1403, %v822
        %v1420 = vadd.f32 %v1404, %v822
        %v1421 = vadd.f32 %v1405, %v823
        %v1422 = vadd.f32 %v1406, %v823
        %v1423 = vadd.f32 %v1407, %v820
        %v1424 = vadd.f32 %v1408, %v820
        %v1425 = vadd.f32 %v1409, %v821
        %v1426 = vadd.f32 %v1410, %v821
        %v1427 = vadd.f32 %v1411, %v822
        %v1428 = vadd.f32 %v1412, %v822
        %v1429 = vadd.f32 %v1413, %v823
        %v1430 = vadd.f32 %v1414, %v823
        %v1431 = vpack.c.bf16 %v1416, %v1415
        %v1432 = vpack.c.bf16 %v1418, %v1417
        %v1433 = vpack.c.bf16 %v1420, %v1419
        %v1434 = vpack.c.bf16 %v1422, %v1421
        %v1435 = vpack.c.bf16 %v1424, %v1423
        %v1436 = vpack.c.bf16 %v1426, %v1425
        %v1437 = vpack.c.bf16 %v1428, %v1427
        %v1438 = vpack.c.bf16 %v1430, %v1429
        %v1439 = vxor.u32 %v1431, 2147516416
        %v1440 = vxor.u32 %v1432, 2147516416
        %v1441 = vxor.u32 %v1433, 2147516416
        %v1442 = vxor.u32 %v1434, 2147516416
        %v1443 = vxor.u32 %v1435, 2147516416
        %v1444 = vxor.u32 %v1436, 2147516416
        %v1445 = vxor.u32 %v1437, 2147516416
        %v1446 = vxor.u32 %v1438, 2147516416
        %v1447 = vunpack.c.l.bf16 %v1439
        %v1448 = vunpack.c.h.bf16 %v1439
        %v1449 = vunpack.c.l.bf16 %v1440
        %v1450 = vunpack.c.h.bf16 %v1440
        %v1451 = vunpack.c.l.bf16 %v1441
        %v1452 = vunpack.c.h.bf16 %v1441
        %v1453 = vunpack.c.l.bf16 %v1442
        %v1454 = vunpack.c.h.bf16 %v1442
        %v1455 = vunpack.c.l.bf16 %v1443
        %v1456 = vunpack.c.h.bf16 %v1443
        %v1457 = vunpack.c.l.bf16 %v1444
        %v1458 = vunpack.c.h.bf16 %v1444
        %v1459 = vunpack.c.l.bf16 %v1445
        %v1460 = vunpack.c.h.bf16 %v1445
        %v1461 = vunpack.c.l.bf16 %v1446
        %v1462 = vunpack.c.h.bf16 %v1446
        %v1463 = vmul.f32 %v1447, 1.442695
        %v1464 = vpow.pop %v1463
        %v1465 = vmul.f32 %v1448, 1.442695
        %v1466 = vpow.pop %v1465
        %v1467 = vmul.f32 %v1449, 1.442695
        %v1468 = vpow.pop %v1467
        %v1469 = vmul.f32 %v1450, 1.442695
        %v1470 = vpow.pop %v1469
        %v1471 = vmul.f32 %v1451, 1.442695
        %v1472 = vpow.pop %v1471
        %v1473 = vmul.f32 %v1452, 1.442695
        %v1474 = vpow.pop %v1473
        %v1475 = vmul.f32 %v1453, 1.442695
        %v1476 = vpow.pop %v1475
        %v1477 = vmul.f32 %v1454, 1.442695
        %v1478 = vpow.pop %v1477
        %v1479 = vmul.f32 %v1455, 1.442695
        %v1480 = vpow.pop %v1479
        %v1481 = vmul.f32 %v1456, 1.442695
        %v1482 = vpow.pop %v1481
        %v1483 = vmul.f32 %v1457, 1.442695
        %v1484 = vpow.pop %v1483
        %v1485 = vmul.f32 %v1458, 1.442695
        %v1486 = vpow.pop %v1485
        %v1487 = vmul.f32 %v1459, 1.442695
        %v1488 = vpow.pop %v1487
        %v1489 = vmul.f32 %v1460, 1.442695
        %v1490 = vpow.pop %v1489
        %v1491 = vmul.f32 %v1461, 1.442695
        %v1492 = vpow.pop %v1491
        %v1493 = vmul.f32 %v1462, 1.442695
        %v1494 = vpow.pop %v1493
        %v1495 = vpack.c.bf16 %v1466, %v1464
        %v1496 = vpack.c.bf16 %v1470, %v1468
        %v1497 = vpack.c.bf16 %v1474, %v1472
        %v1498 = vpack.c.bf16 %v1478, %v1476
        %v1499 = vpack.c.bf16 %v1482, %v1480
        %v1500 = vpack.c.bf16 %v1486, %v1484
        %v1501 = vpack.c.bf16 %v1490, %v1488
        %v1502 = vpack.c.bf16 %v1494, %v1492
        %v1503 = vunpack.c.l.bf16 %v1495
        %v1504 = vunpack.c.h.bf16 %v1495
        %v1505 = vunpack.c.l.bf16 %v1496
        %v1506 = vunpack.c.h.bf16 %v1496
        %v1507 = vunpack.c.l.bf16 %v1497
        %v1508 = vunpack.c.h.bf16 %v1497
        %v1509 = vunpack.c.l.bf16 %v1498
        %v1510 = vunpack.c.h.bf16 %v1498
        %v1511 = vunpack.c.l.bf16 %v1499
        %v1512 = vunpack.c.h.bf16 %v1499
        %v1513 = vunpack.c.l.bf16 %v1500
        %v1514 = vunpack.c.h.bf16 %v1500
        %v1515 = vunpack.c.l.bf16 %v1501
        %v1516 = vunpack.c.h.bf16 %v1501
        %v1517 = vunpack.c.l.bf16 %v1502
        %v1518 = vunpack.c.h.bf16 %v1502
        %v1519 = vadd.f32 %v1503, 1.0
        %v1520 = vadd.f32 %v1504, 1.0
        %v1521 = vadd.f32 %v1505, 1.0
        %v1522 = vadd.f32 %v1506, 1.0
        %v1523 = vadd.f32 %v1507, 1.0
        %v1524 = vadd.f32 %v1508, 1.0
        %v1525 = vadd.f32 %v1509, 1.0
        %v1526 = vadd.f32 %v1510, 1.0
        %v1527 = vadd.f32 %v1511, 1.0
        %v1528 = vadd.f32 %v1512, 1.0
        %v1529 = vadd.f32 %v1513, 1.0
        %v1530 = vadd.f32 %v1514, 1.0
        %v1531 = vadd.f32 %v1515, 1.0
        %v1532 = vadd.f32 %v1516, 1.0
        %v1533 = vadd.f32 %v1517, 1.0
        %v1534 = vadd.f32 %v1518, 1.0
        %v1535 = vpack.c.bf16 %v1520, %v1519
        %v1536 = vpack.c.bf16 %v1522, %v1521
        %v1537 = vpack.c.bf16 %v1524, %v1523
        %v1538 = vpack.c.bf16 %v1526, %v1525
        %v1539 = vpack.c.bf16 %v1528, %v1527
        %v1540 = vpack.c.bf16 %v1530, %v1529
        %v1541 = vpack.c.bf16 %v1532, %v1531
        %v1542 = vpack.c.bf16 %v1534, %v1533
        %v1543 = vunpack.c.h.bf16 %v1535
        %v1544 = vunpack.c.l.bf16 %v1535
        %v1545 = vrcp.pop %v1543
        %v1546 = vmul.f32 %v952, %v1545
        %v1547 = vrcp.pop %v1544
        %v1548 = vmul.f32 %v953, %v1547
        %v1549 = vpack.c.bf16 %v1546, %v1548
        %v1550 = vunpack.c.h.bf16 %v1536
        %v1551 = vunpack.c.l.bf16 %v1536
        %v1552 = vrcp.pop %v1550
        %v1553 = vmul.f32 %v952, %v1552
        %v1554 = vrcp.pop %v1551
        %v1555 = vmul.f32 %v953, %v1554
        %v1556 = vpack.c.bf16 %v1553, %v1555
        %v1557 = vunpack.c.h.bf16 %v1537
        %v1558 = vunpack.c.l.bf16 %v1537
        %v1559 = vrcp.pop %v1557
        %v1560 = vmul.f32 %v952, %v1559
        %v1561 = vrcp.pop %v1558
        %v1562 = vmul.f32 %v953, %v1561
        %v1563 = vpack.c.bf16 %v1560, %v1562
        %v1564 = vunpack.c.h.bf16 %v1538
        %v1565 = vunpack.c.l.bf16 %v1538
        %v1566 = vrcp.pop %v1564
        %v1567 = vmul.f32 %v952, %v1566
        %v1568 = vrcp.pop %v1565
        %v1569 = vmul.f32 %v953, %v1568
        %v1570 = vpack.c.bf16 %v1567, %v1569
        %v1571 = vunpack.c.h.bf16 %v1539
        %v1572 = vunpack.c.l.bf16 %v1539
        %v1573 = vrcp.pop %v1571
        %v1574 = vmul.f32 %v952, %v1573
        %v1575 = vrcp.pop %v1572
        %v1576 = vmul.f32 %v953, %v1575
        %v1577 = vpack.c.bf16 %v1574, %v1576
        %v1578 = vunpack.c.h.bf16 %v1540
        %v1579 = vunpack.c.l.bf16 %v1540
        %v1580 = vrcp.pop %v1578
        %v1581 = vmul.f32 %v952, %v1580
        %v1582 = vrcp.pop %v1579
        %v1583 = vmul.f32 %v953, %v1582
        %v1584 = vpack.c.bf16 %v1581, %v1583
        %v1585 = vunpack.c.h.bf16 %v1541
        %v1586 = vunpack.c.l.bf16 %v1541
        %v1587 = vrcp.pop %v1585
        %v1588 = vmul.f32 %v952, %v1587
        %v1589 = vrcp.pop %v1586
        %v1590 = vmul.f32 %v953, %v1589
        %v1591 = vpack.c.bf16 %v1588, %v1590
        %v1592 = vunpack.c.h.bf16 %v1542
        %v1593 = vunpack.c.l.bf16 %v1542
        %v1594 = vrcp.pop %v1592
        %v1595 = vmul.f32 %v952, %v1594
        %v1596 = vrcp.pop %v1593
        %v1597 = vmul.f32 %v953, %v1596
        %v1598 = vpack.c.bf16 %v1595, %v1597
        %v1599 = vunpack.c.l.bf16 %v1431
        %v1600 = vunpack.c.h.bf16 %v1431
        %v1601 = vunpack.c.l.bf16 %v1432
        %v1602 = vunpack.c.h.bf16 %v1432
        %v1603 = vunpack.c.l.bf16 %v1433
        %v1604 = vunpack.c.h.bf16 %v1433
        %v1605 = vunpack.c.l.bf16 %v1434
        %v1606 = vunpack.c.h.bf16 %v1434
        %v1607 = vunpack.c.l.bf16 %v1435
        %v1608 = vunpack.c.h.bf16 %v1435
        %v1609 = vunpack.c.l.bf16 %v1436
        %v1610 = vunpack.c.h.bf16 %v1436
        %v1611 = vunpack.c.l.bf16 %v1437
        %v1612 = vunpack.c.h.bf16 %v1437
        %v1613 = vunpack.c.l.bf16 %v1438
        %v1614 = vunpack.c.h.bf16 %v1438
        %v1615 = vunpack.c.l.bf16 %v1549
        %v1616 = vunpack.c.h.bf16 %v1549
        %v1617 = vunpack.c.l.bf16 %v1556
        %v1618 = vunpack.c.h.bf16 %v1556
        %v1619 = vunpack.c.l.bf16 %v1563
        %v1620 = vunpack.c.h.bf16 %v1563
        %v1621 = vunpack.c.l.bf16 %v1570
        %v1622 = vunpack.c.h.bf16 %v1570
        %v1623 = vunpack.c.l.bf16 %v1577
        %v1624 = vunpack.c.h.bf16 %v1577
        %v1625 = vunpack.c.l.bf16 %v1584
        %v1626 = vunpack.c.h.bf16 %v1584
        %v1627 = vunpack.c.l.bf16 %v1591
        %v1628 = vunpack.c.h.bf16 %v1591
        %v1629 = vunpack.c.l.bf16 %v1598
        %v1630 = vunpack.c.h.bf16 %v1598
        %v1631 = vmul.f32 %v1599, %v1615
        %v1632 = vmul.f32 %v1600, %v1616
        %v1633 = vmul.f32 %v1601, %v1617
        %v1634 = vmul.f32 %v1602, %v1618
        %v1635 = vmul.f32 %v1603, %v1619
        %v1636 = vmul.f32 %v1604, %v1620
        %v1637 = vmul.f32 %v1605, %v1621
        %v1638 = vmul.f32 %v1606, %v1622
        %v1639 = vmul.f32 %v1607, %v1623
        %v1640 = vmul.f32 %v1608, %v1624
        %v1641 = vmul.f32 %v1609, %v1625
        %v1642 = vmul.f32 %v1610, %v1626
        %v1643 = vmul.f32 %v1611, %v1627
        %v1644 = vmul.f32 %v1612, %v1628
        %v1645 = vmul.f32 %v1613, %v1629
        %v1646 = vmul.f32 %v1614, %v1630
        %v1647 = vpack.c.bf16 %v1632, %v1631
        %v1648 = vpack.c.bf16 %v1634, %v1633
        %v1649 = vpack.c.bf16 %v1636, %v1635
        %v1650 = vpack.c.bf16 %v1638, %v1637
        %v1651 = vpack.c.bf16 %v1640, %v1639
        %v1652 = vpack.c.bf16 %v1642, %v1641
        %v1653 = vpack.c.bf16 %v1644, %v1643
        %v1654 = vpack.c.bf16 %v1646, %v1645
        %s1655 = sadd.s32 %s1069, 256
        %v1656 = vstv %s1655
        %v1657 = vadd.s32 %v1656, %v1067
        %v1658 = vadd.s32 %v1656, %v1068
        %vm1659 = vcmp.lt.s32.totalorder %v1657, 576
        %vm1660 = vcmp.lt.s32.totalorder %v1658, 576
        %v1661 = vsel %vm1659, 1, 0
        %v1662 = vsel %vm1660, 1, 0
        %vm1663 = vcmp.eq.s32.totalorder %v1661, 1
        %vm1664 = vcmp.eq.s32.totalorder %v1662, 1
        %vm1665 = vmpackc.low %vm1664, %vm1663
        %v1666 = vsel %vm1665, %v1647, 0
        %v1667 = vsel %vm1665, %v1648, 0
        %v1668 = vsel %vm1665, %v1649, 0
        %v1669 = vsel %vm1665, %v1650, 0
        %v1670 = vsel %vm1665, %v1651, 0
        %v1671 = vsel %vm1665, %v1652, 0
        %v1672 = vsel %vm1665, %v1653, 0
        %v1673 = vsel %vm1665, %v1654, 0
        %v1674 = vunpack.c.l.bf16 %v1666
        %v1675 = vunpack.c.h.bf16 %v1666
        %v1676 = vunpack.c.l.bf16 %v1667
        %v1677 = vunpack.c.h.bf16 %v1667
        %v1678 = vunpack.c.l.bf16 %v1668
        %v1679 = vunpack.c.h.bf16 %v1668
        %v1680 = vunpack.c.l.bf16 %v1669
        %v1681 = vunpack.c.h.bf16 %v1669
        %v1682 = vunpack.c.l.bf16 %v1670
        %v1683 = vunpack.c.h.bf16 %v1670
        %v1684 = vunpack.c.l.bf16 %v1671
        %v1685 = vunpack.c.h.bf16 %v1671
        %v1686 = vunpack.c.l.bf16 %v1672
        %v1687 = vunpack.c.h.bf16 %v1672
        %v1688 = vunpack.c.l.bf16 %v1673
        %v1689 = vunpack.c.h.bf16 %v1673
        %v1690 = vadd.f32 %v1674, %v1675
        %1691 = vadd.xlane.f32.xlu0 %v1690
        %v1692 = vpop.xlane.xlu0 %1691
        %v1693 = vadd.f32 %v1676, %v1677
        %1694 = vadd.xlane.f32.xlu0 %v1693
        %v1695 = vpop.xlane.xlu0 %1694
        %v1696 = vadd.f32 %v1678, %v1679
        %1697 = vadd.xlane.f32.xlu0 %v1696
        %v1698 = vpop.xlane.xlu0 %1697
        %v1699 = vadd.f32 %v1680, %v1681
        %1700 = vadd.xlane.f32.xlu0 %v1699
        %v1701 = vpop.xlane.xlu0 %1700
        %v1702 = vadd.f32 %v1682, %v1683
        %1703 = vadd.xlane.f32.xlu0 %v1702
        %v1704 = vpop.xlane.xlu0 %1703
        %v1705 = vadd.f32 %v1684, %v1685
        %1706 = vadd.xlane.f32.xlu0 %v1705
        %v1707 = vpop.xlane.xlu0 %1706
        %v1708 = vadd.f32 %v1686, %v1687
        %1709 = vadd.xlane.f32.xlu0 %v1708
        %v1710 = vpop.xlane.xlu0 %1709
        %v1711 = vadd.f32 %v1688, %v1689
        %1712 = vadd.xlane.f32.xlu0 %v1711
        %v1713 = vpop.xlane.xlu0 %1712
        %v1714 = vadd.f32 %v1129, %v1692
        %v1715 = vadd.f32 %v1130, %v1695
        %v1716 = vadd.f32 %v1131, %v1698
        %v1717 = vadd.f32 %v1132, %v1701
        %v1718 = vadd.f32 %v1133, %v1704
        %v1719 = vadd.f32 %v1134, %v1707
        %v1720 = vadd.f32 %v1135, %v1710
        %v1721 = vadd.f32 %v1136, %v1713
        %v1722 = vld [vmem:[#allocation2] sm:$0x3]
        %v1731 = vperm.slane %v1714, %v1067
        %v1732 = vadd.s32 %v1067, 4294967288
        %v1733 = vperm.slane %v1715, %v1732
        %vm1734 = vcmask 130112
        %v1735 = vsel %vm1734, %v1733, %v1731
        %v1736 = vadd.s32 %v1067, 4294967280
        %v1737 = vperm.slane %v1716, %v1736
        %vm1738 = vcmask 195712
        %v1739 = vsel %vm1738, %v1737, %v1735
        %v1740 = vadd.s32 %v1067, 4294967272
        %v1741 = vperm.slane %v1717, %v1740
        %vm1742 = vcmask 261312
        %v1743 = vsel %vm1742, %v1741, %v1739
        %v1744 = vperm.slane %v1718, %v1067
        %v1745 = vperm.slane %v1719, %v1732
        %v1746 = vsel %vm1734, %v1745, %v1744
        %v1747 = vperm.slane %v1720, %v1736
        %v1748 = vsel %vm1738, %v1747, %v1746
        %v1749 = vperm.slane %v1721, %v1740
        %v1750 = vsel %vm1742, %v1749, %v1748
        %vm1751 = vcmask 1041409
        %v1752 = vsel %vm1751, %v1750, %v1743
        %v1754 = vadd.f32 %v1722, %v1752
        %vm1755 = vcmask 254976
        %1756 = vst.msk [vmem:[#allocation2] sm:$0x3] %vm1755, %v1754
        %p1757 = scmp.eq.s32.totalorder %s26, 1
        // Predicated region
        $region99: #{tpu_custom_call.1} parent=81 // pred_check
          %p1758 = pneg %p1757
        $region100: #{tpu_custom_call.1} parent=81 // pred_check_branch
          %1760 = sbr.rel (%p1758) target = $region102
        $region101: #{tpu_custom_call.1} parent=81 // pred_region
          %v1761 = vld [vmem:[#allocation2] sm:$0x3]
          %v1762 = vmul.f32 %v1761, 0.0017361111
          %v1763 = vpack.c.bf16 %v1762, %v1762
          %v1764 = vld [vmem:[#allocation4] sm:$0xff]
          %v1765 = vld [vmem:[#allocation4 + $0x8] sm:$0xff]
          %v1766 = vld [vmem:[#allocation4 + $0x10] sm:$0xff]
          %v1767 = vld [vmem:[#allocation4 + $0x18] sm:$0xff]
          %v1768 = vld [vmem:[#allocation4 + $0x20] sm:$0xff]
          %v1769 = vld [vmem:[#allocation4 + $0x28] sm:$0xff]
          %v1770 = vld [vmem:[#allocation4 + $0x30] sm:$0xff]
          %v1771 = vld [vmem:[#allocation4 + $0x38] sm:$0xff]
          %v1772 = vld [vmem:[#allocation4 + $0x40] sm:$0xff]
          %v1773 = vld [vmem:[#allocation4 + $0x48] sm:$0xff]
          %v1774 = vld [vmem:[#allocation4 + $0x50] sm:$0xff]
          %v1775 = vld [vmem:[#allocation4 + $0x58] sm:$0xff]
          %v1776 = vld [vmem:[#allocation4 + $0x60] sm:$0xff]
          %v1777 = vld [vmem:[#allocation4 + $0x68] sm:$0xff]
          %v1778 = vld [vmem:[#allocation4 + $0x70] sm:$0xff]
          %v1779 = vld [vmem:[#allocation4 + $0x78] sm:$0xff]
          %v1780 = vld [vmem:[%s4] sm:$0xff]
          %v1782 = vperm.slane %v1780, 0
          %v1783 = vperm.slane %v1780, 1
          %v1784 = vperm.slane %v1780, 2
          %v1785 = vperm.slane %v1780, 3
          %v1786 = vperm.slane %v1780, 4
          %v1787 = vperm.slane %v1780, 5
          %v1788 = vperm.slane %v1780, 6
          %v1789 = vperm.slane %v1780, 7
          %v1814 = vunpack.c.l.b16 %v1764
          %v1815 = vunpack.c.h.b16 %v1764
          %v1816 = vunpack.c.l.b16 %v1765
          %v1817 = vunpack.c.h.b16 %v1765
          %v1818 = vunpack.c.l.b16 %v1766
          %v1819 = vunpack.c.h.b16 %v1766
          %v1820 = vunpack.c.l.b16 %v1767
          %v1821 = vunpack.c.h.b16 %v1767
          %v1822 = vunpack.c.l.b16 %v1768
          %v1823 = vunpack.c.h.b16 %v1768
          %v1824 = vunpack.c.l.b16 %v1769
          %v1825 = vunpack.c.h.b16 %v1769
          %v1826 = vunpack.c.l.b16 %v1770
          %v1827 = vunpack.c.h.b16 %v1770
          %v1828 = vunpack.c.l.b16 %v1771
          %v1829 = vunpack.c.h.b16 %v1771
          %v1830 = vunpack.c.l.b16 %v1772
          %v1831 = vunpack.c.h.b16 %v1772
          %v1832 = vunpack.c.l.b16 %v1773
          %v1833 = vunpack.c.h.b16 %v1773
          %v1834 = vunpack.c.l.b16 %v1774
          %v1835 = vunpack.c.h.b16 %v1774
          %v1836 = vunpack.c.l.b16 %v1775
          %v1837 = vunpack.c.h.b16 %v1775
          %v1838 = vunpack.c.l.b16 %v1776
          %v1839 = vunpack.c.h.b16 %v1776
          %v1840 = vunpack.c.l.b16 %v1777
          %v1841 = vunpack.c.h.b16 %v1777
          %v1842 = vunpack.c.l.b16 %v1778
          %v1843 = vunpack.c.h.b16 %v1778
          %v1844 = vunpack.c.l.b16 %v1779
          %v1845 = vunpack.c.h.b16 %v1779
          %v1846 = vpack.c.b16 %v1822, %v1814
          %v1847 = vpack.c.b16 %v1823, %v1815
          %v1848 = vpack.c.b16 %v1824, %v1816
          %v1849 = vpack.c.b16 %v1825, %v1817
          %v1850 = vpack.c.b16 %v1826, %v1818
          %v1851 = vpack.c.b16 %v1827, %v1819
          %v1852 = vpack.c.b16 %v1828, %v1820
          %v1853 = vpack.c.b16 %v1829, %v1821
          %v1854 = vpack.c.b16 %v1838, %v1830
          %v1855 = vpack.c.b16 %v1839, %v1831
          %v1856 = vpack.c.b16 %v1840, %v1832
          %v1857 = vpack.c.b16 %v1841, %v1833
          %v1858 = vpack.c.b16 %v1842, %v1834
          %v1859 = vpack.c.b16 %v1843, %v1835
          %v1860 = vpack.c.b16 %v1844, %v1836
          %v1861 = vpack.c.b16 %v1845, %v1837
          %vm1878 = vcmask 261120
          %v1880 = vsel %vm1878, %v1763, 0
          %1882 = vmatpush.bf16.msra.mxu0 0
          %1883 = vmatpush.bf16.msra.mxu0 0
          %1884 = vmatpush.bf16.msra.mxu0 0
          %1885 = vmatpush.bf16.msra.mxu0 0
          %1886 = vmatpush.bf16.msra.mxu0 0
          %1887 = vmatpush.bf16.msra.mxu0 0
          %1888 = vmatpush.bf16.msra.mxu0 %v1854
          %1889 = vmatpush.bf16.msra.mxu0 %v1846
          %1890 = vmatmul.bf16.gmra.mxu0 %v1880
          %v1891 = vpop.f32.mrf.mxu0
          %v1892 = vadd.f32 %v1782, %v1891
          %v1893 = vpop.f32.mrf.mxu0
          %1894 = vdwg.mxu0
          %1895 = vmatpush.bf16.msra.mxu0 0
          %1896 = vmatpush.bf16.msra.mxu0 0
          %1897 = vmatpush.bf16.msra.mxu0 0
          %1898 = vmatpush.bf16.msra.mxu0 0
          %1899 = vmatpush.bf16.msra.mxu0 0
          %1900 = vmatpush.bf16.msra.mxu0 0
          %1901 = vmatpush.bf16.msra.mxu0 %v1855
          %1902 = vmatpush.bf16.msra.mxu0 %v1847
          %1903 = vmatmul.bf16.gmra.mxu0 %v1880
          %v1904 = vpop.f32.mrf.mxu0
          %v1905 = vadd.f32 %v1783, %v1904
          %v1906 = vpop.f32.mrf.mxu0
          %1907 = vdwg.mxu0
          %1908 = vmatpush.bf16.msra.mxu0 0
          %1909 = vmatpush.bf16.msra.mxu0 0
          %1910 = vmatpush.bf16.msra.mxu0 0
          %1911 = vmatpush.bf16.msra.mxu0 0
          %1912 = vmatpush.bf16.msra.mxu0 0
          %1913 = vmatpush.bf16.msra.mxu0 0
          %1914 = vmatpush.bf16.msra.mxu0 %v1856
          %1915 = vmatpush.bf16.msra.mxu0 %v1848
          %1916 = vmatmul.bf16.gmra.mxu0 %v1880
          %v1917 = vpop.f32.mrf.mxu0
          %v1918 = vadd.f32 %v1784, %v1917
          %v1919 = vpop.f32.mrf.mxu0
          %1920 = vdwg.mxu0
          %1921 = vmatpush.bf16.msra.mxu0 0
          %1922 = vmatpush.bf16.msra.mxu0 0
          %1923 = vmatpush.bf16.msra.mxu0 0
          %1924 = vmatpush.bf16.msra.mxu0 0
          %1925 = vmatpush.bf16.msra.mxu0 0
          %1926 = vmatpush.bf16.msra.mxu0 0
          %1927 = vmatpush.bf16.msra.mxu0 %v1857
          %1928 = vmatpush.bf16.msra.mxu0 %v1849
          %1929 = vmatmul.bf16.gmra.mxu0 %v1880
          %v1930 = vpop.f32.mrf.mxu0
          %v1931 = vadd.f32 %v1785, %v1930
          %v1932 = vpop.f32.mrf.mxu0
          %1933 = vdwg.mxu0
          %1934 = vmatpush.bf16.msra.mxu0 0
          %1935 = vmatpush.bf16.msra.mxu0 0
          %1936 = vmatpush.bf16.msra.mxu0 0
          %1937 = vmatpush.bf16.msra.mxu0 0
          %1938 = vmatpush.bf16.msra.mxu0 0
          %1939 = vmatpush.bf16.msra.mxu0 0
          %1940 = vmatpush.bf16.msra.mxu0 %v1858
          %1941 = vmatpush.bf16.msra.mxu0 %v1850
          %1942 = vmatmul.bf16.gmra.mxu0 %v1880
          %v1943 = vpop.f32.mrf.mxu0
          %v1944 = vadd.f32 %v1786, %v1943
          %v1945 = vpop.f32.mrf.mxu0
          %1946 = vdwg.mxu0
          %1947 = vmatpush.bf16.msra.mxu0 0
          %1948 = vmatpush.bf16.msra.mxu0 0
          %1949 = vmatpush.bf16.msra.mxu0 0
          %1950 = vmatpush.bf16.msra.mxu0 0
          %1951 = vmatpush.bf16.msra.mxu0 0
          %1952 = vmatpush.bf16.msra.mxu0 0
          %1953 = vmatpush.bf16.msra.mxu0 %v1859
          %1954 = vmatpush.bf16.msra.mxu0 %v1851
          %1955 = vmatmul.bf16.gmra.mxu0 %v1880
          %v1956 = vpop.f32.mrf.mxu0
          %v1957 = vadd.f32 %v1787, %v1956
          %v1958 = vpop.f32.mrf.mxu0
          %1959 = vdwg.mxu0
          %1960 = vmatpush.bf16.msra.mxu0 0
          %1961 = vmatpush.bf16.msra.mxu0 0
          %1962 = vmatpush.bf16.msra.mxu0 0
          %1963 = vmatpush.bf16.msra.mxu0 0
          %1964 = vmatpush.bf16.msra.mxu0 0
          %1965 = vmatpush.bf16.msra.mxu0 0
          %1966 = vmatpush.bf16.msra.mxu0 %v1860
          %1967 = vmatpush.bf16.msra.mxu0 %v1852
          %1968 = vmatmul.bf16.gmra.mxu0 %v1880
          %v1969 = vpop.f32.mrf.mxu0
          %v1970 = vadd.f32 %v1788, %v1969
          %v1971 = vpop.f32.mrf.mxu0
          %1972 = vdwg.mxu0
          %1973 = vmatpush.bf16.msra.mxu0 0
          %1974 = vmatpush.bf16.msra.mxu0 0
          %1975 = vmatpush.bf16.msra.mxu0 0
          %1976 = vmatpush.bf16.msra.mxu0 0
          %1977 = vmatpush.bf16.msra.mxu0 0
          %1978 = vmatpush.bf16.msra.mxu0 0
          %1979 = vmatpush.bf16.msra.mxu0 %v1861
          %1980 = vmatpush.bf16.msra.mxu0 %v1853
          %1981 = vmatmul.bf16.gmra.mxu0 %v1880
          %v1982 = vpop.f32.mrf.mxu0
          %v1983 = vadd.f32 %v1789, %v1982
          %v1984 = vpop.f32.mrf.mxu0
          %1985 = vdwg.mxu0
          %v1986 = vmul.f32 %v1892, 0.5
          %v1987 = vmul.f32 %v1905, 0.5
          %v1988 = vmul.f32 %v1918, 0.5
          %v1989 = vmul.f32 %v1931, 0.5
          %v1990 = vmul.f32 %v1944, 0.5
          %v1991 = vmul.f32 %v1957, 0.5
          %v1992 = vmul.f32 %v1970, 0.5
          %v1993 = vmul.f32 %v1983, 0.5
          %v1994 = vmul.f32 %v1892, 0.70710677
          %v1995 = vmul.f32 %v1905, 0.70710677
          %v1996 = vmul.f32 %v1918, 0.70710677
          %v1997 = vmul.f32 %v1931, 0.70710677
          %v1998 = vmul.f32 %v1944, 0.70710677
          %v1999 = vmul.f32 %v1957, 0.70710677
          %v2000 = vmul.f32 %v1970, 0.70710677
          %v2001 = vmul.f32 %v1983, 0.70710677
          %v2002 = vmul.f32 %v1994, %v1994
          %v2003 = vmin.f32 16.0, %v2002
          %v2004 = vmul.f32 %v2003, 2.1237322e-06
          %v2005 = vadd.f32 %v2004, 0.00028619796
          %v2006 = vmul.f32 %v2003, %v2005
          %v2007 = vadd.f32 %v2006, 0.0036580483
          %v2008 = vmul.f32 %v2003, %v2007
          %v2009 = vadd.f32 %v2008, 0.05243302
          %v2010 = vmul.f32 %v2003, %v2009
          %v2011 = vadd.f32 %v2010, 0.18741608
          %v2012 = vmul.f32 %v2003, %v2011
          %v2013 = vadd.f32 %v2012, 1.1283791
          %v2014 = vmul.f32 %v1994, %v2013
          %v2015 = vmul.f32 %v2003, 3.8918573e-05
          %v2016 = vadd.f32 %v2015, 0.001143296
          %v2017 = vmul.f32 %v2003, %v2016
          %v2018 = vadd.f32 %v2017, 0.014752088
          %v2019 = vmul.f32 %v2003, %v2018
          %v2020 = vadd.f32 %v2019, 0.112945676
          %v2021 = vmul.f32 %v2003, %v2020
          %v2022 = vadd.f32 %v2021, 0.4994258
          %v2023 = vmul.f32 %v2003, %v2022
          %v2024 = vadd.f32 %v2023, 1.0
          %v2025 = vrcp.pop %v2024
          %v2026 = vmul.f32 %v2024, %v2025
          %v2027 = vsub.f32 1.0, %v2026
          %v2028 = vmul.f32 %v2025, %v2027
          %v2029 = vadd.f32 %v2025, %v2028
          %vm2030 = vweird.f32 %v2024
          %vm2031 = vweird.f32 %v2025
          %vm2032 = vmor %vm2030, %vm2031
          %v2033 = vsel %vm2032, %v2025, %v2029
          %v2034 = vand.u32 2147483647, %v2024
          %vm2035 = vcmp.eq.f32.partialorder %v2034, 8.507059e+37
          %v2036 = vand.u32 %v2024, 2147483648
          %v2037 = vor.u32 1.1754944e-38, %v2036
          %v2038 = vsel %vm2035, %v2037, %v2033
          %v2039 = vmul.f32 %v2014, %v2038
          %v2040 = vmin.f32 %v2039, 1.0
          %v2041 = vmax.f32 %v2040, -1.0
          %v2042 = vmul.f32 %v1995, %v1995
          %v2043 = vmin.f32 16.0, %v2042
          %v2044 = vmul.f32 %v2043, 2.1237322e-06
          %v2045 = vadd.f32 %v2044, 0.00028619796
          %v2046 = vmul.f32 %v2043, %v2045
          %v2047 = vadd.f32 %v2046, 0.0036580483
          %v2048 = vmul.f32 %v2043, %v2047
          %v2049 = vadd.f32 %v2048, 0.05243302
          %v2050 = vmul.f32 %v2043, %v2049
          %v2051 = vadd.f32 %v2050, 0.18741608
          %v2052 = vmul.f32 %v2043, %v2051
          %v2053 = vadd.f32 %v2052, 1.1283791
          %v2054 = vmul.f32 %v1995, %v2053
          %v2055 = vmul.f32 %v2043, 3.8918573e-05
          %v2056 = vadd.f32 %v2055, 0.001143296
          %v2057 = vmul.f32 %v2043, %v2056
          %v2058 = vadd.f32 %v2057, 0.014752088
          %v2059 = vmul.f32 %v2043, %v2058
          %v2060 = vadd.f32 %v2059, 0.112945676
          %v2061 = vmul.f32 %v2043, %v2060
          %v2062 = vadd.f32 %v2061, 0.4994258
          %v2063 = vmul.f32 %v2043, %v2062
          %v2064 = vadd.f32 %v2063, 1.0
          %v2065 = vrcp.pop %v2064
          %v2066 = vmul.f32 %v2064, %v2065
          %v2067 = vsub.f32 1.0, %v2066
          %v2068 = vmul.f32 %v2065, %v2067
          %v2069 = vadd.f32 %v2065, %v2068
          %vm2070 = vweird.f32 %v2064
          %vm2071 = vweird.f32 %v2065
          %vm2072 = vmor %vm2070, %vm2071
          %v2073 = vsel %vm2072, %v2065, %v2069
          %v2074 = vand.u32 2147483647, %v2064
          %vm2075 = vcmp.eq.f32.partialorder %v2074, 8.507059e+37
          %v2076 = vand.u32 %v2064, 2147483648
          %v2077 = vor.u32 1.1754944e-38, %v2076
          %v2078 = vsel %vm2075, %v2077, %v2073
          %v2079 = vmul.f32 %v2054, %v2078
          %v2080 = vmin.f32 %v2079, 1.0
          %v2081 = vmax.f32 %v2080, -1.0
          %v2082 = vmul.f32 %v1996, %v1996
          %v2083 = vmin.f32 16.0, %v2082
          %v2084 = vmul.f32 %v2083, 2.1237322e-06
          %v2085 = vadd.f32 %v2084, 0.00028619796
          %v2086 = vmul.f32 %v2083, %v2085
          %v2087 = vadd.f32 %v2086, 0.0036580483
          %v2088 = vmul.f32 %v2083, %v2087
          %v2089 = vadd.f32 %v2088, 0.05243302
          %v2090 = vmul.f32 %v2083, %v2089
          %v2091 = vadd.f32 %v2090, 0.18741608
          %v2092 = vmul.f32 %v2083, %v2091
          %v2093 = vadd.f32 %v2092, 1.1283791
          %v2094 = vmul.f32 %v1996, %v2093
          %v2095 = vmul.f32 %v2083, 3.8918573e-05
          %v2096 = vadd.f32 %v2095, 0.001143296
          %v2097 = vmul.f32 %v2083, %v2096
          %v2098 = vadd.f32 %v2097, 0.014752088
          %v2099 = vmul.f32 %v2083, %v2098
          %v2100 = vadd.f32 %v2099, 0.112945676
          %v2101 = vmul.f32 %v2083, %v2100
          %v2102 = vadd.f32 %v2101, 0.4994258
          %v2103 = vmul.f32 %v2083, %v2102
          %v2104 = vadd.f32 %v2103, 1.0
          %v2105 = vrcp.pop %v2104
          %v2106 = vmul.f32 %v2104, %v2105
          %v2107 = vsub.f32 1.0, %v2106
          %v2108 = vmul.f32 %v2105, %v2107
          %v2109 = vadd.f32 %v2105, %v2108
          %vm2110 = vweird.f32 %v2104
          %vm2111 = vweird.f32 %v2105
          %vm2112 = vmor %vm2110, %vm2111
          %v2113 = vsel %vm2112, %v2105, %v2109
          %v2114 = vand.u32 2147483647, %v2104
          %vm2115 = vcmp.eq.f32.partialorder %v2114, 8.507059e+37
          %v2116 = vand.u32 %v2104, 2147483648
          %v2117 = vor.u32 1.1754944e-38, %v2116
          %v2118 = vsel %vm2115, %v2117, %v2113
          %v2119 = vmul.f32 %v2094, %v2118
          %v2120 = vmin.f32 %v2119, 1.0
          %v2121 = vmax.f32 %v2120, -1.0
          %v2122 = vmul.f32 %v1997, %v1997
          %v2123 = vmin.f32 16.0, %v2122
          %v2124 = vmul.f32 %v2123, 2.1237322e-06
          %v2125 = vadd.f32 %v2124, 0.00028619796
          %v2126 = vmul.f32 %v2123, %v2125
          %v2127 = vadd.f32 %v2126, 0.0036580483
          %v2128 = vmul.f32 %v2123, %v2127
          %v2129 = vadd.f32 %v2128, 0.05243302
          %v2130 = vmul.f32 %v2123, %v2129
          %v2131 = vadd.f32 %v2130, 0.18741608
          %v2132 = vmul.f32 %v2123, %v2131
          %v2133 = vadd.f32 %v2132, 1.1283791
          %v2134 = vmul.f32 %v1997, %v2133
          %v2135 = vmul.f32 %v2123, 3.8918573e-05
          %v2136 = vadd.f32 %v2135, 0.001143296
          %v2137 = vmul.f32 %v2123, %v2136
          %v2138 = vadd.f32 %v2137, 0.014752088
          %v2139 = vmul.f32 %v2123, %v2138
          %v2140 = vadd.f32 %v2139, 0.112945676
          %v2141 = vmul.f32 %v2123, %v2140
          %v2142 = vadd.f32 %v2141, 0.4994258
          %v2143 = vmul.f32 %v2123, %v2142
          %v2144 = vadd.f32 %v2143, 1.0
          %v2145 = vrcp.pop %v2144
          %v2146 = vmul.f32 %v2144, %v2145
          %v2147 = vsub.f32 1.0, %v2146
          %v2148 = vmul.f32 %v2145, %v2147
          %v2149 = vadd.f32 %v2145, %v2148
          %vm2150 = vweird.f32 %v2144
          %vm2151 = vweird.f32 %v2145
          %vm2152 = vmor %vm2150, %vm2151
          %v2153 = vsel %vm2152, %v2145, %v2149
          %v2154 = vand.u32 2147483647, %v2144
          %vm2155 = vcmp.eq.f32.partialorder %v2154, 8.507059e+37
          %v2156 = vand.u32 %v2144, 2147483648
          %v2157 = vor.u32 1.1754944e-38, %v2156
          %v2158 = vsel %vm2155, %v2157, %v2153
          %v2159 = vmul.f32 %v2134, %v2158
          %v2160 = vmin.f32 %v2159, 1.0
          %v2161 = vmax.f32 %v2160, -1.0
          %v2162 = vmul.f32 %v1998, %v1998
          %v2163 = vmin.f32 16.0, %v2162
          %v2164 = vmul.f32 %v2163, 2.1237322e-06
          %v2165 = vadd.f32 %v2164, 0.00028619796
          %v2166 = vmul.f32 %v2163, %v2165
          %v2167 = vadd.f32 %v2166, 0.0036580483
          %v2168 = vmul.f32 %v2163, %v2167
          %v2169 = vadd.f32 %v2168, 0.05243302
          %v2170 = vmul.f32 %v2163, %v2169
          %v2171 = vadd.f32 %v2170, 0.18741608
          %v2172 = vmul.f32 %v2163, %v2171
          %v2173 = vadd.f32 %v2172, 1.1283791
          %v2174 = vmul.f32 %v1998, %v2173
          %v2175 = vmul.f32 %v2163, 3.8918573e-05
          %v2176 = vadd.f32 %v2175, 0.001143296
          %v2177 = vmul.f32 %v2163, %v2176
          %v2178 = vadd.f32 %v2177, 0.014752088
          %v2179 = vmul.f32 %v2163, %v2178
          %v2180 = vadd.f32 %v2179, 0.112945676
          %v2181 = vmul.f32 %v2163, %v2180
          %v2182 = vadd.f32 %v2181, 0.4994258
          %v2183 = vmul.f32 %v2163, %v2182
          %v2184 = vadd.f32 %v2183, 1.0
          %v2185 = vrcp.pop %v2184
          %v2186 = vmul.f32 %v2184, %v2185
          %v2187 = vsub.f32 1.0, %v2186
          %v2188 = vmul.f32 %v2185, %v2187
          %v2189 = vadd.f32 %v2185, %v2188
          %vm2190 = vweird.f32 %v2184
          %vm2191 = vweird.f32 %v2185
          %vm2192 = vmor %vm2190, %vm2191
          %v2193 = vsel %vm2192, %v2185, %v2189
          %v2194 = vand.u32 2147483647, %v2184
          %vm2195 = vcmp.eq.f32.partialorder %v2194, 8.507059e+37
          %v2196 = vand.u32 %v2184, 2147483648
          %v2197 = vor.u32 1.1754944e-38, %v2196
          %v2198 = vsel %vm2195, %v2197, %v2193
          %v2199 = vmul.f32 %v2174, %v2198
          %v2200 = vmin.f32 %v2199, 1.0
          %v2201 = vmax.f32 %v2200, -1.0
          %v2202 = vmul.f32 %v1999, %v1999
          %v2203 = vmin.f32 16.0, %v2202
          %v2204 = vmul.f32 %v2203, 2.1237322e-06
          %v2205 = vadd.f32 %v2204, 0.00028619796
          %v2206 = vmul.f32 %v2203, %v2205
          %v2207 = vadd.f32 %v2206, 0.0036580483
          %v2208 = vmul.f32 %v2203, %v2207
          %v2209 = vadd.f32 %v2208, 0.05243302
          %v2210 = vmul.f32 %v2203, %v2209
          %v2211 = vadd.f32 %v2210, 0.18741608
          %v2212 = vmul.f32 %v2203, %v2211
          %v2213 = vadd.f32 %v2212, 1.1283791
          %v2214 = vmul.f32 %v1999, %v2213
          %v2215 = vmul.f32 %v2203, 3.8918573e-05
          %v2216 = vadd.f32 %v2215, 0.001143296
          %v2217 = vmul.f32 %v2203, %v2216
          %v2218 = vadd.f32 %v2217, 0.014752088
          %v2219 = vmul.f32 %v2203, %v2218
          %v2220 = vadd.f32 %v2219, 0.112945676
          %v2221 = vmul.f32 %v2203, %v2220
          %v2222 = vadd.f32 %v2221, 0.4994258
          %v2223 = vmul.f32 %v2203, %v2222
          %v2224 = vadd.f32 %v2223, 1.0
          %v2225 = vrcp.pop %v2224
          %v2226 = vmul.f32 %v2224, %v2225
          %v2227 = vsub.f32 1.0, %v2226
          %v2228 = vmul.f32 %v2225, %v2227
          %v2229 = vadd.f32 %v2225, %v2228
          %vm2230 = vweird.f32 %v2224
          %vm2231 = vweird.f32 %v2225
          %vm2232 = vmor %vm2230, %vm2231
          %v2233 = vsel %vm2232, %v2225, %v2229
          %v2234 = vand.u32 2147483647, %v2224
          %vm2235 = vcmp.eq.f32.partialorder %v2234, 8.507059e+37
          %v2236 = vand.u32 %v2224, 2147483648
          %v2237 = vor.u32 1.1754944e-38, %v2236
          %v2238 = vsel %vm2235, %v2237, %v2233
          %v2239 = vmul.f32 %v2214, %v2238
          %v2240 = vmin.f32 %v2239, 1.0
          %v2241 = vmax.f32 %v2240, -1.0
          %v2242 = vmul.f32 %v2000, %v2000
          %v2243 = vmin.f32 16.0, %v2242
          %v2244 = vmul.f32 %v2243, 2.1237322e-06
          %v2245 = vadd.f32 %v2244, 0.00028619796
          %v2246 = vmul.f32 %v2243, %v2245
          %v2247 = vadd.f32 %v2246, 0.0036580483
          %v2248 = vmul.f32 %v2243, %v2247
          %v2249 = vadd.f32 %v2248, 0.05243302
          %v2250 = vmul.f32 %v2243, %v2249
          %v2251 = vadd.f32 %v2250, 0.18741608
          %v2252 = vmul.f32 %v2243, %v2251
          %v2253 = vadd.f32 %v2252, 1.1283791
          %v2254 = vmul.f32 %v2000, %v2253
          %v2255 = vmul.f32 %v2243, 3.8918573e-05
          %v2256 = vadd.f32 %v2255, 0.001143296
          %v2257 = vmul.f32 %v2243, %v2256
          %v2258 = vadd.f32 %v2257, 0.014752088
          %v2259 = vmul.f32 %v2243, %v2258
          %v2260 = vadd.f32 %v2259, 0.112945676
          %v2261 = vmul.f32 %v2243, %v2260
          %v2262 = vadd.f32 %v2261, 0.4994258
          %v2263 = vmul.f32 %v2243, %v2262
          %v2264 = vadd.f32 %v2263, 1.0
          %v2265 = vrcp.pop %v2264
          %v2266 = vmul.f32 %v2264, %v2265
          %v2267 = vsub.f32 1.0, %v2266
          %v2268 = vmul.f32 %v2265, %v2267
          %v2269 = vadd.f32 %v2265, %v2268
          %vm2270 = vweird.f32 %v2264
          %vm2271 = vweird.f32 %v2265
          %vm2272 = vmor %vm2270, %vm2271
          %v2273 = vsel %vm2272, %v2265, %v2269
          %v2274 = vand.u32 2147483647, %v2264
          %vm2275 = vcmp.eq.f32.partialorder %v2274, 8.507059e+37
          %v2276 = vand.u32 %v2264, 2147483648
          %v2277 = vor.u32 1.1754944e-38, %v2276
          %v2278 = vsel %vm2275, %v2277, %v2273
          %v2279 = vmul.f32 %v2254, %v2278
          %v2280 = vmin.f32 %v2279, 1.0
          %v2281 = vmax.f32 %v2280, -1.0
          %v2282 = vmul.f32 %v2001, %v2001
          %v2283 = vmin.f32 16.0, %v2282
          %v2284 = vmul.f32 %v2283, 2.1237322e-06
          %v2285 = vadd.f32 %v2284, 0.00028619796
          %v2286 = vmul.f32 %v2283, %v2285
          %v2287 = vadd.f32 %v2286, 0.0036580483
          %v2288 = vmul.f32 %v2283, %v2287
          %v2289 = vadd.f32 %v2288, 0.05243302
          %v2290 = vmul.f32 %v2283, %v2289
          %v2291 = vadd.f32 %v2290, 0.18741608
          %v2292 = vmul.f32 %v2283, %v2291
          %v2293 = vadd.f32 %v2292, 1.1283791
          %v2294 = vmul.f32 %v2001, %v2293
          %v2295 = vmul.f32 %v2283, 3.8918573e-05
          %v2296 = vadd.f32 %v2295, 0.001143296
          %v2297 = vmul.f32 %v2283, %v2296
          %v2298 = vadd.f32 %v2297, 0.014752088
          %v2299 = vmul.f32 %v2283, %v2298
          %v2300 = vadd.f32 %v2299, 0.112945676
          %v2301 = vmul.f32 %v2283, %v2300
          %v2302 = vadd.f32 %v2301, 0.4994258
          %v2303 = vmul.f32 %v2283, %v2302
          %v2304 = vadd.f32 %v2303, 1.0
          %v2305 = vrcp.pop %v2304
          %v2306 = vmul.f32 %v2304, %v2305
          %v2307 = vsub.f32 1.0, %v2306
          %v2308 = vmul.f32 %v2305, %v2307
          %v2309 = vadd.f32 %v2305, %v2308
          %vm2310 = vweird.f32 %v2304
          %vm2311 = vweird.f32 %v2305
          %vm2312 = vmor %vm2310, %vm2311
          %v2313 = vsel %vm2312, %v2305, %v2309
          %v2314 = vand.u32 2147483647, %v2304
          %vm2315 = vcmp.eq.f32.partialorder %v2314, 8.507059e+37
          %v2316 = vand.u32 %v2304, 2147483648
          %v2317 = vor.u32 1.1754944e-38, %v2316
          %v2318 = vsel %vm2315, %v2317, %v2313
          %v2319 = vmul.f32 %v2294, %v2318
          %v2320 = vmin.f32 %v2319, 1.0
          %v2321 = vmax.f32 %v2320, -1.0
          %v2322 = vadd.f32 %v2041, 1.0
          %v2323 = vadd.f32 %v2081, 1.0
          %v2324 = vadd.f32 %v2121, 1.0
          %v2325 = vadd.f32 %v2161, 1.0
          %v2326 = vadd.f32 %v2201, 1.0
          %v2327 = vadd.f32 %v2241, 1.0
          %v2328 = vadd.f32 %v2281, 1.0
          %v2329 = vadd.f32 %v2321, 1.0
          %v2330 = vmul.f32 %v1986, %v2322
          %v2331 = vmul.f32 %v1987, %v2323
          %v2332 = vmul.f32 %v1988, %v2324
          %v2333 = vmul.f32 %v1989, %v2325
          %v2334 = vmul.f32 %v1990, %v2326
          %v2335 = vmul.f32 %v1991, %v2327
          %v2336 = vmul.f32 %v1992, %v2328
          %v2337 = vmul.f32 %v1993, %v2329
          %v2338 = vpack.c.bf16 %v2330, %v2330
          %v2339 = vpack.c.bf16 %v2331, %v2331
          %v2340 = vpack.c.bf16 %v2332, %v2332
          %v2341 = vpack.c.bf16 %v2333, %v2333
          %v2342 = vpack.c.bf16 %v2334, %v2334
          %v2343 = vpack.c.bf16 %v2335, %v2335
          %v2344 = vpack.c.bf16 %v2336, %v2336
          %v2345 = vpack.c.bf16 %v2337, %v2337
          %v2346 = vld [vmem:[#allocation7] sm:$0xf]
          %v2347 = vld [vmem:[#allocation7 + $0x4] sm:$0xf]
          %v2348 = vld [vmem:[#allocation7 + $0x8] sm:$0xf]
          %v2349 = vld [vmem:[#allocation7 + $0xc] sm:$0xf]
          %v2350 = vld [vmem:[#allocation7 + $0x10] sm:$0xf]
          %v2351 = vld [vmem:[#allocation7 + $0x14] sm:$0xf]
          %v2352 = vld [vmem:[#allocation7 + $0x18] sm:$0xf]
          %v2353 = vld [vmem:[#allocation7 + $0x1c] sm:$0xf]
          %v2354 = vld [vmem:[#allocation7 + $0x20] sm:$0xf]
          %v2355 = vld [vmem:[#allocation7 + $0x24] sm:$0xf]
          %v2356 = vld [vmem:[#allocation7 + $0x28] sm:$0xf]
          %v2357 = vld [vmem:[#allocation7 + $0x2c] sm:$0xf]
          %v2358 = vld [vmem:[#allocation7 + $0x30] sm:$0xf]
          %v2359 = vld [vmem:[#allocation7 + $0x34] sm:$0xf]
          %v2360 = vld [vmem:[#allocation7 + $0x38] sm:$0xf]
          %v2361 = vld [vmem:[#allocation7 + $0x3c] sm:$0xf]
          %v2362 = vld [vmem:[#allocation7 + $0x40] sm:$0xf]
          %v2363 = vld [vmem:[#allocation7 + $0x44] sm:$0xf]
          %v2364 = vld [vmem:[#allocation7 + $0x48] sm:$0xf]
          %v2365 = vld [vmem:[#allocation7 + $0x4c] sm:$0xf]
          %v2366 = vld [vmem:[#allocation7 + $0x50] sm:$0xf]
          %v2367 = vld [vmem:[#allocation7 + $0x54] sm:$0xf]
          %v2368 = vld [vmem:[#allocation7 + $0x58] sm:$0xf]
          %v2369 = vld [vmem:[#allocation7 + $0x5c] sm:$0xf]
          %v2370 = vld [vmem:[#allocation7 + $0x60] sm:$0xf]
          %v2371 = vld [vmem:[#allocation7 + $0x64] sm:$0xf]
          %v2372 = vld [vmem:[#allocation7 + $0x68] sm:$0xf]
          %v2373 = vld [vmem:[#allocation7 + $0x6c] sm:$0xf]
          %v2374 = vld [vmem:[#allocation7 + $0x70] sm:$0xf]
          %v2375 = vld [vmem:[#allocation7 + $0x74] sm:$0xf]
          %v2376 = vld [vmem:[#allocation7 + $0x78] sm:$0xf]
          %v2377 = vld [vmem:[#allocation7 + $0x7c] sm:$0xf]
          %v2378 = vld [vmem:[#allocation7 + $0x80] sm:$0xf]
          %v2379 = vld [vmem:[#allocation7 + $0x84] sm:$0xf]
          %v2380 = vld [vmem:[#allocation7 + $0x88] sm:$0xf]
          %v2381 = vld [vmem:[#allocation7 + $0x8c] sm:$0xf]
          %v2382 = vld [vmem:[#allocation7 + $0x90] sm:$0xf]
          %v2383 = vld [vmem:[#allocation7 + $0x94] sm:$0xf]
          %v2384 = vld [vmem:[#allocation7 + $0x98] sm:$0xf]
          %v2385 = vld [vmem:[#allocation7 + $0x9c] sm:$0xf]
          %v2386 = vld [vmem:[#allocation7 + $0xa0] sm:$0xf]
          %v2387 = vld [vmem:[#allocation7 + $0xa4] sm:$0xf]
          %v2388 = vld [vmem:[#allocation7 + $0xa8] sm:$0xf]
          %v2389 = vld [vmem:[#allocation7 + $0xac] sm:$0xf]
          %v2390 = vld [vmem:[#allocation7 + $0xb0] sm:$0xf]
          %v2391 = vld [vmem:[#allocation7 + $0xb4] sm:$0xf]
          %v2392 = vld [vmem:[#allocation7 + $0xb8] sm:$0xf]
          %v2393 = vld [vmem:[#allocation7 + $0xbc] sm:$0xf]
          %v2394 = vld [vmem:[#allocation7 + $0xc0] sm:$0xf]
          %v2395 = vld [vmem:[#allocation7 + $0xc4] sm:$0xf]
          %v2396 = vld [vmem:[#allocation7 + $0xc8] sm:$0xf]
          %v2397 = vld [vmem:[#allocation7 + $0xcc] sm:$0xf]
          %v2398 = vld [vmem:[#allocation7 + $0xd0] sm:$0xf]
          %v2399 = vld [vmem:[#allocation7 + $0xd4] sm:$0xf]
          %v2400 = vld [vmem:[#allocation7 + $0xd8] sm:$0xf]
          %v2401 = vld [vmem:[#allocation7 + $0xdc] sm:$0xf]
          %v2402 = vld [vmem:[#allocation7 + $0xe0] sm:$0xf]
          %v2403 = vld [vmem:[#allocation7 + $0xe4] sm:$0xf]
          %v2404 = vld [vmem:[#allocation7 + $0xe8] sm:$0xf]
          %v2405 = vld [vmem:[#allocation7 + $0xec] sm:$0xf]
          %v2406 = vld [vmem:[#allocation7 + $0xf0] sm:$0xf]
          %v2407 = vld [vmem:[#allocation7 + $0xf4] sm:$0xf]
          %v2408 = vld [vmem:[#allocation7 + $0xf8] sm:$0xf]
          %v2409 = vld [vmem:[#allocation7 + $0xfc] sm:$0xf]
          %v2410 = vld [vmem:[#allocation7 + $0x100] sm:$0xf]
          %v2411 = vld [vmem:[#allocation7 + $0x104] sm:$0xf]
          %v2412 = vld [vmem:[#allocation7 + $0x108] sm:$0xf]
          %v2413 = vld [vmem:[#allocation7 + $0x10c] sm:$0xf]
          %v2414 = vld [vmem:[#allocation7 + $0x110] sm:$0xf]
          %v2415 = vld [vmem:[#allocation7 + $0x114] sm:$0xf]
          %v2416 = vld [vmem:[#allocation7 + $0x118] sm:$0xf]
          %v2417 = vld [vmem:[#allocation7 + $0x11c] sm:$0xf]
          %v2418 = vld [vmem:[#allocation7 + $0x120] sm:$0xf]
          %v2419 = vld [vmem:[#allocation7 + $0x124] sm:$0xf]
          %v2420 = vld [vmem:[#allocation7 + $0x128] sm:$0xf]
          %v2421 = vld [vmem:[#allocation7 + $0x12c] sm:$0xf]
          %v2422 = vld [vmem:[#allocation7 + $0x130] sm:$0xf]
          %v2423 = vld [vmem:[#allocation7 + $0x134] sm:$0xf]
          %v2424 = vld [vmem:[#allocation7 + $0x138] sm:$0xf]
          %v2425 = vld [vmem:[#allocation7 + $0x13c] sm:$0xf]
          %v2426 = vld [vmem:[#allocation7 + $0x140] sm:$0xf]
          %v2427 = vld [vmem:[#allocation7 + $0x144] sm:$0xf]
          %v2428 = vld [vmem:[#allocation7 + $0x148] sm:$0xf]
          %v2429 = vld [vmem:[#allocation7 + $0x14c] sm:$0xf]
          %v2430 = vld [vmem:[#allocation7 + $0x150] sm:$0xf]
          %v2431 = vld [vmem:[#allocation7 + $0x154] sm:$0xf]
          %v2432 = vld [vmem:[#allocation7 + $0x158] sm:$0xf]
          %v2433 = vld [vmem:[#allocation7 + $0x15c] sm:$0xf]
          %v2434 = vld [vmem:[#allocation7 + $0x160] sm:$0xf]
          %v2435 = vld [vmem:[#allocation7 + $0x164] sm:$0xf]
          %v2436 = vld [vmem:[#allocation7 + $0x168] sm:$0xf]
          %v2437 = vld [vmem:[#allocation7 + $0x16c] sm:$0xf]
          %v2438 = vld [vmem:[#allocation7 + $0x170] sm:$0xf]
          %v2439 = vld [vmem:[#allocation7 + $0x174] sm:$0xf]
          %v2440 = vld [vmem:[#allocation7 + $0x178] sm:$0xf]
          %v2441 = vld [vmem:[#allocation7 + $0x17c] sm:$0xf]
          %v2442 = vld [vmem:[#allocation7 + $0x180] sm:$0xf]
          %v2443 = vld [vmem:[#allocation7 + $0x184] sm:$0xf]
          %v2444 = vld [vmem:[#allocation7 + $0x188] sm:$0xf]
          %v2445 = vld [vmem:[#allocation7 + $0x18c] sm:$0xf]
          %v2446 = vld [vmem:[#allocation7 + $0x190] sm:$0xf]
          %v2447 = vld [vmem:[#allocation7 + $0x194] sm:$0xf]
          %v2448 = vld [vmem:[#allocation7 + $0x198] sm:$0xf]
          %v2449 = vld [vmem:[#allocation7 + $0x19c] sm:$0xf]
          %v2450 = vld [vmem:[#allocation7 + $0x1a0] sm:$0xf]
          %v2451 = vld [vmem:[#allocation7 + $0x1a4] sm:$0xf]
          %v2452 = vld [vmem:[#allocation7 + $0x1a8] sm:$0xf]
          %v2453 = vld [vmem:[#allocation7 + $0x1ac] sm:$0xf]
          %v2454 = vld [vmem:[#allocation7 + $0x1b0] sm:$0xf]
          %v2455 = vld [vmem:[#allocation7 + $0x1b4] sm:$0xf]
          %v2456 = vld [vmem:[#allocation7 + $0x1b8] sm:$0xf]
          %v2457 = vld [vmem:[#allocation7 + $0x1bc] sm:$0xf]
          %v2458 = vld [vmem:[#allocation7 + $0x1c0] sm:$0xf]
          %v2459 = vld [vmem:[#allocation7 + $0x1c4] sm:$0xf]
          %v2460 = vld [vmem:[#allocation7 + $0x1c8] sm:$0xf]
          %v2461 = vld [vmem:[#allocation7 + $0x1cc] sm:$0xf]
          %v2462 = vld [vmem:[#allocation7 + $0x1d0] sm:$0xf]
          %v2463 = vld [vmem:[#allocation7 + $0x1d4] sm:$0xf]
          %v2464 = vld [vmem:[#allocation7 + $0x1d8] sm:$0xf]
          %v2465 = vld [vmem:[#allocation7 + $0x1dc] sm:$0xf]
          %v2466 = vld [vmem:[#allocation7 + $0x1e0] sm:$0xf]
          %v2467 = vld [vmem:[#allocation7 + $0x1e4] sm:$0xf]
          %v2468 = vld [vmem:[#allocation7 + $0x1e8] sm:$0xf]
          %v2469 = vld [vmem:[#allocation7 + $0x1ec] sm:$0xf]
          %v2470 = vld [vmem:[#allocation7 + $0x1f0] sm:$0xf]
          %v2471 = vld [vmem:[#allocation7 + $0x1f4] sm:$0xf]
          %v2472 = vld [vmem:[#allocation7 + $0x1f8] sm:$0xf]
          %v2473 = vld [vmem:[#allocation7 + $0x1fc] sm:$0xf]
          %v2474 = vld [vmem:[%s6] sm:$0x1]
          %v2476 = vperm.slane %v2474, 0
          %v2606 = vunpack.c.l.b16 %v2346
          %v2607 = vunpack.c.l.b16 %v2347
          %v2608 = vunpack.c.l.b16 %v2348
          %v2609 = vunpack.c.l.b16 %v2349
          %v2610 = vunpack.c.l.b16 %v2350
          %v2611 = vunpack.c.l.b16 %v2351
          %v2612 = vunpack.c.l.b16 %v2352
          %v2613 = vunpack.c.l.b16 %v2353
          %v2614 = vunpack.c.l.b16 %v2354
          %v2615 = vunpack.c.l.b16 %v2355
          %v2616 = vunpack.c.l.b16 %v2356
          %v2617 = vunpack.c.l.b16 %v2357
          %v2618 = vunpack.c.l.b16 %v2358
          %v2619 = vunpack.c.l.b16 %v2359
          %v2620 = vunpack.c.l.b16 %v2360
          %v2621 = vunpack.c.l.b16 %v2361
          %v2622 = vunpack.c.l.b16 %v2362
          %v2623 = vunpack.c.l.b16 %v2363
          %v2624 = vunpack.c.l.b16 %v2364
          %v2625 = vunpack.c.l.b16 %v2365
          %v2626 = vunpack.c.l.b16 %v2366
          %v2627 = vunpack.c.l.b16 %v2367
          %v2628 = vunpack.c.l.b16 %v2368
          %v2629 = vunpack.c.l.b16 %v2369
          %v2630 = vunpack.c.l.b16 %v2370
          %v2631 = vunpack.c.l.b16 %v2371
          %v2632 = vunpack.c.l.b16 %v2372
          %v2633 = vunpack.c.l.b16 %v2373
          %v2634 = vunpack.c.l.b16 %v2374
          %v2635 = vunpack.c.l.b16 %v2375
          %v2636 = vunpack.c.l.b16 %v2376
          %v2637 = vunpack.c.l.b16 %v2377
          %v2638 = vunpack.c.l.b16 %v2378
          %v2639 = vunpack.c.l.b16 %v2379
          %v2640 = vunpack.c.l.b16 %v2380
          %v2641 = vunpack.c.l.b16 %v2381
          %v2642 = vunpack.c.l.b16 %v2382
          %v2643 = vunpack.c.l.b16 %v2383
          %v2644 = vunpack.c.l.b16 %v2384
          %v2645 = vunpack.c.l.b16 %v2385
          %v2646 = vunpack.c.l.b16 %v2386
          %v2647 = vunpack.c.l.b16 %v2387
          %v2648 = vunpack.c.l.b16 %v2388
          %v2649 = vunpack.c.l.b16 %v2389
          %v2650 = vunpack.c.l.b16 %v2390
          %v2651 = vunpack.c.l.b16 %v2391
          %v2652 = vunpack.c.l.b16 %v2392
          %v2653 = vunpack.c.l.b16 %v2393
          %v2654 = vunpack.c.l.b16 %v2394
          %v2655 = vunpack.c.l.b16 %v2395
          %v2656 = vunpack.c.l.b16 %v2396
          %v2657 = vunpack.c.l.b16 %v2397
          %v2658 = vunpack.c.l.b16 %v2398
          %v2659 = vunpack.c.l.b16 %v2399
          %v2660 = vunpack.c.l.b16 %v2400
          %v2661 = vunpack.c.l.b16 %v2401
          %v2662 = vunpack.c.l.b16 %v2402
          %v2663 = vunpack.c.l.b16 %v2403
          %v2664 = vunpack.c.l.b16 %v2404
          %v2665 = vunpack.c.l.b16 %v2405
          %v2666 = vunpack.c.l.b16 %v2406
          %v2667 = vunpack.c.l.b16 %v2407
          %v2668 = vunpack.c.l.b16 %v2408
          %v2669 = vunpack.c.l.b16 %v2409
          %v2670 = vunpack.c.l.b16 %v2410
          %v2671 = vunpack.c.l.b16 %v2411
          %v2672 = vunpack.c.l.b16 %v2412
          %v2673 = vunpack.c.l.b16 %v2413
          %v2674 = vunpack.c.l.b16 %v2414
          %v2675 = vunpack.c.l.b16 %v2415
          %v2676 = vunpack.c.l.b16 %v2416
          %v2677 = vunpack.c.l.b16 %v2417
          %v2678 = vunpack.c.l.b16 %v2418
          %v2679 = vunpack.c.l.b16 %v2419
          %v2680 = vunpack.c.l.b16 %v2420
          %v2681 = vunpack.c.l.b16 %v2421
          %v2682 = vunpack.c.l.b16 %v2422
          %v2683 = vunpack.c.l.b16 %v2423
          %v2684 = vunpack.c.l.b16 %v2424
          %v2685 = vunpack.c.l.b16 %v2425
          %v2686 = vunpack.c.l.b16 %v2426
          %v2687 = vunpack.c.l.b16 %v2427
          %v2688 = vunpack.c.l.b16 %v2428
          %v2689 = vunpack.c.l.b16 %v2429
          %v2690 = vunpack.c.l.b16 %v2430
          %v2691 = vunpack.c.l.b16 %v2431
          %v2692 = vunpack.c.l.b16 %v2432
          %v2693 = vunpack.c.l.b16 %v2433
          %v2694 = vunpack.c.l.b16 %v2434
          %v2695 = vunpack.c.l.b16 %v2435
          %v2696 = vunpack.c.l.b16 %v2436
          %v2697 = vunpack.c.l.b16 %v2437
          %v2698 = vunpack.c.l.b16 %v2438
          %v2699 = vunpack.c.l.b16 %v2439
          %v2700 = vunpack.c.l.b16 %v2440
          %v2701 = vunpack.c.l.b16 %v2441
          %v2702 = vunpack.c.l.b16 %v2442
          %v2703 = vunpack.c.l.b16 %v2443
          %v2704 = vunpack.c.l.b16 %v2444
          %v2705 = vunpack.c.l.b16 %v2445
          %v2706 = vunpack.c.l.b16 %v2446
          %v2707 = vunpack.c.l.b16 %v2447
          %v2708 = vunpack.c.l.b16 %v2448
          %v2709 = vunpack.c.l.b16 %v2449
          %v2710 = vunpack.c.l.b16 %v2450
          %v2711 = vunpack.c.l.b16 %v2451
          %v2712 = vunpack.c.l.b16 %v2452
          %v2713 = vunpack.c.l.b16 %v2453
          %v2714 = vunpack.c.l.b16 %v2454
          %v2715 = vunpack.c.l.b16 %v2455
          %v2716 = vunpack.c.l.b16 %v2456
          %v2717 = vunpack.c.l.b16 %v2457
          %v2718 = vunpack.c.l.b16 %v2458
          %v2719 = vunpack.c.l.b16 %v2459
          %v2720 = vunpack.c.l.b16 %v2460
          %v2721 = vunpack.c.l.b16 %v2461
          %v2722 = vunpack.c.l.b16 %v2462
          %v2723 = vunpack.c.l.b16 %v2463
          %v2724 = vunpack.c.l.b16 %v2464
          %v2725 = vunpack.c.l.b16 %v2465
          %v2726 = vunpack.c.l.b16 %v2466
          %v2727 = vunpack.c.l.b16 %v2467
          %v2728 = vunpack.c.l.b16 %v2468
          %v2729 = vunpack.c.l.b16 %v2469
          %v2730 = vunpack.c.l.b16 %v2470
          %v2731 = vunpack.c.l.b16 %v2471
          %v2732 = vunpack.c.l.b16 %v2472
          %v2733 = vunpack.c.l.b16 %v2473
          %v2734 = vpack.c.b16 %v2607, %v2606
          %v2735 = vpack.c.b16 %v2609, %v2608
          %v2736 = vpack.c.b16 %v2611, %v2610
          %v2737 = vpack.c.b16 %v2613, %v2612
          %v2738 = vpack.c.b16 %v2615, %v2614
          %v2739 = vpack.c.b16 %v2617, %v2616
          %v2740 = vpack.c.b16 %v2619, %v2618
          %v2741 = vpack.c.b16 %v2621, %v2620
          %v2742 = vpack.c.b16 %v2623, %v2622
          %v2743 = vpack.c.b16 %v2625, %v2624
          %v2744 = vpack.c.b16 %v2627, %v2626
          %v2745 = vpack.c.b16 %v2629, %v2628
          %v2746 = vpack.c.b16 %v2631, %v2630
          %v2747 = vpack.c.b16 %v2633, %v2632
          %v2748 = vpack.c.b16 %v2635, %v2634
          %v2749 = vpack.c.b16 %v2637, %v2636
          %v2750 = vpack.c.b16 %v2639, %v2638
          %v2751 = vpack.c.b16 %v2641, %v2640
          %v2752 = vpack.c.b16 %v2643, %v2642
          %v2753 = vpack.c.b16 %v2645, %v2644
          %v2754 = vpack.c.b16 %v2647, %v2646
          %v2755 = vpack.c.b16 %v2649, %v2648
          %v2756 = vpack.c.b16 %v2651, %v2650
          %v2757 = vpack.c.b16 %v2653, %v2652
          %v2758 = vpack.c.b16 %v2655, %v2654
          %v2759 = vpack.c.b16 %v2657, %v2656
          %v2760 = vpack.c.b16 %v2659, %v2658
          %v2761 = vpack.c.b16 %v2661, %v2660
          %v2762 = vpack.c.b16 %v2663, %v2662
          %v2763 = vpack.c.b16 %v2665, %v2664
          %v2764 = vpack.c.b16 %v2667, %v2666
          %v2765 = vpack.c.b16 %v2669, %v2668
          %v2766 = vpack.c.b16 %v2671, %v2670
          %v2767 = vpack.c.b16 %v2673, %v2672
          %v2768 = vpack.c.b16 %v2675, %v2674
          %v2769 = vpack.c.b16 %v2677, %v2676
          %v2770 = vpack.c.b16 %v2679, %v2678
          %v2771 = vpack.c.b16 %v2681, %v2680
          %v2772 = vpack.c.b16 %v2683, %v2682
          %v2773 = vpack.c.b16 %v2685, %v2684
          %v2774 = vpack.c.b16 %v2687, %v2686
          %v2775 = vpack.c.b16 %v2689, %v2688
          %v2776 = vpack.c.b16 %v2691, %v2690
          %v2777 = vpack.c.b16 %v2693, %v2692
          %v2778 = vpack.c.b16 %v2695, %v2694
          %v2779 = vpack.c.b16 %v2697, %v2696
          %v2780 = vpack.c.b16 %v2699, %v2698
          %v2781 = vpack.c.b16 %v2701, %v2700
          %v2782 = vpack.c.b16 %v2703, %v2702
          %v2783 = vpack.c.b16 %v2705, %v2704
          %v2784 = vpack.c.b16 %v2707, %v2706
          %v2785 = vpack.c.b16 %v2709, %v2708
          %v2786 = vpack.c.b16 %v2711, %v2710
          %v2787 = vpack.c.b16 %v2713, %v2712
          %v2788 = vpack.c.b16 %v2715, %v2714
          %v2789 = vpack.c.b16 %v2717, %v2716
          %v2790 = vpack.c.b16 %v2719, %v2718
          %v2791 = vpack.c.b16 %v2721, %v2720
          %v2792 = vpack.c.b16 %v2723, %v2722
          %v2793 = vpack.c.b16 %v2725, %v2724
          %v2794 = vpack.c.b16 %v2727, %v2726
          %v2795 = vpack.c.b16 %v2729, %v2728
          %v2796 = vpack.c.b16 %v2731, %v2730
          %v2797 = vpack.c.b16 %v2733, %v2732
          %2862 = vmatpush.bf16.msra.mxu0 %v2741
          %2863 = vmatpush.bf16.msra.mxu0 %v2740
          %2864 = vmatpush.bf16.msra.mxu0 %v2739
          %2865 = vmatpush.bf16.msra.mxu0 %v2738
          %2866 = vmatpush.bf16.msra.mxu0 %v2737
          %2867 = vmatpush.bf16.msra.mxu0 %v2736
          %2868 = vmatpush.bf16.msra.mxu0 %v2735
          %2869 = vmatpush.bf16.msra.mxu0 %v2734
          %2870 = vmatmul.bf16.gmra.mxu0 %v2338
          %v2871 = vpop.f32.mrf.mxu0
          %v2872 = vadd.f32 %v2476, %v2871
          %v2873 = vpop.f32.mrf.mxu0
          %2874 = vdwg.mxu0
          %2875 = vmatpush.bf16.msra.mxu0 %v2749
          %2876 = vmatpush.bf16.msra.mxu0 %v2748
          %2877 = vmatpush.bf16.msra.mxu0 %v2747
          %2878 = vmatpush.bf16.msra.mxu0 %v2746
          %2879 = vmatpush.bf16.msra.mxu0 %v2745
          %2880 = vmatpush.bf16.msra.mxu0 %v2744
          %2881 = vmatpush.bf16.msra.mxu0 %v2743
          %2882 = vmatpush.bf16.msra.mxu0 %v2742
          %2883 = vmatmul.bf16.gmra.mxu0 %v2339
          %v2884 = vpop.f32.mrf.mxu0
          %v2885 = vadd.f32 %v2872, %v2884
          %v2886 = vpop.f32.mrf.mxu0
          %2887 = vdwg.mxu0
          %2888 = vmatpush.bf16.msra.mxu0 %v2757
          %2889 = vmatpush.bf16.msra.mxu0 %v2756
          %2890 = vmatpush.bf16.msra.mxu0 %v2755
          %2891 = vmatpush.bf16.msra.mxu0 %v2754
          %2892 = vmatpush.bf16.msra.mxu0 %v2753
          %2893 = vmatpush.bf16.msra.mxu0 %v2752
          %2894 = vmatpush.bf16.msra.mxu0 %v2751
          %2895 = vmatpush.bf16.msra.mxu0 %v2750
          %2896 = vmatmul.bf16.gmra.mxu0 %v2340
          %v2897 = vpop.f32.mrf.mxu0
          %v2898 = vadd.f32 %v2885, %v2897
          %v2899 = vpop.f32.mrf.mxu0
          %2900 = vdwg.mxu0
          %2901 = vmatpush.bf16.msra.mxu0 %v2765
          %2902 = vmatpush.bf16.msra.mxu0 %v2764
          %2903 = vmatpush.bf16.msra.mxu0 %v2763
          %2904 = vmatpush.bf16.msra.mxu0 %v2762
          %2905 = vmatpush.bf16.msra.mxu0 %v2761
          %2906 = vmatpush.bf16.msra.mxu0 %v2760
          %2907 = vmatpush.bf16.msra.mxu0 %v2759
          %2908 = vmatpush.bf16.msra.mxu0 %v2758
          %2909 = vmatmul.bf16.gmra.mxu0 %v2341
          %v2910 = vpop.f32.mrf.mxu0
          %v2911 = vadd.f32 %v2898, %v2910
          %v2912 = vpop.f32.mrf.mxu0
          %2913 = vdwg.mxu0
          %2914 = vmatpush.bf16.msra.mxu0 %v2773
          %2915 = vmatpush.bf16.msra.mxu0 %v2772
          %2916 = vmatpush.bf16.msra.mxu0 %v2771
          %2917 = vmatpush.bf16.msra.mxu0 %v2770
          %2918 = vmatpush.bf16.msra.mxu0 %v2769
          %2919 = vmatpush.bf16.msra.mxu0 %v2768
          %2920 = vmatpush.bf16.msra.mxu0 %v2767
          %2921 = vmatpush.bf16.msra.mxu0 %v2766
          %2922 = vmatmul.bf16.gmra.mxu0 %v2342
          %v2923 = vpop.f32.mrf.mxu0
          %v2924 = vadd.f32 %v2911, %v2923
          %v2925 = vpop.f32.mrf.mxu0
          %2926 = vdwg.mxu0
          %2927 = vmatpush.bf16.msra.mxu0 %v2781
          %2928 = vmatpush.bf16.msra.mxu0 %v2780
          %2929 = vmatpush.bf16.msra.mxu0 %v2779
          %2930 = vmatpush.bf16.msra.mxu0 %v2778
          %2931 = vmatpush.bf16.msra.mxu0 %v2777
          %2932 = vmatpush.bf16.msra.mxu0 %v2776
          %2933 = vmatpush.bf16.msra.mxu0 %v2775
          %2934 = vmatpush.bf16.msra.mxu0 %v2774
          %2935 = vmatmul.bf16.gmra.mxu0 %v2343
          %v2936 = vpop.f32.mrf.mxu0
          %v2937 = vadd.f32 %v2924, %v2936
          %v2938 = vpop.f32.mrf.mxu0
          %2939 = vdwg.mxu0
          %2940 = vmatpush.bf16.msra.mxu0 %v2789
          %2941 = vmatpush.bf16.msra.mxu0 %v2788
          %2942 = vmatpush.bf16.msra.mxu0 %v2787
          %2943 = vmatpush.bf16.msra.mxu0 %v2786
          %2944 = vmatpush.bf16.msra.mxu0 %v2785
          %2945 = vmatpush.bf16.msra.mxu0 %v2784
          %2946 = vmatpush.bf16.msra.mxu0 %v2783
          %2947 = vmatpush.bf16.msra.mxu0 %v2782
          %2948 = vmatmul.bf16.gmra.mxu0 %v2344
          %v2949 = vpop.f32.mrf.mxu0
          %v2950 = vadd.f32 %v2937, %v2949
          %v2951 = vpop.f32.mrf.mxu0
          %2952 = vdwg.mxu0
          %2953 = vmatpush.bf16.msra.mxu0 %v2797
          %2954 = vmatpush.bf16.msra.mxu0 %v2796
          %2955 = vmatpush.bf16.msra.mxu0 %v2795
          %2956 = vmatpush.bf16.msra.mxu0 %v2794
          %2957 = vmatpush.bf16.msra.mxu0 %v2793
          %2958 = vmatpush.bf16.msra.mxu0 %v2792
          %2959 = vmatpush.bf16.msra.mxu0 %v2791
          %2960 = vmatpush.bf16.msra.mxu0 %v2790
          %2961 = vmatmul.bf16.gmra.mxu0 %v2345
          %v2962 = vpop.f32.mrf.mxu0
          %v2963 = vadd.f32 %v2950, %v2962
          %v2964 = vpop.f32.mrf.mxu0
          %2965 = vdwg.mxu0
          %2966 = vst [vmem:[#allocation9] sm:$0x3] %v2963
        $region102: #{tpu_custom_call.1} parent=81 // pred_fallthru
          _
        // Predicated region
        $region103: #{tpu_custom_call.1} parent=81 // pred_check
          %p2967 = pneg %p205
        $region104: #{tpu_custom_call.1} parent=81 // pred_check_branch
          %2969 = sbr.rel (%p2967) target = $region106
        $region105: #{tpu_custom_call.1} parent=81 // pred_region
          %2971 = vsyncadd [#allocation6], 0
          %s2972 = smul.addr %s25, 2
          %s2973 = scalar_lea.hbm %s7, %s2972
          %s2975 = sshll.u32 [#allocation9], 4
          %s2976 = int_to_ptr.vmem [resolvable:$true] %s2975
          %s2977 = sshll.u32 %s2973, 4
          %s2978 = int_to_ptr.hbm [resolvable:$true] %s2977
          %2980 = dma.vmem_to_hbm [thread:$0]  %s2976, 32, %s2978, [#allocation6]
        $region106: #{tpu_custom_call.1} parent=81 // pred_fallthru
          _
        // Predicated region
        $region107: #{tpu_custom_call.1} parent=81 // pred_check
          %p2981 = pneg %p205
        $region108: #{tpu_custom_call.1} parent=81 // pred_check_branch
          %2983 = sbr.rel (%p2981) target = $region110
        $region109: #{tpu_custom_call.1} parent=81 // pred_region
          %2985 = dma.done [#allocation6], 32
        $region110: #{tpu_custom_call.1} parent=81 // pred_fallthru
          _
      $region82: #{tpu_custom_call.1} parent=5 // pred_fallthru
        _
      %p2986 = scmp.le.s32.totalorder 2, %s16
      // Predicated region
      $region111: #{tpu_custom_call.1} parent=5 // pred_check
        %p2987 = pneg %p2986
      $region112: #{tpu_custom_call.1} parent=5 // pred_check_branch
        %2989 = sbr.rel (%p2987) target = $region114
      $region113: #{tpu_custom_call.1} parent=5 // pred_region
        %s2990 = ssub.s32 %s16, 2
      $region114: #{tpu_custom_call.1} parent=5 // pred_fallthru
        _
    $region6: #{tpu_custom_call.1} parent=1 // loop_footer
      %s20 = sadd.s32 1, %s16
    $region7: #{tpu_custom_call.1} parent=1 // loop_footer_branch
      %15 = sbr.rel target = $region3
    $region8: #{tpu_custom_call.1} parent=1 // loop_exit
      _
    %2991 = vsyncpa [#allocation5], 1
    %s2992 = scalar_lea.sflag [#allocation5], 1
    %2993 = vsyncpa %s2992, 1
    %2994 = vsyncpa [#allocation8], 1
    %2995 = vsyncpa [#allocation6], 1
    %s2996 = scalar_lea.sflag [#allocation6], 1
    %2997 = vsyncpa %s2996, 1

// kernel: tpu_custom_call.1
$region0: #{tpu_custom_call.1}
  #allocation0 [shape = 'u32[]', space=smem, size = 0x4, offset = 0x4, fixed_abs, tag = 'smem constant byte address 0x4 - core index']
  #allocation1 [shape = 'u32[72,128]{1,0:T(1,128)}', space=vmem, size = 0x9000, scoped, tag = 'internal scratch']
  #allocation2 [shape = 'f32[2,32]{1,0:T(2,128)}', space=vmem, size = 0x400, scoped, tag = 'scratch operand']
  %s0 = inlined_call_operand.vmem [shape: bf16[2,3,1024], index: 0, kind: input, shape index: {}]
  %s1 = inlined_call_operand.vmem [shape: bf16[3,32,1], index: 1, kind: input, shape index: {}]
  %s2 = inlined_call_operand.vmem [shape: bf16[1,32,1], index: 2, kind: input, shape index: {}]
  %s3 = inlined_call_operand.hbm [shape: bf16[32,1024], index: 3, kind: input, shape index: {}]
  %s4 = inlined_call_operand.vmem [shape: f32[1,1024], index: 4, kind: input, shape index: {}]
  %s5 = inlined_call_operand.hbm [shape: bf16[1024,128], index: 5, kind: input, shape index: {}]
  %s6 = inlined_call_operand.vmem [shape: f32[1,128], index: 6, kind: input, shape index: {}]
  %s7 = inlined_call_operand.hbm [shape: f32[2,128], index: 7, kind: output, shape index: {}]
  %s8 = sld [smem:[#allocation0]]
  $region115: #{tpu_custom_call.1} parent=0
    _
  %s10 = ssub.s32 1, %s8
  %s11 = scalar_select 0, %s10, %s8
  $region1: #{tpu_custom_call.1} parent=0
    #allocation3 [shape = 'u8[16384]{0}', space=vmem, size = 0x4000, scoped, tag = 'input window, operand 0']
    #allocation4 [shape = 'u8[65536]{0}', space=vmem, size = 0x10000, scoped, tag = 'input window, operand 3, single buffered']
    #allocation5 [shape = 's32[2]{0}', space=sflag, size = 0x8, scoped, tag = 'scoped memory for tpu_custom_call.1']
    #allocation6 [shape = 's32[2]{0}', space=sflag, size = 0x8, scoped, tag = 'scoped memory for tpu_custom_call.1']
    #allocation7 [shape = 'u8[262144]{0}', space=vmem, size = 0x40000, scoped, tag = 'input window, operand 5, single buffered']
    #allocation8 [shape = 's32[1]{0}', space=sflag, size = 0x4, scoped, tag = 'scoped memory for tpu_custom_call.1']
    #allocation9 [shape = 'u8[1024]{0}', space=vmem, size = 0x400, scoped, tag = 'output window, operand 0, single buffered']
    %12 = vsyncpa [#allocation5], 0
    %13 = vsyncpa [#allocation8], 0
    %14 = vsyncpa [#allocation6], 0
    loop: start=0, step=1, limit=4
    $region2: #{tpu_custom_call.1} parent=1 // loop_pre_header
      _
    $region3: #{tpu_custom_call.1} parent=1 // loop_header
      %s16 = sphi 0, %s20
      %p17 = scmp.ge.s32.totalorder %s16, 4
      %s23 = sphi 0, %s35
      %s24 = sphi 0, %s31
      %s25 = sphi 0, %s23
      %s26 = sphi 0, %s24
      %s27 = sphi 0, %s25
      %s28 = sphi 0, %s26
      %s40 = sphi 0, %s42
      %s43 = sphi 0, %s40
      %s44 = sphi 0, %s43
      %s60 = sphi 0, %s44
      %s64 = sphi 0, %s64
      %s66 = sphi 0, %s64
      %s67 = sphi 0, %s66
      %s81 = sphi 0, %s67
      %s85 = sphi 0, %s85
      %s87 = sphi 0, %s85
      %s88 = sphi 0, %s87
      %s102 = sphi 0, %s88
      %s106 = sphi 0, %s106
      %s108 = sphi 0, %s106
      %s109 = sphi 0, %s108
      %s123 = sphi 0, %s109
      %s127 = sphi 0, %s127
      %s129 = sphi 0, %s127
      %s130 = sphi 0, %s129
      %s144 = sphi 0, %s130
      %s148 = sphi 0, %s148
      %s150 = sphi 0, %s148
      %s151 = sphi 0, %s150
      %s165 = sphi 0, %s151
      %s169 = sphi 0, %s169
      %s171 = sphi 0, %s169
      %s172 = sphi 0, %s171
      %s186 = sphi 0, %s172
      %s192 = sphi 0, %s194
      %s195 = sphi 0, %s192
      %s196 = sphi 0, %s195
      %s212 = sphi 0, %s196
    $region4: #{tpu_custom_call.1} parent=1 // loop_header_branch
      %19 = sbr.rel (%p17) target = $region8
    $region5: #{tpu_custom_call.1} parent=1 // loop_body
      %s21 = ssub.s32 %s16, 1
      %s22 = ssub.s32 %s16, 2
      %s29 = sadd.s32 1, %s24
      %p30 = scmp.ge.s32.totalorder %s29, 2
      %s31 = scalar_select %p30, 0, %s29
      %s32 = sadd.s32 1, %s23
      %s33 = scalar_select %p30, %s32, %s23
      %p34 = scmp.ge.s32.totalorder %s33, 1
      %s35 = scalar_select %p34, 0, %s33
      %s36 = ssub.s32 %s23, %s35
      %s37 = ssub.s32 %s24, %s31
      %s38 = sor.u32 %s36, %s37
      %p39 = scmp.eq.s32.totalorder %s38, 0
      %s41 = sadd.s32 %s40, 1
      %s42 = scalar_select %p39, %s40, %s41
      %p45 = pneg %p39
      %p46 = scmp.eq.s32.totalorder %s16, 1
      %p47 = por %p45, %p46
      %p48 = scmp.ne.s32.totalorder %s40, %s43
      %p49 = scmp.eq.s32.totalorder %s16, 0
      %p50 = por %p48, %p49
      %p51 = scmp.ne.s32.totalorder %s40, %s43
      %p52 = scmp.eq.s32.totalorder %s21, 1
      %p53 = por %p51, %p52
      %p54 = scmp.ne.s32.totalorder %s43, %s44
      %p55 = scmp.eq.s32.totalorder %s21, 0
      %p56 = por %p54, %p55
      %p57 = scmp.ne.s32.totalorder %s43, %s44
      %p58 = scmp.eq.s32.totalorder %s22, 1
      %p59 = por %p57, %p58
      %p61 = scmp.ne.s32.totalorder %s44, %s60
      %p62 = scmp.eq.s32.totalorder %s22, 0
      %p63 = por %p61, %p62
      %s65 = sadd.s32 %s64, 1
      %p68 = scmp.eq.s32.totalorder %s16, 1
      %p69 = scmp.ne.s32.totalorder %s64, %s66
      %p70 = scmp.eq.s32.totalorder %s16, 0
      %p71 = por %p69, %p70
      %p72 = scmp.ne.s32.totalorder %s64, %s66
      %p73 = scmp.eq.s32.totalorder %s21, 1
      %p74 = por %p72, %p73
      %p75 = scmp.ne.s32.totalorder %s66, %s67
      %p76 = scmp.eq.s32.totalorder %s21, 0
      %p77 = por %p75, %p76
      %p78 = scmp.ne.s32.totalorder %s66, %s67
      %p79 = scmp.eq.s32.totalorder %s22, 1
      %p80 = por %p78, %p79
      %p82 = scmp.ne.s32.totalorder %s67, %s81
      %p83 = scmp.eq.s32.totalorder %s22, 0
      %p84 = por %p82, %p83
      %s86 = sadd.s32 %s85, 1
      %p89 = scmp.eq.s32.totalorder %s16, 1
      %p90 = scmp.ne.s32.totalorder %s85, %s87
      %p91 = scmp.eq.s32.totalorder %s16, 0
      %p92 = por %p90, %p91
      %p93 = scmp.ne.s32.totalorder %s85, %s87
      %p94 = scmp.eq.s32.totalorder %s21, 1
      %p95 = por %p93, %p94
      %p96 = scmp.ne.s32.totalorder %s87, %s88
      %p97 = scmp.eq.s32.totalorder %s21, 0
      %p98 = por %p96, %p97
      %p99 = scmp.ne.s32.totalorder %s87, %s88
      %p100 = scmp.eq.s32.totalorder %s22, 1
      %p101 = por %p99, %p100
      %p103 = scmp.ne.s32.totalorder %s88, %s102
      %p104 = scmp.eq.s32.totalorder %s22, 0
      %p105 = por %p103, %p104
      %s107 = sadd.s32 %s106, 1
      %p110 = scmp.eq.s32.totalorder %s16, 1
      %p111 = scmp.ne.s32.totalorder %s106, %s108
      %p112 = scmp.eq.s32.totalorder %s16, 0
      %p113 = por %p111, %p112
      %p114 = scmp.ne.s32.totalorder %s106, %s108
      %p115 = scmp.eq.s32.totalorder %s21, 1
      %p116 = por %p114, %p115
      %p117 = scmp.ne.s32.totalorder %s108, %s109
      %p118 = scmp.eq.s32.totalorder %s21, 0
      %p119 = por %p117, %p118
      %p120 = scmp.ne.s32.totalorder %s108, %s109
      %p121 = scmp.eq.s32.totalorder %s22, 1
      %p122 = por %p120, %p121
      %p124 = scmp.ne.s32.totalorder %s109, %s123
      %p125 = scmp.eq.s32.totalorder %s22, 0
      %p126 = por %p124, %p125
      %s128 = sadd.s32 %s127, 1
      %p131 = scmp.eq.s32.totalorder %s16, 1
      %p132 = scmp.ne.s32.totalorder %s127, %s129
      %p133 = scmp.eq.s32.totalorder %s16, 0
      %p134 = por %p132, %p133
      %p135 = scmp.ne.s32.totalorder %s127, %s129
      %p136 = scmp.eq.s32.totalorder %s21, 1
      %p137 = por %p135, %p136
      %p138 = scmp.ne.s32.totalorder %s129, %s130
      %p139 = scmp.eq.s32.totalorder %s21, 0
      %p140 = por %p138, %p139
      %p141 = scmp.ne.s32.totalorder %s129, %s130
      %p142 = scmp.eq.s32.totalorder %s22, 1
      %p143 = por %p141, %p142
      %p145 = scmp.ne.s32.totalorder %s130, %s144
      %p146 = scmp.eq.s32.totalorder %s22, 0
      %p147 = por %p145, %p146
      %s149 = sadd.s32 %s148, 1
      %p152 = scmp.eq.s32.totalorder %s16, 1
      %p153 = scmp.ne.s32.totalorder %s148, %s150
      %p154 = scmp.eq.s32.totalorder %s16, 0
      %p155 = por %p153, %p154
      %p156 = scmp.ne.s32.totalorder %s148, %s150
      %p157 = scmp.eq.s32.totalorder %s21, 1
      %p158 = por %p156, %p157
      %p159 = scmp.ne.s32.totalorder %s150, %s151
      %p160 = scmp.eq.s32.totalorder %s21, 0
      %p161 = por %p159, %p160
      %p162 = scmp.ne.s32.totalorder %s150, %s151
      %p163 = scmp.eq.s32.totalorder %s22, 1
      %p164 = por %p162, %p163
      %p166 = scmp.ne.s32.totalorder %s151, %s165
      %p167 = scmp.eq.s32.totalorder %s22, 0
      %p168 = por %p166, %p167
      %s170 = sadd.s32 %s169, 1
      %p173 = scmp.eq.s32.totalorder %s16, 1
      %p174 = scmp.ne.s32.totalorder %s169, %s171
      %p175 = scmp.eq.s32.totalorder %s16, 0
      %p176 = por %p174, %p175
      %p177 = scmp.ne.s32.totalorder %s169, %s171
      %p178 = scmp.eq.s32.totalorder %s21, 1
      %p179 = por %p177, %p178
      %p180 = scmp.ne.s32.totalorder %s171, %s172
      %p181 = scmp.eq.s32.totalorder %s21, 0
      %p182 = por %p180, %p181
      %p183 = scmp.ne.s32.totalorder %s171, %s172
      %p184 = scmp.eq.s32.totalorder %s22, 1
      %p185 = por %p183, %p184
      %p187 = scmp.ne.s32.totalorder %s172, %s186
      %p188 = scmp.eq.s32.totalorder %s22, 0
      %p189 = por %p187, %p188
      %s190 = ssub.s32 %s23, %s35
      %p191 = scmp.eq.s32.totalorder %s190, 0
      %s193 = sadd.s32 %s192, 1
      %s194 = scalar_select %p191, %s192, %s193
      %p197 = pneg %p191
      %p198 = scmp.eq.s32.totalorder %s16, 1
      %p199 = por %p197, %p198
      %p200 = scmp.ne.s32.totalorder %s192, %s195
      %p201 = scmp.eq.s32.totalorder %s16, 0
      %p202 = por %p200, %p201
      %p203 = scmp.ne.s32.totalorder %s192, %s195
      %p204 = scmp.eq.s32.totalorder %s21, 1
      %p205 = por %p203, %p204
      %p206 = scmp.ne.s32.totalorder %s195, %s196
      %p207 = scmp.eq.s32.totalorder %s21, 0
      %p208 = por %p206, %p207
      %p209 = scmp.ne.s32.totalorder %s195, %s196
      %p210 = scmp.eq.s32.totalorder %s22, 1
      %p211 = por %p209, %p210
      %p213 = scmp.ne.s32.totalorder %s196, %s212
      %p214 = scmp.eq.s32.totalorder %s22, 0
      %p215 = por %p213, %p214
      %p216 = scmp.le.s32.totalorder 1, %s16
      %p217 = scmp.lt.s32.totalorder %s16, 3
      %p218 = pnand %p216, %p217
      %p219 = pneg %p218
      // Predicated region
      $region9: #{tpu_custom_call.1} parent=5 // pred_check
        _
      $region10: #{tpu_custom_call.1} parent=5 // pred_check_branch
        %221 = sbr.rel (%p218) target = $region12
      $region11: #{tpu_custom_call.1} parent=5 // pred_region
        %s222 = ssub.s32 %s16, 1
        // Predicated region
        $region13: #{tpu_custom_call.1} parent=11 // pred_check
          %p223 = pneg %p77
        $region14: #{tpu_custom_call.1} parent=11 // pred_check_branch
          %225 = sbr.rel (%p223) target = $region16
        $region15: #{tpu_custom_call.1} parent=11 // pred_region
          _
        $region16: #{tpu_custom_call.1} parent=11 // pred_fallthru
          _
        // Predicated region
        $region17: #{tpu_custom_call.1} parent=11 // pred_check
          %p226 = pneg %p98
        $region18: #{tpu_custom_call.1} parent=11 // pred_check_branch
          %228 = sbr.rel (%p226) target = $region20
        $region19: #{tpu_custom_call.1} parent=11 // pred_region
          _
        $region20: #{tpu_custom_call.1} parent=11 // pred_fallthru
          _
        // Predicated region
        $region21: #{tpu_custom_call.1} parent=11 // pred_check
          %p229 = pneg %p119
        $region22: #{tpu_custom_call.1} parent=11 // pred_check_branch
          %231 = sbr.rel (%p229) target = $region24
        $region23: #{tpu_custom_call.1} parent=11 // pred_region
          %233 = vsyncadd [#allocation5], 0
          %s234 = sshll.u32 %s3, 4
          %s235 = int_to_ptr.hbm [resolvable:$true] %s234
          %s236 = sshll.u32 [#allocation4], 4
          %s237 = int_to_ptr.vmem [resolvable:$true] %s236
          %242 = dma.hbm_to_vmem [thread:$0]  %s235, 2048, %s237, [#allocation5], 512, 512, 32
        $region24: #{tpu_custom_call.1} parent=11 // pred_fallthru
          _
        // Predicated region
        $region25: #{tpu_custom_call.1} parent=11 // pred_check
          %p243 = pneg %p140
        $region26: #{tpu_custom_call.1} parent=11 // pred_check_branch
          %245 = sbr.rel (%p243) target = $region28
        $region27: #{tpu_custom_call.1} parent=11 // pred_region
          _
        $region28: #{tpu_custom_call.1} parent=11 // pred_fallthru
          _
        // Predicated region
        $region29: #{tpu_custom_call.1} parent=11 // pred_check
          %p246 = pneg %p161
        $region30: #{tpu_custom_call.1} parent=11 // pred_check_branch
          %248 = sbr.rel (%p246) target = $region32
        $region31: #{tpu_custom_call.1} parent=11 // pred_region
          %250 = vsyncadd [#allocation8], 0
          %s251 = sshll.u32 %s5, 4
          %s252 = int_to_ptr.hbm [resolvable:$true] %s251
          %s253 = sshll.u32 [#allocation7], 4
          %s254 = int_to_ptr.vmem [resolvable:$true] %s253
          %259 = dma.hbm_to_vmem [thread:$0]  %s252, 8192, %s254, [#allocation8], 64, 64, 4
        $region32: #{tpu_custom_call.1} parent=11 // pred_fallthru
          _
        // Predicated region
        $region33: #{tpu_custom_call.1} parent=11 // pred_check
          %p260 = pneg %p182
        $region34: #{tpu_custom_call.1} parent=11 // pred_check_branch
          %262 = sbr.rel (%p260) target = $region36
        $region35: #{tpu_custom_call.1} parent=11 // pred_region
          _
        $region36: #{tpu_custom_call.1} parent=11 // pred_fallthru
          _
      $region12: #{tpu_custom_call.1} parent=5 // pred_fallthru
        _
      %p263 = scmp.lt.s32.totalorder %s16, 2
      // Predicated region
      $region37: #{tpu_custom_call.1} parent=5 // pred_check
        %p264 = pneg %p263
      $region38: #{tpu_custom_call.1} parent=5 // pred_check_branch
        %266 = sbr.rel (%p264) target = $region40
      $region39: #{tpu_custom_call.1} parent=5 // pred_region
        // Predicated region
        $region41: #{tpu_custom_call.1} parent=39 // pred_check
          %p267 = pneg %p50
        $region42: #{tpu_custom_call.1} parent=39 // pred_check_branch
          %269 = sbr.rel (%p267) target = $region44
        $region43: #{tpu_custom_call.1} parent=39 // pred_region
          %s270 = sand.u32 %s40, 1
          %s271 = sand.u32 %s40, 1
          %s272 = smul.addr %s271, 16
          %s273 = scalar_lea.vmem [#allocation3], %s272
          %s274 = smul.u32 2, %s23
          %s275 = smul.u32 4, %s24
          %s276 = smul.addr %s274, 8
          %s277 = sadd.s32 %s275, %s276
          %s278 = smul.addr %s277, 2
          %s279 = scalar_lea.vmem %s0, %s278
          // Predicated region
          $region45: #{tpu_custom_call.1} parent=43 // pred_check
            _
          $region46: #{tpu_custom_call.1} parent=43 // pred_check_branch
            %281 = sbr.rel (0) target = $region48
          $region47: #{tpu_custom_call.1} parent=43 // pred_region
            // Predicated region
            $region49: #{tpu_custom_call.1} parent=47 // pred_check
              _
            $region50: #{tpu_custom_call.1} parent=47 // pred_check_branch
              %283 = sbr.rel (0) target = $region52
            $region51: #{tpu_custom_call.1} parent=47 // pred_region
              // Predicated region
              $region64: #{tpu_custom_call.1} parent=51 // pred_check
                _
              $region65: #{tpu_custom_call.1} parent=51 // pred_check_branch
                %301 = sbr.rel (0) target = $region67
              $region66: #{tpu_custom_call.1} parent=51 // pred_region
                loop: start=0, step=1, limit=1
                $region68: #{tpu_custom_call.1} parent=66 // loop_pre_header
                  _
                $region69: #{tpu_custom_call.1} parent=66 // loop_header
                  %s303 = sphi 0, %s307
                  %p304 = scmp.ge.s32.totalorder %s303, 1
                  %s308 = sphi %s279, %s279
                  %s309 = sphi %s273, %s273
                $region70: #{tpu_custom_call.1} parent=66 // loop_header_branch
                  %306 = sbr.rel (%p304) target = $region74
                $region71: #{tpu_custom_call.1} parent=66 // loop_body
                  %v310 = vld [vmem:[%s308] sm:$0xff]
                  %311 = vst [vmem:[%s309] sm:$0xff] %v310
                  %v312 = vld [vmem:[%s308 + $0x10] sm:$0xff]
                  %313 = vst [vmem:[%s309 + $0x8] sm:$0xff] %v312
                $region72: #{tpu_custom_call.1} parent=66 // loop_footer
                  %s307 = sadd.s32 1, %s303
                $region73: #{tpu_custom_call.1} parent=66 // loop_footer_branch
                  %302 = sbr.rel target = $region69
                $region74: #{tpu_custom_call.1} parent=66 // loop_exit
                  _
              $region67: #{tpu_custom_call.1} parent=51 // pred_fallthru
                _
              // Predicated region
              $region75: #{tpu_custom_call.1} parent=51 // pred_check
                _
              $region76: #{tpu_custom_call.1} parent=51 // pred_check_branch
                %315 = sbr.rel target = $region78
              $region77: #{tpu_custom_call.1} parent=51 // pred_region
                _
              $region78: #{tpu_custom_call.1} parent=51 // pred_fallthru
                _
            $region52: #{tpu_custom_call.1} parent=47 // pred_fallthru
              _
            // Predicated region
            $region53: #{tpu_custom_call.1} parent=47 // pred_check
              _
            $region54: #{tpu_custom_call.1} parent=47 // pred_check_branch
              %285 = sbr.rel target = $region56
            $region55: #{tpu_custom_call.1} parent=47 // pred_region
              %s287 = ssub.s32 256, 1
              loop: start=0, step=1, limit=1
              $region57: #{tpu_custom_call.1} parent=55 // loop_pre_header
                _
              $region58: #{tpu_custom_call.1} parent=55 // loop_header
                %s289 = sphi 0, %s293
                %p290 = scmp.ge.s32.totalorder %s289, 1
                %s294 = sphi %s279, %s279
                %s295 = sphi %s273, %s273
              $region59: #{tpu_custom_call.1} parent=55 // loop_header_branch
                %292 = sbr.rel (%p290) target = $region63
              $region60: #{tpu_custom_call.1} parent=55 // loop_body
                %v296 = vld [vmem:[%s294] sm:%s287]
                %297 = vst [vmem:[%s295] sm:%s287] %v296
                %v298 = vld [vmem:[%s294 + $0x10] sm:%s287]
                %299 = vst [vmem:[%s295 + $0x8] sm:%s287] %v298
              $region61: #{tpu_custom_call.1} parent=55 // loop_footer
                %s293 = sadd.s32 1, %s289
              $region62: #{tpu_custom_call.1} parent=55 // loop_footer_branch
                %288 = sbr.rel target = $region58
              $region63: #{tpu_custom_call.1} parent=55 // loop_exit
                _
            $region56: #{tpu_custom_call.1} parent=47 // pred_fallthru
              _
          $region48: #{tpu_custom_call.1} parent=43 // pred_fallthru
            _
          %316 = vnop
        $region44: #{tpu_custom_call.1} parent=39 // pred_fallthru
          _
      $region40: #{tpu_custom_call.1} parent=5 // pred_fallthru
        _
      %p317 = scmp.le.s32.totalorder 1, %s16
      %p318 = scmp.lt.s32.totalorder %s16, 3
      %p319 = pnand %p317, %p318
      %p320 = pneg %p319
      // Predicated region
      $region79: #{tpu_custom_call.1} parent=5 // pred_check
        _
      $region80: #{tpu_custom_call.1} parent=5 // pred_check_branch
        %322 = sbr.rel (%p319) target = $region82
      $region81: #{tpu_custom_call.1} parent=5 // pred_region
        %s323 = ssub.s32 %s16, 1
        %s324 = sand.u32 %s43, 1
        %s325 = sand.u32 %s43, 1
        %s326 = smul.addr %s325, 16
        %s327 = scalar_lea.vmem [#allocation3], %s326
        // Predicated region
        $region83: #{tpu_custom_call.1} parent=81 // pred_check
          %p328 = pneg %p56
        $region84: #{tpu_custom_call.1} parent=81 // pred_check_branch
          %330 = sbr.rel (%p328) target = $region86
        $region85: #{tpu_custom_call.1} parent=81 // pred_region
          _
        $region86: #{tpu_custom_call.1} parent=81 // pred_fallthru
          _
        // Predicated region
        $region87: #{tpu_custom_call.1} parent=81 // pred_check
          %p331 = pneg %p119
        $region88: #{tpu_custom_call.1} parent=81 // pred_check_branch
          %333 = sbr.rel (%p331) target = $region90
        $region89: #{tpu_custom_call.1} parent=81 // pred_region
          %335 = dma.done [#allocation5], 2048
        $region90: #{tpu_custom_call.1} parent=81 // pred_fallthru
          _
        // Predicated region
        $region91: #{tpu_custom_call.1} parent=81 // pred_check
          %p336 = pneg %p161
        $region92: #{tpu_custom_call.1} parent=81 // pred_check_branch
          %338 = sbr.rel (%p336) target = $region94
        $region93: #{tpu_custom_call.1} parent=81 // pred_region
          %340 = dma.done [#allocation8], 8192
        $region94: #{tpu_custom_call.1} parent=81 // pred_fallthru
          _
        %s341 = sand.u32 %s43, 1
        %s342 = sand.u32 %s43, 1
        %s343 = smul.addr %s342, 16
        %s344 = scalar_lea.vmem [#allocation3], %s343
        %p345 = pneg %p56
        %p346 = pneg %p53
        %p347 = pneg %p77
        %p348 = pneg %p74
        %p349 = pneg %p98
        %p350 = pneg %p95
        %p351 = pneg %p119
        %p352 = pneg %p116
        %p353 = pneg %p140
        %p354 = pneg %p137
        %p355 = pneg %p161
        %p356 = pneg %p158
        %p357 = pneg %p182
        %p358 = pneg %p179
        %p359 = pneg %p208
        %p360 = pneg %p205
        %s361 = smul.u32 2, %s25
        %s362 = smul.u32 4, %s26
        %p365 = scmp.eq.s32.totalorder %s26, 0
        // Predicated region
        $region95: #{tpu_custom_call.1} parent=81 // pred_check
          %p366 = pneg %p365
        $region96: #{tpu_custom_call.1} parent=81 // pred_check_branch
          %368 = sbr.rel (%p366) target = $region98
        $region97: #{tpu_custom_call.1} parent=81 // pred_region
          %vm369 = vcmask 254976
          %370 = vst.msk [vmem:[#allocation2] sm:$0x3] %vm369, 0.0
        $region98: #{tpu_custom_call.1} parent=81 // pred_fallthru
          _
        %v371 = vld [vmem:[%s1] sm:$0xf]
        %v372 = vld [vmem:[%s1 + $0x4] sm:$0xf]
        %v373 = vld [vmem:[%s1 + $0x8] sm:$0xf]
        %v374 = vld [vmem:[%s1 + $0xc] sm:$0xf]
        %v375 = vld [vmem:[%s1 + $0x10] sm:$0xf]
        %v376 = vld [vmem:[%s1 + $0x14] sm:$0xf]
        %v377 = vld [vmem:[%s1 + $0x18] sm:$0xf]
        %v378 = vld [vmem:[%s1 + $0x1c] sm:$0xf]
        %v379 = vld [vmem:[%s1 + $0x20] sm:$0xf]
        %v380 = vld [vmem:[%s1 + $0x24] sm:$0xf]
        %v381 = vld [vmem:[%s1 + $0x28] sm:$0xf]
        %v382 = vld [vmem:[%s1 + $0x2c] sm:$0xf]
        %v383 = vld [vmem:[%s2] sm:$0xf]
        %v384 = vld [vmem:[%s2 + $0x4] sm:$0xf]
        %v385 = vld [vmem:[%s2 + $0x8] sm:$0xf]
        %v386 = vld [vmem:[%s2 + $0xc] sm:$0xf]
        %v387 = vld [vmem:[%s327] sm:$0xf]
        %v388 = vld [vmem:[%s327 + $0x8] sm:$0xf]
        %390 = vst [vmem:[#allocation1] ss:$4 sm:$0xff] %v387
        %v391 = vld.sshfl [vmem:[#allocation1] sm:$0xff pattern:$0x73625140]
        %v392 = vld.sshfl [vmem:[#allocation1 + $0x8] sm:$0xff pattern:$0x73625140]
        %s394 = scalar_lea.vmem [#allocation1], 32
        %395 = vst [vmem:[%s394] ss:$4 sm:$0xff] %v388
        %v396 = vld.sshfl [vmem:[#allocation1 + $0x20] sm:$0xff pattern:$0x73625140]
        %v397 = vld.sshfl [vmem:[#allocation1 + $0x28] sm:$0xff pattern:$0x73625140]
        %v398 = vpack.i.b16 %v391, %v391
        %v400 = vperm.slane %v398, 0
        %v401 = vpack.i.b16 %v392, %v392
        %v403 = vperm.slane %v401, 0
        %v404 = vpack.i.b16 %v396, %v396
        %v406 = vperm.slane %v404, 0
        %v407 = vpack.i.b16 %v397, %v397
        %v409 = vperm.slane %v407, 0
        %411 = vset.pattern.permute.xlu0 0
        %412 = vperm.xlu0 %411, %v371
        %v413 = vpop.permute.xlu0 %412
        %v416 = vunpack.c.l.s4 839922192
        %v417 = vunpack.c.0.s8 %v416
        %v418 = vperm.slane %v413, %v417
        %420 = vset.pattern.permute.xlu0 0
        %421 = vperm.xlu0 %420, %v372
        %v422 = vpop.permute.xlu0 %421
        %v425 = vunpack.c.l.s4 839922192
        %v426 = vunpack.c.0.s8 %v425
        %v427 = vperm.slane %v422, %v426
        %429 = vset.pattern.permute.xlu0 0
        %430 = vperm.xlu0 %429, %v373
        %v431 = vpop.permute.xlu0 %430
        %v434 = vunpack.c.l.s4 839922192
        %v435 = vunpack.c.0.s8 %v434
        %v436 = vperm.slane %v431, %v435
        %438 = vset.pattern.permute.xlu0 0
        %439 = vperm.xlu0 %438, %v374
        %v440 = vpop.permute.xlu0 %439
        %v443 = vunpack.c.l.s4 839922192
        %v444 = vunpack.c.0.s8 %v443
        %v445 = vperm.slane %v440, %v444
        %v446 = vunpack.c.l.bf16 %v400
        %v447 = vunpack.c.l.bf16 %v403
        %v448 = vunpack.c.l.bf16 %v406
        %v449 = vunpack.c.l.bf16 %v409
        %v450 = vunpack.c.l.bf16 %v418
        %v451 = vunpack.c.l.bf16 %v427
        %v452 = vunpack.c.l.bf16 %v436
        %v453 = vunpack.c.l.bf16 %v445
        %v454 = vmul.f32 %v446, %v450
        %v455 = vmul.f32 %v447, %v450
        %v456 = vmul.f32 %v446, %v451
        %v457 = vmul.f32 %v447, %v451
        %v458 = vmul.f32 %v446, %v452
        %v459 = vmul.f32 %v447, %v452
        %v460 = vmul.f32 %v446, %v453
        %v461 = vmul.f32 %v447, %v453
        %v462 = vmul.f32 %v448, %v450
        %v463 = vmul.f32 %v449, %v450
        %v464 = vmul.f32 %v448, %v451
        %v465 = vmul.f32 %v449, %v451
        %v466 = vmul.f32 %v448, %v452
        %v467 = vmul.f32 %v449, %v452
        %v468 = vmul.f32 %v448, %v453
        %v469 = vmul.f32 %v449, %v453
        %v470 = vpack.c.bf16 %v455, %v454
        %v471 = vpack.c.bf16 %v457, %v456
        %v472 = vpack.c.bf16 %v459, %v458
        %v473 = vpack.c.bf16 %v461, %v460
        %v474 = vpack.c.bf16 %v463, %v462
        %v475 = vpack.c.bf16 %v465, %v464
        %v476 = vpack.c.bf16 %v467, %v466
        %v477 = vpack.c.bf16 %v469, %v468
        %478 = vst [vmem:[#allocation1] ss:$4 sm:$0xff] %v387
        %v479 = vld.sshfl [vmem:[#allocation1] sm:$0xff pattern:$0x73625140]
        %v480 = vld.sshfl [vmem:[#allocation1 + $0x8] sm:$0xff pattern:$0x73625140]
        %s481 = scalar_lea.vmem [#allocation1], 32
        %482 = vst [vmem:[%s481] ss:$4 sm:$0xff] %v388
        %v483 = vld.sshfl [vmem:[#allocation1 + $0x20] sm:$0xff pattern:$0x73625140]
        %v484 = vld.sshfl [vmem:[#allocation1 + $0x28] sm:$0xff pattern:$0x73625140]
        %v485 = vshrl.u32 %v479, 16
        %v486 = vpack.i.b16 %v485, %v485
        %v488 = vperm.slane %v486, 0
        %v489 = vshrl.u32 %v480, 16
        %v490 = vpack.i.b16 %v489, %v489
        %v492 = vperm.slane %v490, 0
        %v493 = vshrl.u32 %v483, 16
        %v494 = vpack.i.b16 %v493, %v493
        %v496 = vperm.slane %v494, 0
        %v497 = vshrl.u32 %v484, 16
        %v498 = vpack.i.b16 %v497, %v497
        %v500 = vperm.slane %v498, 0
        %502 = vset.pattern.permute.xlu0 0
        %503 = vperm.xlu0 %502, %v375
        %v504 = vpop.permute.xlu0 %503
        %v507 = vunpack.c.l.s4 839922192
        %v508 = vunpack.c.0.s8 %v507
        %v509 = vperm.slane %v504, %v508
        %511 = vset.pattern.permute.xlu0 0
        %512 = vperm.xlu0 %511, %v376
        %v513 = vpop.permute.xlu0 %512
        %v516 = vunpack.c.l.s4 839922192
        %v517 = vunpack.c.0.s8 %v516
        %v518 = vperm.slane %v513, %v517
        %520 = vset.pattern.permute.xlu0 0
        %521 = vperm.xlu0 %520, %v377
        %v522 = vpop.permute.xlu0 %521
        %v525 = vunpack.c.l.s4 839922192
        %v526 = vunpack.c.0.s8 %v525
        %v527 = vperm.slane %v522, %v526
        %529 = vset.pattern.permute.xlu0 0
        %530 = vperm.xlu0 %529, %v378
        %v531 = vpop.permute.xlu0 %530
        %v534 = vunpack.c.l.s4 839922192
        %v535 = vunpack.c.0.s8 %v534
        %v536 = vperm.slane %v531, %v535
        %v537 = vunpack.c.l.bf16 %v488
        %v538 = vunpack.c.l.bf16 %v492
        %v539 = vunpack.c.l.bf16 %v496
        %v540 = vunpack.c.l.bf16 %v500
        %v541 = vunpack.c.l.bf16 %v509
        %v542 = vunpack.c.l.bf16 %v518
        %v543 = vunpack.c.l.bf16 %v527
        %v544 = vunpack.c.l.bf16 %v536
        %v545 = vmul.f32 %v537, %v541
        %v546 = vmul.f32 %v538, %v541
        %v547 = vmul.f32 %v537, %v542
        %v548 = vmul.f32 %v538, %v542
        %v549 = vmul.f32 %v537, %v543
        %v550 = vmul.f32 %v538, %v543
        %v551 = vmul.f32 %v537, %v544
        %v552 = vmul.f32 %v538, %v544
        %v553 = vmul.f32 %v539, %v541
        %v554 = vmul.f32 %v540, %v541
        %v555 = vmul.f32 %v539, %v542
        %v556 = vmul.f32 %v540, %v542
        %v557 = vmul.f32 %v539, %v543
        %v558 = vmul.f32 %v540, %v543
        %v559 = vmul.f32 %v539, %v544
        %v560 = vmul.f32 %v540, %v544
        %v561 = vpack.c.bf16 %v546, %v545
        %v562 = vpack.c.bf16 %v548, %v547
        %v563 = vpack.c.bf16 %v550, %v549
        %v564 = vpack.c.bf16 %v552, %v551
        %v565 = vpack.c.bf16 %v554, %v553
        %v566 = vpack.c.bf16 %v556, %v555
        %v567 = vpack.c.bf16 %v558, %v557
        %v568 = vpack.c.bf16 %v560, %v559
        %v569 = vunpack.c.l.bf16 %v470
        %v570 = vunpack.c.h.bf16 %v470
        %v571 = vunpack.c.l.bf16 %v471
        %v572 = vunpack.c.h.bf16 %v471
        %v573 = vunpack.c.l.bf16 %v472
        %v574 = vunpack.c.h.bf16 %v472
        %v575 = vunpack.c.l.bf16 %v473
        %v576 = vunpack.c.h.bf16 %v473
        %v577 = vunpack.c.l.bf16 %v474
        %v578 = vunpack.c.h.bf16 %v474
        %v579 = vunpack.c.l.bf16 %v475
        %v580 = vunpack.c.h.bf16 %v475
        %v581 = vunpack.c.l.bf16 %v476
        %v582 = vunpack.c.h.bf16 %v476
        %v583 = vunpack.c.l.bf16 %v477
        %v584 = vunpack.c.h.bf16 %v477
        %v585 = vunpack.c.l.bf16 %v561
        %v586 = vunpack.c.h.bf16 %v561
        %v587 = vunpack.c.l.bf16 %v562
        %v588 = vunpack.c.h.bf16 %v562
        %v589 = vunpack.c.l.bf16 %v563
        %v590 = vunpack.c.h.bf16 %v563
        %v591 = vunpack.c.l.bf16 %v564
        %v592 = vunpack.c.h.bf16 %v564
        %v593 = vunpack.c.l.bf16 %v565
        %v594 = vunpack.c.h.bf16 %v565
        %v595 = vunpack.c.l.bf16 %v566
        %v596 = vunpack.c.h.bf16 %v566
        %v597 = vunpack.c.l.bf16 %v567
        %v598 = vunpack.c.h.bf16 %v567
        %v599 = vunpack.c.l.bf16 %v568
        %v600 = vunpack.c.h.bf16 %v568
        %v601 = vadd.f32 %v569, %v585
        %v602 = vadd.f32 %v570, %v586
        %v603 = vadd.f32 %v571, %v587
        %v604 = vadd.f32 %v572, %v588
        %v605 = vadd.f32 %v573, %v589
        %v606 = vadd.f32 %v574, %v590
        %v607 = vadd.f32 %v575, %v591
        %v608 = vadd.f32 %v576, %v592
        %v609 = vadd.f32 %v577, %v593
        %v610 = vadd.f32 %v578, %v594
        %v611 = vadd.f32 %v579, %v595
        %v612 = vadd.f32 %v580, %v596
        %v613 = vadd.f32 %v581, %v597
        %v614 = vadd.f32 %v582, %v598
        %v615 = vadd.f32 %v583, %v599
        %v616 = vadd.f32 %v584, %v600
        %v617 = vpack.c.bf16 %v602, %v601
        %v618 = vpack.c.bf16 %v604, %v603
        %v619 = vpack.c.bf16 %v606, %v605
        %v620 = vpack.c.bf16 %v608, %v607
        %v621 = vpack.c.bf16 %v610, %v609
        %v622 = vpack.c.bf16 %v612, %v611
        %v623 = vpack.c.bf16 %v614, %v613
        %v624 = vpack.c.bf16 %v616, %v615
        %625 = vst [vmem:[#allocation1] ss:$4 sm:$0xff] %v387
        %v626 = vld.sshfl [vmem:[#allocation1] sm:$0xff pattern:$0x73625140]
        %v627 = vld.sshfl [vmem:[#allocation1 + $0x8] sm:$0xff pattern:$0x73625140]
        %s628 = scalar_lea.vmem [#allocation1], 32
        %629 = vst [vmem:[%s628] ss:$4 sm:$0xff] %v388
        %v630 = vld.sshfl [vmem:[#allocation1 + $0x20] sm:$0xff pattern:$0x73625140]
        %v631 = vld.sshfl [vmem:[#allocation1 + $0x28] sm:$0xff pattern:$0x73625140]
        %v632 = vpack.i.b16 %v626, %v626
        %v634 = vperm.slane %v632, 1
        %v635 = vpack.i.b16 %v627, %v627
        %v637 = vperm.slane %v635, 1
        %v638 = vpack.i.b16 %v630, %v630
        %v640 = vperm.slane %v638, 1
        %v641 = vpack.i.b16 %v631, %v631
        %v643 = vperm.slane %v641, 1
        %645 = vset.pattern.permute.xlu0 0
        %646 = vperm.xlu0 %645, %v379
        %v647 = vpop.permute.xlu0 %646
        %v650 = vunpack.c.l.s4 839922192
        %v651 = vunpack.c.0.s8 %v650
        %v652 = vperm.slane %v647, %v651
        %654 = vset.pattern.permute.xlu0 0
        %655 = vperm.xlu0 %654, %v380
        %v656 = vpop.permute.xlu0 %655
        %v659 = vunpack.c.l.s4 839922192
        %v660 = vunpack.c.0.s8 %v659
        %v661 = vperm.slane %v656, %v660
        %663 = vset.pattern.permute.xlu0 0
        %664 = vperm.xlu0 %663, %v381
        %v665 = vpop.permute.xlu0 %664
        %v668 = vunpack.c.l.s4 839922192
        %v669 = vunpack.c.0.s8 %v668
        %v670 = vperm.slane %v665, %v669
        %672 = vset.pattern.permute.xlu0 0
        %673 = vperm.xlu0 %672, %v382
        %v674 = vpop.permute.xlu0 %673
        %v677 = vunpack.c.l.s4 839922192
        %v678 = vunpack.c.0.s8 %v677
        %v679 = vperm.slane %v674, %v678
        %v680 = vunpack.c.l.bf16 %v634
        %v681 = vunpack.c.l.bf16 %v637
        %v682 = vunpack.c.l.bf16 %v640
        %v683 = vunpack.c.l.bf16 %v643
        %v684 = vunpack.c.l.bf16 %v652
        %v685 = vunpack.c.l.bf16 %v661
        %v686 = vunpack.c.l.bf16 %v670
        %v687 = vunpack.c.l.bf16 %v679
        %v688 = vmul.f32 %v680, %v684
        %v689 = vmul.f32 %v681, %v684
        %v690 = vmul.f32 %v680, %v685
        %v691 = vmul.f32 %v681, %v685
        %v692 = vmul.f32 %v680, %v686
        %v693 = vmul.f32 %v681, %v686
        %v694 = vmul.f32 %v680, %v687
        %v695 = vmul.f32 %v681, %v687
        %v696 = vmul.f32 %v682, %v684
        %v697 = vmul.f32 %v683, %v684
        %v698 = vmul.f32 %v682, %v685
        %v699 = vmul.f32 %v683, %v685
        %v700 = vmul.f32 %v682, %v686
        %v701 = vmul.f32 %v683, %v686
        %v702 = vmul.f32 %v682, %v687
        %v703 = vmul.f32 %v683, %v687
        %v704 = vpack.c.bf16 %v689, %v688
        %v705 = vpack.c.bf16 %v691, %v690
        %v706 = vpack.c.bf16 %v693, %v692
        %v707 = vpack.c.bf16 %v695, %v694
        %v708 = vpack.c.bf16 %v697, %v696
        %v709 = vpack.c.bf16 %v699, %v698
        %v710 = vpack.c.bf16 %v701, %v700
        %v711 = vpack.c.bf16 %v703, %v702
        %v712 = vunpack.c.l.bf16 %v617
        %v713 = vunpack.c.h.bf16 %v617
        %v714 = vunpack.c.l.bf16 %v618
        %v715 = vunpack.c.h.bf16 %v618
        %v716 = vunpack.c.l.bf16 %v619
        %v717 = vunpack.c.h.bf16 %v619
        %v718 = vunpack.c.l.bf16 %v620
        %v719 = vunpack.c.h.bf16 %v620
        %v720 = vunpack.c.l.bf16 %v621
        %v721 = vunpack.c.h.bf16 %v621
        %v722 = vunpack.c.l.bf16 %v622
        %v723 = vunpack.c.h.bf16 %v622
        %v724 = vunpack.c.l.bf16 %v623
        %v725 = vunpack.c.h.bf16 %v623
        %v726 = vunpack.c.l.bf16 %v624
        %v727 = vunpack.c.h.bf16 %v624
        %v728 = vunpack.c.l.bf16 %v704
        %v729 = vunpack.c.h.bf16 %v704
        %v730 = vunpack.c.l.bf16 %v705
        %v731 = vunpack.c.h.bf16 %v705
        %v732 = vunpack.c.l.bf16 %v706
        %v733 = vunpack.c.h.bf16 %v706
        %v734 = vunpack.c.l.bf16 %v707
        %v735 = vunpack.c.h.bf16 %v707
        %v736 = vunpack.c.l.bf16 %v708
        %v737 = vunpack.c.h.bf16 %v708
        %v738 = vunpack.c.l.bf16 %v709
        %v739 = vunpack.c.h.bf16 %v709
        %v740 = vunpack.c.l.bf16 %v710
        %v741 = vunpack.c.h.bf16 %v710
        %v742 = vunpack.c.l.bf16 %v711
        %v743 = vunpack.c.h.bf16 %v711
        %v744 = vadd.f32 %v712, %v728
        %v745 = vadd.f32 %v713, %v729
        %v746 = vadd.f32 %v714, %v730
        %v747 = vadd.f32 %v715, %v731
        %v748 = vadd.f32 %v716, %v732
        %v749 = vadd.f32 %v717, %v733
        %v750 = vadd.f32 %v718, %v734
        %v751 = vadd.f32 %v719, %v735
        %v752 = vadd.f32 %v720, %v736
        %v753 = vadd.f32 %v721, %v737
        %v754 = vadd.f32 %v722, %v738
        %v755 = vadd.f32 %v723, %v739
        %v756 = vadd.f32 %v724, %v740
        %v757 = vadd.f32 %v725, %v741
        %v758 = vadd.f32 %v726, %v742
        %v759 = vadd.f32 %v727, %v743
        %v760 = vpack.c.bf16 %v745, %v744
        %v761 = vpack.c.bf16 %v747, %v746
        %v762 = vpack.c.bf16 %v749, %v748
        %v763 = vpack.c.bf16 %v751, %v750
        %v764 = vpack.c.bf16 %v753, %v752
        %v765 = vpack.c.bf16 %v755, %v754
        %v766 = vpack.c.bf16 %v757, %v756
        %v767 = vpack.c.bf16 %v759, %v758
        %769 = vset.pattern.permute.xlu0 0
        %770 = vperm.xlu0 %769, %v383
        %v771 = vpop.permute.xlu0 %770
        %v774 = vunpack.c.l.s4 839922192
        %v775 = vunpack.c.0.s8 %v774
        %v776 = vperm.slane %v771, %v775
        %778 = vset.pattern.permute.xlu0 0
        %779 = vperm.xlu0 %778, %v384
        %v780 = vpop.permute.xlu0 %779
        %v783 = vunpack.c.l.s4 839922192
        %v784 = vunpack.c.0.s8 %v783
        %v785 = vperm.slane %v780, %v784
        %787 = vset.pattern.permute.xlu0 0
        %788 = vperm.xlu0 %787, %v385
        %v789 = vpop.permute.xlu0 %788
        %v792 = vunpack.c.l.s4 839922192
        %v793 = vunpack.c.0.s8 %v792
        %v794 = vperm.slane %v789, %v793
        %796 = vset.pattern.permute.xlu0 0
        %797 = vperm.xlu0 %796, %v386
        %v798 = vpop.permute.xlu0 %797
        %v801 = vunpack.c.l.s4 839922192
        %v802 = vunpack.c.0.s8 %v801
        %v803 = vperm.slane %v798, %v802
        %v804 = vunpack.c.l.bf16 %v760
        %v805 = vunpack.c.h.bf16 %v760
        %v806 = vunpack.c.l.bf16 %v761
        %v807 = vunpack.c.h.bf16 %v761
        %v808 = vunpack.c.l.bf16 %v762
        %v809 = vunpack.c.h.bf16 %v762
        %v810 = vunpack.c.l.bf16 %v763
        %v811 = vunpack.c.h.bf16 %v763
        %v812 = vunpack.c.l.bf16 %v764
        %v813 = vunpack.c.h.bf16 %v764
        %v814 = vunpack.c.l.bf16 %v765
        %v815 = vunpack.c.h.bf16 %v765
        %v816 = vunpack.c.l.bf16 %v766
        %v817 = vunpack.c.h.bf16 %v766
        %v818 = vunpack.c.l.bf16 %v767
        %v819 = vunpack.c.h.bf16 %v767
        %v820 = vunpack.c.l.bf16 %v776
        %v821 = vunpack.c.l.bf16 %v785
        %v822 = vunpack.c.l.bf16 %v794
        %v823 = vunpack.c.l.bf16 %v803
        %v824 = vadd.f32 %v804, %v820
        %v825 = vadd.f32 %v805, %v820
        %v826 = vadd.f32 %v806, %v821
        %v827 = vadd.f32 %v807, %v821
        %v828 = vadd.f32 %v808, %v822
        %v829 = vadd.f32 %v809, %v822
        %v830 = vadd.f32 %v810, %v823
        %v831 = vadd.f32 %v811, %v823
        %v832 = vadd.f32 %v812, %v820
        %v833 = vadd.f32 %v813, %v820
        %v834 = vadd.f32 %v814, %v821
        %v835 = vadd.f32 %v815, %v821
        %v836 = vadd.f32 %v816, %v822
        %v837 = vadd.f32 %v817, %v822
        %v838 = vadd.f32 %v818, %v823
        %v839 = vadd.f32 %v819, %v823
        %v840 = vpack.c.bf16 %v825, %v824
        %v841 = vpack.c.bf16 %v827, %v826
        %v842 = vpack.c.bf16 %v829, %v828
        %v843 = vpack.c.bf16 %v831, %v830
        %v844 = vpack.c.bf16 %v833, %v832
        %v845 = vpack.c.bf16 %v835, %v834
        %v846 = vpack.c.bf16 %v837, %v836
        %v847 = vpack.c.bf16 %v839, %v838
        %v848 = vxor.u32 %v840, 2147516416
        %v849 = vxor.u32 %v841, 2147516416
        %v850 = vxor.u32 %v842, 2147516416
        %v851 = vxor.u32 %v843, 2147516416
        %v852 = vxor.u32 %v844, 2147516416
        %v853 = vxor.u32 %v845, 2147516416
        %v854 = vxor.u32 %v846, 2147516416
        %v855 = vxor.u32 %v847, 2147516416
        %v856 = vunpack.c.l.bf16 %v848
        %v857 = vunpack.c.h.bf16 %v848
        %v858 = vunpack.c.l.bf16 %v849
        %v859 = vunpack.c.h.bf16 %v849
        %v860 = vunpack.c.l.bf16 %v850
        %v861 = vunpack.c.h.bf16 %v850
        %v862 = vunpack.c.l.bf16 %v851
        %v863 = vunpack.c.h.bf16 %v851
        %v864 = vunpack.c.l.bf16 %v852
        %v865 = vunpack.c.h.bf16 %v852
        %v866 = vunpack.c.l.bf16 %v853
        %v867 = vunpack.c.h.bf16 %v853
        %v868 = vunpack.c.l.bf16 %v854
        %v869 = vunpack.c.h.bf16 %v854
        %v870 = vunpack.c.l.bf16 %v855
        %v871 = vunpack.c.h.bf16 %v855
        %v872 = vmul.f32 %v856, 1.442695
        %v873 = vpow.pop %v872
        %v874 = vmul.f32 %v857, 1.442695
        %v875 = vpow.pop %v874
        %v876 = vmul.f32 %v858, 1.442695
        %v877 = vpow.pop %v876
        %v878 = vmul.f32 %v859, 1.442695
        %v879 = vpow.pop %v878
        %v880 = vmul.f32 %v860, 1.442695
        %v881 = vpow.pop %v880
        %v882 = vmul.f32 %v861, 1.442695
        %v883 = vpow.pop %v882
        %v884 = vmul.f32 %v862, 1.442695
        %v885 = vpow.pop %v884
        %v886 = vmul.f32 %v863, 1.442695
        %v887 = vpow.pop %v886
        %v888 = vmul.f32 %v864, 1.442695
        %v889 = vpow.pop %v888
        %v890 = vmul.f32 %v865, 1.442695
        %v891 = vpow.pop %v890
        %v892 = vmul.f32 %v866, 1.442695
        %v893 = vpow.pop %v892
        %v894 = vmul.f32 %v867, 1.442695
        %v895 = vpow.pop %v894
        %v896 = vmul.f32 %v868, 1.442695
        %v897 = vpow.pop %v896
        %v898 = vmul.f32 %v869, 1.442695
        %v899 = vpow.pop %v898
        %v900 = vmul.f32 %v870, 1.442695
        %v901 = vpow.pop %v900
        %v902 = vmul.f32 %v871, 1.442695
        %v903 = vpow.pop %v902
        %v904 = vpack.c.bf16 %v875, %v873
        %v905 = vpack.c.bf16 %v879, %v877
        %v906 = vpack.c.bf16 %v883, %v881
        %v907 = vpack.c.bf16 %v887, %v885
        %v908 = vpack.c.bf16 %v891, %v889
        %v909 = vpack.c.bf16 %v895, %v893
        %v910 = vpack.c.bf16 %v899, %v897
        %v911 = vpack.c.bf16 %v903, %v901
        %v912 = vunpack.c.l.bf16 %v904
        %v913 = vunpack.c.h.bf16 %v904
        %v914 = vunpack.c.l.bf16 %v905
        %v915 = vunpack.c.h.bf16 %v905
        %v916 = vunpack.c.l.bf16 %v906
        %v917 = vunpack.c.h.bf16 %v906
        %v918 = vunpack.c.l.bf16 %v907
        %v919 = vunpack.c.h.bf16 %v907
        %v920 = vunpack.c.l.bf16 %v908
        %v921 = vunpack.c.h.bf16 %v908
        %v922 = vunpack.c.l.bf16 %v909
        %v923 = vunpack.c.h.bf16 %v909
        %v924 = vunpack.c.l.bf16 %v910
        %v925 = vunpack.c.h.bf16 %v910
        %v926 = vunpack.c.l.bf16 %v911
        %v927 = vunpack.c.h.bf16 %v911
        %v928 = vadd.f32 %v912, 1.0
        %v929 = vadd.f32 %v913, 1.0
        %v930 = vadd.f32 %v914, 1.0
        %v931 = vadd.f32 %v915, 1.0
        %v932 = vadd.f32 %v916, 1.0
        %v933 = vadd.f32 %v917, 1.0
        %v934 = vadd.f32 %v918, 1.0
        %v935 = vadd.f32 %v919, 1.0
        %v936 = vadd.f32 %v920, 1.0
        %v937 = vadd.f32 %v921, 1.0
        %v938 = vadd.f32 %v922, 1.0
        %v939 = vadd.f32 %v923, 1.0
        %v940 = vadd.f32 %v924, 1.0
        %v941 = vadd.f32 %v925, 1.0
        %v942 = vadd.f32 %v926, 1.0
        %v943 = vadd.f32 %v927, 1.0
        %v944 = vpack.c.bf16 %v929, %v928
        %v945 = vpack.c.bf16 %v931, %v930
        %v946 = vpack.c.bf16 %v933, %v932
        %v947 = vpack.c.bf16 %v935, %v934
        %v948 = vpack.c.bf16 %v937, %v936
        %v949 = vpack.c.bf16 %v939, %v938
        %v950 = vpack.c.bf16 %v941, %v940
        %v951 = vpack.c.bf16 %v943, %v942
        %v952 = vunpack.c.h.bf16 1065369472
        %v953 = vunpack.c.l.bf16 1065369472
        %v954 = vunpack.c.h.bf16 %v944
        %v955 = vunpack.c.l.bf16 %v944
        %v956 = vrcp.pop %v954
        %v957 = vmul.f32 %v952, %v956
        %v958 = vrcp.pop %v955
        %v959 = vmul.f32 %v953, %v958
        %v960 = vpack.c.bf16 %v957, %v959
        %v961 = vunpack.c.h.bf16 %v945
        %v962 = vunpack.c.l.bf16 %v945
        %v963 = vrcp.pop %v961
        %v964 = vmul.f32 %v952, %v963
        %v965 = vrcp.pop %v962
        %v966 = vmul.f32 %v953, %v965
        %v967 = vpack.c.bf16 %v964, %v966
        %v968 = vunpack.c.h.bf16 %v946
        %v969 = vunpack.c.l.bf16 %v946
        %v970 = vrcp.pop %v968
        %v971 = vmul.f32 %v952, %v970
        %v972 = vrcp.pop %v969
        %v973 = vmul.f32 %v953, %v972
        %v974 = vpack.c.bf16 %v971, %v973
        %v975 = vunpack.c.h.bf16 %v947
        %v976 = vunpack.c.l.bf16 %v947
        %v977 = vrcp.pop %v975
        %v978 = vmul.f32 %v952, %v977
        %v979 = vrcp.pop %v976
        %v980 = vmul.f32 %v953, %v979
        %v981 = vpack.c.bf16 %v978, %v980
        %v982 = vunpack.c.h.bf16 %v948
        %v983 = vunpack.c.l.bf16 %v948
        %v984 = vrcp.pop %v982
        %v985 = vmul.f32 %v952, %v984
        %v986 = vrcp.pop %v983
        %v987 = vmul.f32 %v953, %v986
        %v988 = vpack.c.bf16 %v985, %v987
        %v989 = vunpack.c.h.bf16 %v949
        %v990 = vunpack.c.l.bf16 %v949
        %v991 = vrcp.pop %v989
        %v992 = vmul.f32 %v952, %v991
        %v993 = vrcp.pop %v990
        %v994 = vmul.f32 %v953, %v993
        %v995 = vpack.c.bf16 %v992, %v994
        %v996 = vunpack.c.h.bf16 %v950
        %v997 = vunpack.c.l.bf16 %v950
        %v998 = vrcp.pop %v996
        %v999 = vmul.f32 %v952, %v998
        %v1000 = vrcp.pop %v997
        %v1001 = vmul.f32 %v953, %v1000
        %v1002 = vpack.c.bf16 %v999, %v1001
        %v1003 = vunpack.c.h.bf16 %v951
        %v1004 = vunpack.c.l.bf16 %v951
        %v1005 = vrcp.pop %v1003
        %v1006 = vmul.f32 %v952, %v1005
        %v1007 = vrcp.pop %v1004
        %v1008 = vmul.f32 %v953, %v1007
        %v1009 = vpack.c.bf16 %v1006, %v1008
        %v1010 = vunpack.c.l.bf16 %v840
        %v1011 = vunpack.c.h.bf16 %v840
        %v1012 = vunpack.c.l.bf16 %v841
        %v1013 = vunpack.c.h.bf16 %v841
        %v1014 = vunpack.c.l.bf16 %v842
        %v1015 = vunpack.c.h.bf16 %v842
        %v1016 = vunpack.c.l.bf16 %v843
        %v1017 = vunpack.c.h.bf16 %v843
        %v1018 = vunpack.c.l.bf16 %v844
        %v1019 = vunpack.c.h.bf16 %v844
        %v1020 = vunpack.c.l.bf16 %v845
        %v1021 = vunpack.c.h.bf16 %v845
        %v1022 = vunpack.c.l.bf16 %v846
        %v1023 = vunpack.c.h.bf16 %v846
        %v1024 = vunpack.c.l.bf16 %v847
        %v1025 = vunpack.c.h.bf16 %v847
        %v1026 = vunpack.c.l.bf16 %v960
        %v1027 = vunpack.c.h.bf16 %v960
        %v1028 = vunpack.c.l.bf16 %v967
        %v1029 = vunpack.c.h.bf16 %v967
        %v1030 = vunpack.c.l.bf16 %v974
        %v1031 = vunpack.c.h.bf16 %v974
        %v1032 = vunpack.c.l.bf16 %v981
        %v1033 = vunpack.c.h.bf16 %v981
        %v1034 = vunpack.c.l.bf16 %v988
        %v1035 = vunpack.c.h.bf16 %v988
        %v1036 = vunpack.c.l.bf16 %v995
        %v1037 = vunpack.c.h.bf16 %v995
        %v1038 = vunpack.c.l.bf16 %v1002
        %v1039 = vunpack.c.h.bf16 %v1002
        %v1040 = vunpack.c.l.bf16 %v1009
        %v1041 = vunpack.c.h.bf16 %v1009
        %v1042 = vmul.f32 %v1010, %v1026
        %v1043 = vmul.f32 %v1011, %v1027
        %v1044 = vmul.f32 %v1012, %v1028
        %v1045 = vmul.f32 %v1013, %v1029
        %v1046 = vmul.f32 %v1014, %v1030
        %v1047 = vmul.f32 %v1015, %v1031
        %v1048 = vmul.f32 %v1016, %v1032
        %v1049 = vmul.f32 %v1017, %v1033
        %v1050 = vmul.f32 %v1018, %v1034
        %v1051 = vmul.f32 %v1019, %v1035
        %v1052 = vmul.f32 %v1020, %v1036
        %v1053 = vmul.f32 %v1021, %v1037
        %v1054 = vmul.f32 %v1022, %v1038
        %v1055 = vmul.f32 %v1023, %v1039
        %v1056 = vmul.f32 %v1024, %v1040
        %v1057 = vmul.f32 %v1025, %v1041
        %v1058 = vpack.c.bf16 %v1043, %v1042
        %v1059 = vpack.c.bf16 %v1045, %v1044
        %v1060 = vpack.c.bf16 %v1047, %v1046
        %v1061 = vpack.c.bf16 %v1049, %v1048
        %v1062 = vpack.c.bf16 %v1051, %v1050
        %v1063 = vpack.c.bf16 %v1053, %v1052
        %v1064 = vpack.c.bf16 %v1055, %v1054
        %v1065 = vpack.c.bf16 %v1057, %v1056
        %v1066 = vlaneseq
        %v1067 = vand.u32 %v1066, 127
        %v1068 = vadd.s32 %v1067, 128
        %s1069 = smul.u32 %s26, 512
        %s1070 = sadd.s32 %s1069, 0
        %v1071 = vstv %s1070
        %v1072 = vadd.s32 %v1071, %v1067
        %v1073 = vadd.s32 %v1071, %v1068
        %vm1074 = vcmp.lt.s32.totalorder %v1072, 576
        %vm1075 = vcmp.lt.s32.totalorder %v1073, 576
        %v1076 = vsel %vm1074, 1, 0
        %v1077 = vsel %vm1075, 1, 0
        %vm1078 = vcmp.eq.s32.totalorder %v1076, 1
        %vm1079 = vcmp.eq.s32.totalorder %v1077, 1
        %vm1080 = vmpackc.low %vm1079, %vm1078
        %v1081 = vsel %vm1080, %v1058, 0
        %v1082 = vsel %vm1080, %v1059, 0
        %v1083 = vsel %vm1080, %v1060, 0
        %v1084 = vsel %vm1080, %v1061, 0
        %v1085 = vsel %vm1080, %v1062, 0
        %v1086 = vsel %vm1080, %v1063, 0
        %v1087 = vsel %vm1080, %v1064, 0
        %v1088 = vsel %vm1080, %v1065, 0
        %v1089 = vunpack.c.l.bf16 %v1081
        %v1090 = vunpack.c.h.bf16 %v1081
        %v1091 = vunpack.c.l.bf16 %v1082
        %v1092 = vunpack.c.h.bf16 %v1082
        %v1093 = vunpack.c.l.bf16 %v1083
        %v1094 = vunpack.c.h.bf16 %v1083
        %v1095 = vunpack.c.l.bf16 %v1084
        %v1096 = vunpack.c.h.bf16 %v1084
        %v1097 = vunpack.c.l.bf16 %v1085
        %v1098 = vunpack.c.h.bf16 %v1085
        %v1099 = vunpack.c.l.bf16 %v1086
        %v1100 = vunpack.c.h.bf16 %v1086
        %v1101 = vunpack.c.l.bf16 %v1087
        %v1102 = vunpack.c.h.bf16 %v1087
        %v1103 = vunpack.c.l.bf16 %v1088
        %v1104 = vunpack.c.h.bf16 %v1088
        %v1105 = vadd.f32 %v1089, %v1090
        %1106 = vadd.xlane.f32.xlu0 %v1105
        %v1107 = vpop.xlane.xlu0 %1106
        %v1108 = vadd.f32 %v1091, %v1092
        %1109 = vadd.xlane.f32.xlu0 %v1108
        %v1110 = vpop.xlane.xlu0 %1109
        %v1111 = vadd.f32 %v1093, %v1094
        %1112 = vadd.xlane.f32.xlu0 %v1111
        %v1113 = vpop.xlane.xlu0 %1112
        %v1114 = vadd.f32 %v1095, %v1096
        %1115 = vadd.xlane.f32.xlu0 %v1114
        %v1116 = vpop.xlane.xlu0 %1115
        %v1117 = vadd.f32 %v1097, %v1098
        %1118 = vadd.xlane.f32.xlu0 %v1117
        %v1119 = vpop.xlane.xlu0 %1118
        %v1120 = vadd.f32 %v1099, %v1100
        %1121 = vadd.xlane.f32.xlu0 %v1120
        %v1122 = vpop.xlane.xlu0 %1121
        %v1123 = vadd.f32 %v1101, %v1102
        %1124 = vadd.xlane.f32.xlu0 %v1123
        %v1125 = vpop.xlane.xlu0 %1124
        %v1126 = vadd.f32 %v1103, %v1104
        %1127 = vadd.xlane.f32.xlu0 %v1126
        %v1128 = vpop.xlane.xlu0 %1127
        %v1129 = vadd.f32 %v1107, 0.0
        %v1130 = vadd.f32 %v1110, 0.0
        %v1131 = vadd.f32 %v1113, 0.0
        %v1132 = vadd.f32 %v1116, 0.0
        %v1133 = vadd.f32 %v1119, 0.0
        %v1134 = vadd.f32 %v1122, 0.0
        %v1135 = vadd.f32 %v1125, 0.0
        %v1136 = vadd.f32 %v1128, 0.0
        %s1137 = scalar_lea.vmem %s327, 4 [#allocation3]
        %v1138 = vld [vmem:[%s1137] sm:$0xf]
        %v1139 = vld [vmem:[%s1137 + $0x8] sm:$0xf]
        %1141 = vst [vmem:[#allocation1] ss:$4 sm:$0xff] %v1138
        %v1142 = vld.sshfl [vmem:[#allocation1] sm:$0xff pattern:$0x73625140]
        %v1143 = vld.sshfl [vmem:[#allocation1 + $0x8] sm:$0xff pattern:$0x73625140]
        %s1145 = scalar_lea.vmem [#allocation1], 32
        %1146 = vst [vmem:[%s1145] ss:$4 sm:$0xff] %v1139
        %v1147 = vld.sshfl [vmem:[#allocation1 + $0x20] sm:$0xff pattern:$0x73625140]
        %v1148 = vld.sshfl [vmem:[#allocation1 + $0x28] sm:$0xff pattern:$0x73625140]
        %v1149 = vpack.i.b16 %v1142, %v1142
        %v1151 = vperm.slane %v1149, 0
        %v1152 = vpack.i.b16 %v1143, %v1143
        %v1154 = vperm.slane %v1152, 0
        %v1155 = vpack.i.b16 %v1147, %v1147
        %v1157 = vperm.slane %v1155, 0
        %v1158 = vpack.i.b16 %v1148, %v1148
        %v1160 = vperm.slane %v1158, 0
        %v1161 = vunpack.c.l.bf16 %v1151
        %v1162 = vunpack.c.l.bf16 %v1154
        %v1163 = vunpack.c.l.bf16 %v1157
        %v1164 = vunpack.c.l.bf16 %v1160
        %v1165 = vmul.f32 %v1161, %v450
        %v1166 = vmul.f32 %v1162, %v450
        %v1167 = vmul.f32 %v1161, %v451
        %v1168 = vmul.f32 %v1162, %v451
        %v1169 = vmul.f32 %v1161, %v452
        %v1170 = vmul.f32 %v1162, %v452
        %v1171 = vmul.f32 %v1161, %v453
        %v1172 = vmul.f32 %v1162, %v453
        %v1173 = vmul.f32 %v1163, %v450
        %v1174 = vmul.f32 %v1164, %v450
        %v1175 = vmul.f32 %v1163, %v451
        %v1176 = vmul.f32 %v1164, %v451
        %v1177 = vmul.f32 %v1163, %v452
        %v1178 = vmul.f32 %v1164, %v452
        %v1179 = vmul.f32 %v1163, %v453
        %v1180 = vmul.f32 %v1164, %v453
        %v1181 = vpack.c.bf16 %v1166, %v1165
        %v1182 = vpack.c.bf16 %v1168, %v1167
        %v1183 = vpack.c.bf16 %v1170, %v1169
        %v1184 = vpack.c.bf16 %v1172, %v1171
        %v1185 = vpack.c.bf16 %v1174, %v1173
        %v1186 = vpack.c.bf16 %v1176, %v1175
        %v1187 = vpack.c.bf16 %v1178, %v1177
        %v1188 = vpack.c.bf16 %v1180, %v1179
        %1189 = vst [vmem:[#allocation1] ss:$4 sm:$0xff] %v1138
        %v1190 = vld.sshfl [vmem:[#allocation1] sm:$0xff pattern:$0x73625140]
        %v1191 = vld.sshfl [vmem:[#allocation1 + $0x8] sm:$0xff pattern:$0x73625140]
        %s1192 = scalar_lea.vmem [#allocation1], 32
        %1193 = vst [vmem:[%s1192] ss:$4 sm:$0xff] %v1139
        %v1194 = vld.sshfl [vmem:[#allocation1 + $0x20] sm:$0xff pattern:$0x73625140]
        %v1195 = vld.sshfl [vmem:[#allocation1 + $0x28] sm:$0xff pattern:$0x73625140]
        %v1196 = vshrl.u32 %v1190, 16
        %v1197 = vpack.i.b16 %v1196, %v1196
        %v1199 = vperm.slane %v1197, 0
        %v1200 = vshrl.u32 %v1191, 16
        %v1201 = vpack.i.b16 %v1200, %v1200
        %v1203 = vperm.slane %v1201, 0
        %v1204 = vshrl.u32 %v1194, 16
        %v1205 = vpack.i.b16 %v1204, %v1204
        %v1207 = vperm.slane %v1205, 0
        %v1208 = vshrl.u32 %v1195, 16
        %v1209 = vpack.i.b16 %v1208, %v1208
        %v1211 = vperm.slane %v1209, 0
        %v1212 = vunpack.c.l.bf16 %v1199
        %v1213 = vunpack.c.l.bf16 %v1203
        %v1214 = vunpack.c.l.bf16 %v1207
        %v1215 = vunpack.c.l.bf16 %v1211
        %v1216 = vmul.f32 %v1212, %v541
        %v1217 = vmul.f32 %v1213, %v541
        %v1218 = vmul.f32 %v1212, %v542
        %v1219 = vmul.f32 %v1213, %v542
        %v1220 = vmul.f32 %v1212, %v543
        %v1221 = vmul.f32 %v1213, %v543
        %v1222 = vmul.f32 %v1212, %v544
        %v1223 = vmul.f32 %v1213, %v544
        %v1224 = vmul.f32 %v1214, %v541
        %v1225 = vmul.f32 %v1215, %v541
        %v1226 = vmul.f32 %v1214, %v542
        %v1227 = vmul.f32 %v1215, %v542
        %v1228 = vmul.f32 %v1214, %v543
        %v1229 = vmul.f32 %v1215, %v543
        %v1230 = vmul.f32 %v1214, %v544
        %v1231 = vmul.f32 %v1215, %v544
        %v1232 = vpack.c.bf16 %v1217, %v1216
        %v1233 = vpack.c.bf16 %v1219, %v1218
        %v1234 = vpack.c.bf16 %v1221, %v1220
        %v1235 = vpack.c.bf16 %v1223, %v1222
        %v1236 = vpack.c.bf16 %v1225, %v1224
        %v1237 = vpack.c.bf16 %v1227, %v1226
        %v1238 = vpack.c.bf16 %v1229, %v1228
        %v1239 = vpack.c.bf16 %v1231, %v1230
        %v1240 = vunpack.c.l.bf16 %v1181
        %v1241 = vunpack.c.h.bf16 %v1181
        %v1242 = vunpack.c.l.bf16 %v1182
        %v1243 = vunpack.c.h.bf16 %v1182
        %v1244 = vunpack.c.l.bf16 %v1183
        %v1245 = vunpack.c.h.bf16 %v1183
        %v1246 = vunpack.c.l.bf16 %v1184
        %v1247 = vunpack.c.h.bf16 %v1184
        %v1248 = vunpack.c.l.bf16 %v1185
        %v1249 = vunpack.c.h.bf16 %v1185
        %v1250 = vunpack.c.l.bf16 %v1186
        %v1251 = vunpack.c.h.bf16 %v1186
        %v1252 = vunpack.c.l.bf16 %v1187
        %v1253 = vunpack.c.h.bf16 %v1187
        %v1254 = vunpack.c.l.bf16 %v1188
        %v1255 = vunpack.c.h.bf16 %v1188
        %v1256 = vunpack.c.l.bf16 %v1232
        %v1257 = vunpack.c.h.bf16 %v1232
        %v1258 = vunpack.c.l.bf16 %v1233
        %v1259 = vunpack.c.h.bf16 %v1233
        %v1260 = vunpack.c.l.bf16 %v1234
        %v1261 = vunpack.c.h.bf16 %v1234
        %v1262 = vunpack.c.l.bf16 %v1235
        %v1263 = vunpack.c.h.bf16 %v1235
        %v1264 = vunpack.c.l.bf16 %v1236
        %v1265 = vunpack.c.h.bf16 %v1236
        %v1266 = vunpack.c.l.bf16 %v1237
        %v1267 = vunpack.c.h.bf16 %v1237
        %v1268 = vunpack.c.l.bf16 %v1238
        %v1269 = vunpack.c.h.bf16 %v1238
        %v1270 = vunpack.c.l.bf16 %v1239
        %v1271 = vunpack.c.h.bf16 %v1239
        %v1272 = vadd.f32 %v1240, %v1256
        %v1273 = vadd.f32 %v1241, %v1257
        %v1274 = vadd.f32 %v1242, %v1258
        %v1275 = vadd.f32 %v1243, %v1259
        %v1276 = vadd.f32 %v1244, %v1260
        %v1277 = vadd.f32 %v1245, %v1261
        %v1278 = vadd.f32 %v1246, %v1262
        %v1279 = vadd.f32 %v1247, %v1263
        %v1280 = vadd.f32 %v1248, %v1264
        %v1281 = vadd.f32 %v1249, %v1265
        %v1282 = vadd.f32 %v1250, %v1266
        %v1283 = vadd.f32 %v1251, %v1267
        %v1284 = vadd.f32 %v1252, %v1268
        %v1285 = vadd.f32 %v1253, %v1269
        %v1286 = vadd.f32 %v1254, %v1270
        %v1287 = vadd.f32 %v1255, %v1271
        %v1288 = vpack.c.bf16 %v1273, %v1272
        %v1289 = vpack.c.bf16 %v1275, %v1274
        %v1290 = vpack.c.bf16 %v1277, %v1276
        %v1291 = vpack.c.bf16 %v1279, %v1278
        %v1292 = vpack.c.bf16 %v1281, %v1280
        %v1293 = vpack.c.bf16 %v1283, %v1282
        %v1294 = vpack.c.bf16 %v1285, %v1284
        %v1295 = vpack.c.bf16 %v1287, %v1286
        %1296 = vst [vmem:[#allocation1] ss:$4 sm:$0xff] %v1138
        %v1297 = vld.sshfl [vmem:[#allocation1] sm:$0xff pattern:$0x73625140]
        %v1298 = vld.sshfl [vmem:[#allocation1 + $0x8] sm:$0xff pattern:$0x73625140]
        %s1299 = scalar_lea.vmem [#allocation1], 32
        %1300 = vst [vmem:[%s1299] ss:$4 sm:$0xff] %v1139
        %v1301 = vld.sshfl [vmem:[#allocation1 + $0x20] sm:$0xff pattern:$0x73625140]
        %v1302 = vld.sshfl [vmem:[#allocation1 + $0x28] sm:$0xff pattern:$0x73625140]
        %v1303 = vpack.i.b16 %v1297, %v1297
        %v1305 = vperm.slane %v1303, 1
        %v1306 = vpack.i.b16 %v1298, %v1298
        %v1308 = vperm.slane %v1306, 1
        %v1309 = vpack.i.b16 %v1301, %v1301
        %v1311 = vperm.slane %v1309, 1
        %v1312 = vpack.i.b16 %v1302, %v1302
        %v1314 = vperm.slane %v1312, 1
        %v1315 = vunpack.c.l.bf16 %v1305
        %v1316 = vunpack.c.l.bf16 %v1308
        %v1317 = vunpack.c.l.bf16 %v1311
        %v1318 = vunpack.c.l.bf16 %v1314
        %v1319 = vmul.f32 %v1315, %v684
        %v1320 = vmul.f32 %v1316, %v684
        %v1321 = vmul.f32 %v1315, %v685
        %v1322 = vmul.f32 %v1316, %v685
        %v1323 = vmul.f32 %v1315, %v686
        %v1324 = vmul.f32 %v1316, %v686
        %v1325 = vmul.f32 %v1315, %v687
        %v1326 = vmul.f32 %v1316, %v687
        %v1327 = vmul.f32 %v1317, %v684
        %v1328 = vmul.f32 %v1318, %v684
        %v1329 = vmul.f32 %v1317, %v685
        %v1330 = vmul.f32 %v1318, %v685
        %v1331 = vmul.f32 %v1317, %v686
        %v1332 = vmul.f32 %v1318, %v686
        %v1333 = vmul.f32 %v1317, %v687
        %v1334 = vmul.f32 %v1318, %v687
        %v1335 = vpack.c.bf16 %v1320, %v1319
        %v1336 = vpack.c.bf16 %v1322, %v1321
        %v1337 = vpack.c.bf16 %v1324, %v1323
        %v1338 = vpack.c.bf16 %v1326, %v1325
        %v1339 = vpack.c.bf16 %v1328, %v1327
        %v1340 = vpack.c.bf16 %v1330, %v1329
        %v1341 = vpack.c.bf16 %v1332, %v1331
        %v1342 = vpack.c.bf16 %v1334, %v1333
        %v1343 = vunpack.c.l.bf16 %v1288
        %v1344 = vunpack.c.h.bf16 %v1288
        %v1345 = vunpack.c.l.bf16 %v1289
        %v1346 = vunpack.c.h.bf16 %v1289
        %v1347 = vunpack.c.l.bf16 %v1290
        %v1348 = vunpack.c.h.bf16 %v1290
        %v1349 = vunpack.c.l.bf16 %v1291
        %v1350 = vunpack.c.h.bf16 %v1291
        %v1351 = vunpack.c.l.bf16 %v1292
        %v1352 = vunpack.c.h.bf16 %v1292
        %v1353 = vunpack.c.l.bf16 %v1293
        %v1354 = vunpack.c.h.bf16 %v1293
        %v1355 = vunpack.c.l.bf16 %v1294
        %v1356 = vunpack.c.h.bf16 %v1294
        %v1357 = vunpack.c.l.bf16 %v1295
        %v1358 = vunpack.c.h.bf16 %v1295
        %v1359 = vunpack.c.l.bf16 %v1335
        %v1360 = vunpack.c.h.bf16 %v1335
        %v1361 = vunpack.c.l.bf16 %v1336
        %v1362 = vunpack.c.h.bf16 %v1336
        %v1363 = vunpack.c.l.bf16 %v1337
        %v1364 = vunpack.c.h.bf16 %v1337
        %v1365 = vunpack.c.l.bf16 %v1338
        %v1366 = vunpack.c.h.bf16 %v1338
        %v1367 = vunpack.c.l.bf16 %v1339
        %v1368 = vunpack.c.h.bf16 %v1339
        %v1369 = vunpack.c.l.bf16 %v1340
        %v1370 = vunpack.c.h.bf16 %v1340
        %v1371 = vunpack.c.l.bf16 %v1341
        %v1372 = vunpack.c.h.bf16 %v1341
        %v1373 = vunpack.c.l.bf16 %v1342
        %v1374 = vunpack.c.h.bf16 %v1342
        %v1375 = vadd.f32 %v1343, %v1359
        %v1376 = vadd.f32 %v1344, %v1360
        %v1377 = vadd.f32 %v1345, %v1361
        %v1378 = vadd.f32 %v1346, %v1362
        %v1379 = vadd.f32 %v1347, %v1363
        %v1380 = vadd.f32 %v1348, %v1364
        %v1381 = vadd.f32 %v1349, %v1365
        %v1382 = vadd.f32 %v1350, %v1366
        %v1383 = vadd.f32 %v1351, %v1367
        %v1384 = vadd.f32 %v1352, %v1368
        %v1385 = vadd.f32 %v1353, %v1369
        %v1386 = vadd.f32 %v1354, %v1370
        %v1387 = vadd.f32 %v1355, %v1371
        %v1388 = vadd.f32 %v1356, %v1372
        %v1389 = vadd.f32 %v1357, %v1373
        %v1390 = vadd.f32 %v1358, %v1374
        %v1391 = vpack.c.bf16 %v1376, %v1375
        %v1392 = vpack.c.bf16 %v1378, %v1377
        %v1393 = vpack.c.bf16 %v1380, %v1379
        %v1394 = vpack.c.bf16 %v1382, %v1381
        %v1395 = vpack.c.bf16 %v1384, %v1383
        %v1396 = vpack.c.bf16 %v1386, %v1385
        %v1397 = vpack.c.bf16 %v1388, %v1387
        %v1398 = vpack.c.bf16 %v1390, %v1389
        %v1399 = vunpack.c.l.bf16 %v1391
        %v1400 = vunpack.c.h.bf16 %v1391
        %v1401 = vunpack.c.l.bf16 %v1392
        %v1402 = vunpack.c.h.bf16 %v1392
        %v1403 = vunpack.c.l.bf16 %v1393
        %v1404 = vunpack.c.h.bf16 %v1393
        %v1405 = vunpack.c.l.bf16 %v1394
        %v1406 = vunpack.c.h.bf16 %v1394
        %v1407 = vunpack.c.l.bf16 %v1395
        %v1408 = vunpack.c.h.bf16 %v1395
        %v1409 = vunpack.c.l.bf16 %v1396
        %v1410 = vunpack.c.h.bf16 %v1396
        %v1411 = vunpack.c.l.bf16 %v1397
        %v1412 = vunpack.c.h.bf16 %v1397
        %v1413 = vunpack.c.l.bf16 %v1398
        %v1414 = vunpack.c.h.bf16 %v1398
        %v1415 = vadd.f32 %v1399, %v820
        %v1416 = vadd.f32 %v1400, %v820
        %v1417 = vadd.f32 %v1401, %v821
        %v1418 = vadd.f32 %v1402, %v821
        %v1419 = vadd.f32 %v1403, %v822
        %v1420 = vadd.f32 %v1404, %v822
        %v1421 = vadd.f32 %v1405, %v823
        %v1422 = vadd.f32 %v1406, %v823
        %v1423 = vadd.f32 %v1407, %v820
        %v1424 = vadd.f32 %v1408, %v820
        %v1425 = vadd.f32 %v1409, %v821
        %v1426 = vadd.f32 %v1410, %v821
        %v1427 = vadd.f32 %v1411, %v822
        %v1428 = vadd.f32 %v1412, %v822
        %v1429 = vadd.f32 %v1413, %v823
        %v1430 = vadd.f32 %v1414, %v823
        %v1431 = vpack.c.bf16 %v1416, %v1415
        %v1432 = vpack.c.bf16 %v1418, %v1417
        %v1433 = vpack.c.bf16 %v1420, %v1419
        %v1434 = vpack.c.bf16 %v1422, %v1421
        %v1435 = vpack.c.bf16 %v1424, %v1423
        %v1436 = vpack.c.bf16 %v1426, %v1425
        %v1437 = vpack.c.bf16 %v1428, %v1427
        %v1438 = vpack.c.bf16 %v1430, %v1429
        %v1439 = vxor.u32 %v1431, 2147516416
        %v1440 = vxor.u32 %v1432, 2147516416
        %v1441 = vxor.u32 %v1433, 2147516416
        %v1442 = vxor.u32 %v1434, 2147516416
        %v1443 = vxor.u32 %v1435, 2147516416
        %v1444 = vxor.u32 %v1436, 2147516416
        %v1445 = vxor.u32 %v1437, 2147516416
        %v1446 = vxor.u32 %v1438, 2147516416
        %v1447 = vunpack.c.l.bf16 %v1439
        %v1448 = vunpack.c.h.bf16 %v1439
        %v1449 = vunpack.c.l.bf16 %v1440
        %v1450 = vunpack.c.h.bf16 %v1440
        %v1451 = vunpack.c.l.bf16 %v1441
        %v1452 = vunpack.c.h.bf16 %v1441
        %v1453 = vunpack.c.l.bf16 %v1442
        %v1454 = vunpack.c.h.bf16 %v1442
        %v1455 = vunpack.c.l.bf16 %v1443
        %v1456 = vunpack.c.h.bf16 %v1443
        %v1457 = vunpack.c.l.bf16 %v1444
        %v1458 = vunpack.c.h.bf16 %v1444
        %v1459 = vunpack.c.l.bf16 %v1445
        %v1460 = vunpack.c.h.bf16 %v1445
        %v1461 = vunpack.c.l.bf16 %v1446
        %v1462 = vunpack.c.h.bf16 %v1446
        %v1463 = vmul.f32 %v1447, 1.442695
        %v1464 = vpow.pop %v1463
        %v1465 = vmul.f32 %v1448, 1.442695
        %v1466 = vpow.pop %v1465
        %v1467 = vmul.f32 %v1449, 1.442695
        %v1468 = vpow.pop %v1467
        %v1469 = vmul.f32 %v1450, 1.442695
        %v1470 = vpow.pop %v1469
        %v1471 = vmul.f32 %v1451, 1.442695
        %v1472 = vpow.pop %v1471
        %v1473 = vmul.f32 %v1452, 1.442695
        %v1474 = vpow.pop %v1473
        %v1475 = vmul.f32 %v1453, 1.442695
        %v1476 = vpow.pop %v1475
        %v1477 = vmul.f32 %v1454, 1.442695
        %v1478 = vpow.pop %v1477
        %v1479 = vmul.f32 %v1455, 1.442695
        %v1480 = vpow.pop %v1479
        %v1481 = vmul.f32 %v1456, 1.442695
        %v1482 = vpow.pop %v1481
        %v1483 = vmul.f32 %v1457, 1.442695
        %v1484 = vpow.pop %v1483
        %v1485 = vmul.f32 %v1458, 1.442695
        %v1486 = vpow.pop %v1485
        %v1487 = vmul.f32 %v1459, 1.442695
        %v1488 = vpow.pop %v1487
        %v1489 = vmul.f32 %v1460, 1.442695
        %v1490 = vpow.pop %v1489
        %v1491 = vmul.f32 %v1461, 1.442695
        %v1492 = vpow.pop %v1491
        %v1493 = vmul.f32 %v1462, 1.442695
        %v1494 = vpow.pop %v1493
        %v1495 = vpack.c.bf16 %v1466, %v1464
        %v1496 = vpack.c.bf16 %v1470, %v1468
        %v1497 = vpack.c.bf16 %v1474, %v1472
        %v1498 = vpack.c.bf16 %v1478, %v1476
        %v1499 = vpack.c.bf16 %v1482, %v1480
        %v1500 = vpack.c.bf16 %v1486, %v1484
        %v1501 = vpack.c.bf16 %v1490, %v1488
        %v1502 = vpack.c.bf16 %v1494, %v1492
        %v1503 = vunpack.c.l.bf16 %v1495
        %v1504 = vunpack.c.h.bf16 %v1495
        %v1505 = vunpack.c.l.bf16 %v1496
        %v1506 = vunpack.c.h.bf16 %v1496
        %v1507 = vunpack.c.l.bf16 %v1497
        %v1508 = vunpack.c.h.bf16 %v1497
        %v1509 = vunpack.c.l.bf16 %v1498
        %v1510 = vunpack.c.h.bf16 %v1498
        %v1511 = vunpack.c.l.bf16 %v1499
        %v1512 = vunpack.c.h.bf16 %v1499
        %v1513 = vunpack.c.l.bf16 %v1500
        %v1514 = vunpack.c.h.bf16 %v1500
        %v1515 = vunpack.c.l.bf16 %v1501
        %v1516 = vunpack.c.h.bf16 %v1501
        %v1517 = vunpack.c.l.bf16 %v1502
        %v1518 = vunpack.c.h.bf16 %v1502
        %v1519 = vadd.f32 %v1503, 1.0
        %v1520 = vadd.f32 %v1504, 1.0
        %v1521 = vadd.f32 %v1505, 1.0
        %v1522 = vadd.f32 %v1506, 1.0
        %v1523 = vadd.f32 %v1507, 1.0
        %v1524 = vadd.f32 %v1508, 1.0
        %v1525 = vadd.f32 %v1509, 1.0
        %v1526 = vadd.f32 %v1510, 1.0
        %v1527 = vadd.f32 %v1511, 1.0
        %v1528 = vadd.f32 %v1512, 1.0
        %v1529 = vadd.f32 %v1513, 1.0
        %v1530 = vadd.f32 %v1514, 1.0
        %v1531 = vadd.f32 %v1515, 1.0
        %v1532 = vadd.f32 %v1516, 1.0
        %v1533 = vadd.f32 %v1517, 1.0
        %v1534 = vadd.f32 %v1518, 1.0
        %v1535 = vpack.c.bf16 %v1520, %v1519
        %v1536 = vpack.c.bf16 %v1522, %v1521
        %v1537 = vpack.c.bf16 %v1524, %v1523
        %v1538 = vpack.c.bf16 %v1526, %v1525
        %v1539 = vpack.c.bf16 %v1528, %v1527
        %v1540 = vpack.c.bf16 %v1530, %v1529
        %v1541 = vpack.c.bf16 %v1532, %v1531
        %v1542 = vpack.c.bf16 %v1534, %v1533
        %v1543 = vunpack.c.h.bf16 %v1535
        %v1544 = vunpack.c.l.bf16 %v1535
        %v1545 = vrcp.pop %v1543
        %v1546 = vmul.f32 %v952, %v1545
        %v1547 = vrcp.pop %v1544
        %v1548 = vmul.f32 %v953, %v1547
        %v1549 = vpack.c.bf16 %v1546, %v1548
        %v1550 = vunpack.c.h.bf16 %v1536
        %v1551 = vunpack.c.l.bf16 %v1536
        %v1552 = vrcp.pop %v1550
        %v1553 = vmul.f32 %v952, %v1552
        %v1554 = vrcp.pop %v1551
        %v1555 = vmul.f32 %v953, %v1554
        %v1556 = vpack.c.bf16 %v1553, %v1555
        %v1557 = vunpack.c.h.bf16 %v1537
        %v1558 = vunpack.c.l.bf16 %v1537
        %v1559 = vrcp.pop %v1557
        %v1560 = vmul.f32 %v952, %v1559
        %v1561 = vrcp.pop %v1558
        %v1562 = vmul.f32 %v953, %v1561
        %v1563 = vpack.c.bf16 %v1560, %v1562
        %v1564 = vunpack.c.h.bf16 %v1538
        %v1565 = vunpack.c.l.bf16 %v1538
        %v1566 = vrcp.pop %v1564
        %v1567 = vmul.f32 %v952, %v1566
        %v1568 = vrcp.pop %v1565
        %v1569 = vmul.f32 %v953, %v1568
        %v1570 = vpack.c.bf16 %v1567, %v1569
        %v1571 = vunpack.c.h.bf16 %v1539
        %v1572 = vunpack.c.l.bf16 %v1539
        %v1573 = vrcp.pop %v1571
        %v1574 = vmul.f32 %v952, %v1573
        %v1575 = vrcp.pop %v1572
        %v1576 = vmul.f32 %v953, %v1575
        %v1577 = vpack.c.bf16 %v1574, %v1576
        %v1578 = vunpack.c.h.bf16 %v1540
        %v1579 = vunpack.c.l.bf16 %v1540
        %v1580 = vrcp.pop %v1578
        %v1581 = vmul.f32 %v952, %v1580
        %v1582 = vrcp.pop %v1579
        %v1583 = vmul.f32 %v953, %v1582
        %v1584 = vpack.c.bf16 %v1581, %v1583
        %v1585 = vunpack.c.h.bf16 %v1541
        %v1586 = vunpack.c.l.bf16 %v1541
        %v1587 = vrcp.pop %v1585
        %v1588 = vmul.f32 %v952, %v1587
        %v1589 = vrcp.pop %v1586
        %v1590 = vmul.f32 %v953, %v1589
        %v1591 = vpack.c.bf16 %v1588, %v1590
        %v1592 = vunpack.c.h.bf16 %v1542
        %v1593 = vunpack.c.l.bf16 %v1542
        %v1594 = vrcp.pop %v1592
        %v1595 = vmul.f32 %v952, %v1594
        %v1596 = vrcp.pop %v1593
        %v1597 = vmul.f32 %v953, %v1596
        %v1598 = vpack.c.bf16 %v1595, %v1597
        %v1599 = vunpack.c.l.bf16 %v1431
        %v1600 = vunpack.c.h.bf16 %v1431
        %v1601 = vunpack.c.l.bf16 %v1432
        %v1602 = vunpack.c.h.bf16 %v1432
        %v1603 = vunpack.c.l.bf16 %v1433
        %v1604 = vunpack.c.h.bf16 %v1433
        %v1605 = vunpack.c.l.bf16 %v1434
        %v1606 = vunpack.c.h.bf16 %v1434
        %v1607 = vunpack.c.l.bf16 %v1435
        %v1608 = vunpack.c.h.bf16 %v1435
        %v1609 = vunpack.c.l.bf16 %v1436
        %v1610 = vunpack.c.h.bf16 %v1436
        %v1611 = vunpack.c.l.bf16 %v1437
        %v1612 = vunpack.c.h.bf16 %v1437
        %v1613 = vunpack.c.l.bf16 %v1438
        %v1614 = vunpack.c.h.bf16 %v1438
        %v1615 = vunpack.c.l.bf16 %v1549
        %v1616 = vunpack.c.h.bf16 %v1549
        %v1617 = vunpack.c.l.bf16 %v1556
        %v1618 = vunpack.c.h.bf16 %v1556
        %v1619 = vunpack.c.l.bf16 %v1563
        %v1620 = vunpack.c.h.bf16 %v1563
        %v1621 = vunpack.c.l.bf16 %v1570
        %v1622 = vunpack.c.h.bf16 %v1570
        %v1623 = vunpack.c.l.bf16 %v1577
        %v1624 = vunpack.c.h.bf16 %v1577
        %v1625 = vunpack.c.l.bf16 %v1584
        %v1626 = vunpack.c.h.bf16 %v1584
        %v1627 = vunpack.c.l.bf16 %v1591
        %v1628 = vunpack.c.h.bf16 %v1591
        %v1629 = vunpack.c.l.bf16 %v1598
        %v1630 = vunpack.c.h.bf16 %v1598
        %v1631 = vmul.f32 %v1599, %v1615
        %v1632 = vmul.f32 %v1600, %v1616
        %v1633 = vmul.f32 %v1601, %v1617
        %v1634 = vmul.f32 %v1602, %v1618
        %v1635 = vmul.f32 %v1603, %v1619
        %v1636 = vmul.f32 %v1604, %v1620
        %v1637 = vmul.f32 %v1605, %v1621
        %v1638 = vmul.f32 %v1606, %v1622
        %v1639 = vmul.f32 %v1607, %v1623
        %v1640 = vmul.f32 %v1608, %v1624
        %v1641 = vmul.f32 %v1609, %v1625
        %v1642 = vmul.f32 %v1610, %v1626
        %v1643 = vmul.f32 %v1611, %v1627
        %v1644 = vmul.f32 %v1612, %v1628
        %v1645 = vmul.f32 %v1613, %v1629
        %v1646 = vmul.f32 %v1614, %v1630
        %v1647 = vpack.c.bf16 %v1632, %v1631
        %v1648 = vpack.c.bf16 %v1634, %v1633
        %v1649 = vpack.c.bf16 %v1636, %v1635
        %v1650 = vpack.c.bf16 %v1638, %v1637
        %v1651 = vpack.c.bf16 %v1640, %v1639
        %v1652 = vpack.c.bf16 %v1642, %v1641
        %v1653 = vpack.c.bf16 %v1644, %v1643
        %v1654 = vpack.c.bf16 %v1646, %v1645
        %s1655 = sadd.s32 %s1069, 256
        %v1656 = vstv %s1655
        %v1657 = vadd.s32 %v1656, %v1067
        %v1658 = vadd.s32 %v1656, %v1068
        %vm1659 = vcmp.lt.s32.totalorder %v1657, 576
        %vm1660 = vcmp.lt.s32.totalorder %v1658, 576
        %v1661 = vsel %vm1659, 1, 0
        %v1662 = vsel %vm1660, 1, 0
        %vm1663 = vcmp.eq.s32.totalorder %v1661, 1
        %vm1664 = vcmp.eq.s32.totalorder %v1662, 1
        %vm1665 = vmpackc.low %vm1664, %vm1663
        %v1666 = vsel %vm1665, %v1647, 0
        %v1667 = vsel %vm1665, %v1648, 0
        %v1668 = vsel %vm1665, %v1649, 0
        %v1669 = vsel %vm1665, %v1650, 0
        %v1670 = vsel %vm1665, %v1651, 0
        %v1671 = vsel %vm1665, %v1652, 0
        %v1672 = vsel %vm1665, %v1653, 0
        %v1673 = vsel %vm1665, %v1654, 0
        %v1674 = vunpack.c.l.bf16 %v1666
        %v1675 = vunpack.c.h.bf16 %v1666
        %v1676 = vunpack.c.l.bf16 %v1667
        %v1677 = vunpack.c.h.bf16 %v1667
        %v1678 = vunpack.c.l.bf16 %v1668
        %v1679 = vunpack.c.h.bf16 %v1668
        %v1680 = vunpack.c.l.bf16 %v1669
        %v1681 = vunpack.c.h.bf16 %v1669
        %v1682 = vunpack.c.l.bf16 %v1670
        %v1683 = vunpack.c.h.bf16 %v1670
        %v1684 = vunpack.c.l.bf16 %v1671
        %v1685 = vunpack.c.h.bf16 %v1671
        %v1686 = vunpack.c.l.bf16 %v1672
        %v1687 = vunpack.c.h.bf16 %v1672
        %v1688 = vunpack.c.l.bf16 %v1673
        %v1689 = vunpack.c.h.bf16 %v1673
        %v1690 = vadd.f32 %v1674, %v1675
        %1691 = vadd.xlane.f32.xlu0 %v1690
        %v1692 = vpop.xlane.xlu0 %1691
        %v1693 = vadd.f32 %v1676, %v1677
        %1694 = vadd.xlane.f32.xlu0 %v1693
        %v1695 = vpop.xlane.xlu0 %1694
        %v1696 = vadd.f32 %v1678, %v1679
        %1697 = vadd.xlane.f32.xlu0 %v1696
        %v1698 = vpop.xlane.xlu0 %1697
        %v1699 = vadd.f32 %v1680, %v1681
        %1700 = vadd.xlane.f32.xlu0 %v1699
        %v1701 = vpop.xlane.xlu0 %1700
        %v1702 = vadd.f32 %v1682, %v1683
        %1703 = vadd.xlane.f32.xlu0 %v1702
        %v1704 = vpop.xlane.xlu0 %1703
        %v1705 = vadd.f32 %v1684, %v1685
        %1706 = vadd.xlane.f32.xlu0 %v1705
        %v1707 = vpop.xlane.xlu0 %1706
        %v1708 = vadd.f32 %v1686, %v1687
        %1709 = vadd.xlane.f32.xlu0 %v1708
        %v1710 = vpop.xlane.xlu0 %1709
        %v1711 = vadd.f32 %v1688, %v1689
        %1712 = vadd.xlane.f32.xlu0 %v1711
        %v1713 = vpop.xlane.xlu0 %1712
        %v1714 = vadd.f32 %v1129, %v1692
        %v1715 = vadd.f32 %v1130, %v1695
        %v1716 = vadd.f32 %v1131, %v1698
        %v1717 = vadd.f32 %v1132, %v1701
        %v1718 = vadd.f32 %v1133, %v1704
        %v1719 = vadd.f32 %v1134, %v1707
        %v1720 = vadd.f32 %v1135, %v1710
        %v1721 = vadd.f32 %v1136, %v1713
        %v1722 = vld [vmem:[#allocation2] sm:$0x3]
        %v1731 = vperm.slane %v1714, %v1067
        %v1732 = vadd.s32 %v1067, 4294967288
        %v1733 = vperm.slane %v1715, %v1732
        %vm1734 = vcmask 130112
        %v1735 = vsel %vm1734, %v1733, %v1731
        %v1736 = vadd.s32 %v1067, 4294967280
        %v1737 = vperm.slane %v1716, %v1736
        %vm1738 = vcmask 195712
        %v1739 = vsel %vm1738, %v1737, %v1735
        %v1740 = vadd.s32 %v1067, 4294967272
        %v1741 = vperm.slane %v1717, %v1740
        %vm1742 = vcmask 261312
        %v1743 = vsel %vm1742, %v1741, %v1739
        %v1744 = vperm.slane %v1718, %v1067
        %v1745 = vperm.slane %v1719, %v1732
        %v1746 = vsel %vm1734, %v1745, %v1744
        %v1747 = vperm.slane %v1720, %v1736
        %v1748 = vsel %vm1738, %v1747, %v1746
        %v1749 = vperm.slane %v1721, %v1740
        %v1750 = vsel %vm1742, %v1749, %v1748
        %vm1751 = vcmask 1041409
        %v1752 = vsel %vm1751, %v1750, %v1743
        %v1754 = vadd.f32 %v1722, %v1752
        %vm1755 = vcmask 254976
        %1756 = vst.msk [vmem:[#allocation2] sm:$0x3] %vm1755, %v1754
        %p1757 = scmp.eq.s32.totalorder %s26, 1
        // Predicated region
        $region99: #{tpu_custom_call.1} parent=81 // pred_check
          %p1758 = pneg %p1757
        $region100: #{tpu_custom_call.1} parent=81 // pred_check_branch
          %1760 = sbr.rel (%p1758) target = $region102
        $region101: #{tpu_custom_call.1} parent=81 // pred_region
          %v1761 = vld [vmem:[#allocation2] sm:$0x3]
          %v1762 = vmul.f32 %v1761, 0.0017361111
          %v1763 = vpack.c.bf16 %v1762, %v1762
          %v1764 = vld [vmem:[#allocation4] sm:$0xff]
          %v1765 = vld [vmem:[#allocation4 + $0x8] sm:$0xff]
          %v1766 = vld [vmem:[#allocation4 + $0x10] sm:$0xff]
          %v1767 = vld [vmem:[#allocation4 + $0x18] sm:$0xff]
          %v1768 = vld [vmem:[#allocation4 + $0x20] sm:$0xff]
          %v1769 = vld [vmem:[#allocation4 + $0x28] sm:$0xff]
          %v1770 = vld [vmem:[#allocation4 + $0x30] sm:$0xff]
          %v1771 = vld [vmem:[#allocation4 + $0x38] sm:$0xff]
          %v1772 = vld [vmem:[#allocation4 + $0x40] sm:$0xff]
          %v1773 = vld [vmem:[#allocation4 + $0x48] sm:$0xff]
          %v1774 = vld [vmem:[#allocation4 + $0x50] sm:$0xff]
          %v1775 = vld [vmem:[#allocation4 + $0x58] sm:$0xff]
          %v1776 = vld [vmem:[#allocation4 + $0x60] sm:$0xff]
          %v1777 = vld [vmem:[#allocation4 + $0x68] sm:$0xff]
          %v1778 = vld [vmem:[#allocation4 + $0x70] sm:$0xff]
          %v1779 = vld [vmem:[#allocation4 + $0x78] sm:$0xff]
          %v1780 = vld [vmem:[%s4] sm:$0xff]
          %v1782 = vperm.slane %v1780, 0
          %v1783 = vperm.slane %v1780, 1
          %v1784 = vperm.slane %v1780, 2
          %v1785 = vperm.slane %v1780, 3
          %v1786 = vperm.slane %v1780, 4
          %v1787 = vperm.slane %v1780, 5
          %v1788 = vperm.slane %v1780, 6
          %v1789 = vperm.slane %v1780, 7
          %v1814 = vunpack.c.l.b16 %v1764
          %v1815 = vunpack.c.h.b16 %v1764
          %v1816 = vunpack.c.l.b16 %v1765
          %v1817 = vunpack.c.h.b16 %v1765
          %v1818 = vunpack.c.l.b16 %v1766
          %v1819 = vunpack.c.h.b16 %v1766
          %v1820 = vunpack.c.l.b16 %v1767
          %v1821 = vunpack.c.h.b16 %v1767
          %v1822 = vunpack.c.l.b16 %v1768
          %v1823 = vunpack.c.h.b16 %v1768
          %v1824 = vunpack.c.l.b16 %v1769
          %v1825 = vunpack.c.h.b16 %v1769
          %v1826 = vunpack.c.l.b16 %v1770
          %v1827 = vunpack.c.h.b16 %v1770
          %v1828 = vunpack.c.l.b16 %v1771
          %v1829 = vunpack.c.h.b16 %v1771
          %v1830 = vunpack.c.l.b16 %v1772
          %v1831 = vunpack.c.h.b16 %v1772
          %v1832 = vunpack.c.l.b16 %v1773
          %v1833 = vunpack.c.h.b16 %v1773
          %v1834 = vunpack.c.l.b16 %v1774
          %v1835 = vunpack.c.h.b16 %v1774
          %v1836 = vunpack.c.l.b16 %v1775
          %v1837 = vunpack.c.h.b16 %v1775
          %v1838 = vunpack.c.l.b16 %v1776
          %v1839 = vunpack.c.h.b16 %v1776
          %v1840 = vunpack.c.l.b16 %v1777
          %v1841 = vunpack.c.h.b16 %v1777
          %v1842 = vunpack.c.l.b16 %v1778
          %v1843 = vunpack.c.h.b16 %v1778
          %v1844 = vunpack.c.l.b16 %v1779
          %v1845 = vunpack.c.h.b16 %v1779
          %v1846 = vpack.c.b16 %v1822, %v1814
          %v1847 = vpack.c.b16 %v1823, %v1815
          %v1848 = vpack.c.b16 %v1824, %v1816
          %v1849 = vpack.c.b16 %v1825, %v1817
          %v1850 = vpack.c.b16 %v1826, %v1818
          %v1851 = vpack.c.b16 %v1827, %v1819
          %v1852 = vpack.c.b16 %v1828, %v1820
          %v1853 = vpack.c.b16 %v1829, %v1821
          %v1854 = vpack.c.b16 %v1838, %v1830
          %v1855 = vpack.c.b16 %v1839, %v1831
          %v1856 = vpack.c.b16 %v1840, %v1832
          %v1857 = vpack.c.b16 %v1841, %v1833
          %v1858 = vpack.c.b16 %v1842, %v1834
          %v1859 = vpack.c.b16 %v1843, %v1835
          %v1860 = vpack.c.b16 %v1844, %v1836
          %v1861 = vpack.c.b16 %v1845, %v1837
          %vm1878 = vcmask 261120
          %v1880 = vsel %vm1878, %v1763, 0
          %1882 = vmatpush.bf16.msra.mxu0 0
          %1883 = vmatpush.bf16.msra.mxu0 0
          %1884 = vmatpush.bf16.msra.mxu0 0
          %1885 = vmatpush.bf16.msra.mxu0 0
          %1886 = vmatpush.bf16.msra.mxu0 0
          %1887 = vmatpush.bf16.msra.mxu0 0
          %1888 = vmatpush.bf16.msra.mxu0 %v1854
          %1889 = vmatpush.bf16.msra.mxu0 %v1846
          %1890 = vmatmul.bf16.gmra.mxu0 %v1880
          %v1891 = vpop.f32.mrf.mxu0
          %v1892 = vadd.f32 %v1782, %v1891
          %v1893 = vpop.f32.mrf.mxu0
          %1894 = vdwg.mxu0
          %1895 = vmatpush.bf16.msra.mxu0 0
          %1896 = vmatpush.bf16.msra.mxu0 0
          %1897 = vmatpush.bf16.msra.mxu0 0
          %1898 = vmatpush.bf16.msra.mxu0 0
          %1899 = vmatpush.bf16.msra.mxu0 0
          %1900 = vmatpush.bf16.msra.mxu0 0
          %1901 = vmatpush.bf16.msra.mxu0 %v1855
          %1902 = vmatpush.bf16.msra.mxu0 %v1847
          %1903 = vmatmul.bf16.gmra.mxu0 %v1880
          %v1904 = vpop.f32.mrf.mxu0
          %v1905 = vadd.f32 %v1783, %v1904
          %v1906 = vpop.f32.mrf.mxu0
          %1907 = vdwg.mxu0
          %1908 = vmatpush.bf16.msra.mxu0 0
          %1909 = vmatpush.bf16.msra.mxu0 0
          %1910 = vmatpush.bf16.msra.mxu0 0
          %1911 = vmatpush.bf16.msra.mxu0 0
          %1912 = vmatpush.bf16.msra.mxu0 0
          %1913 = vmatpush.bf16.msra.mxu0 0
          %1914 = vmatpush.bf16.msra.mxu0 %v1856
          %1915 = vmatpush.bf16.msra.mxu0 %v1848
          %1916 = vmatmul.bf16.gmra.mxu0 %v1880
          %v1917 = vpop.f32.mrf.mxu0
          %v1918 = vadd.f32 %v1784, %v1917
          %v1919 = vpop.f32.mrf.mxu0
          %1920 = vdwg.mxu0
          %1921 = vmatpush.bf16.msra.mxu0 0
          %1922 = vmatpush.bf16.msra.mxu0 0
          %1923 = vmatpush.bf16.msra.mxu0 0
          %1924 = vmatpush.bf16.msra.mxu0 0
          %1925 = vmatpush.bf16.msra.mxu0 0
          %1926 = vmatpush.bf16.msra.mxu0 0
          %1927 = vmatpush.bf16.msra.mxu0 %v1857
          %1928 = vmatpush.bf16.msra.mxu0 %v1849
          %1929 = vmatmul.bf16.gmra.mxu0 %v1880
          %v1930 = vpop.f32.mrf.mxu0
          %v1931 = vadd.f32 %v1785, %v1930
          %v1932 = vpop.f32.mrf.mxu0
          %1933 = vdwg.mxu0
          %1934 = vmatpush.bf16.msra.mxu0 0
          %1935 = vmatpush.bf16.msra.mxu0 0
          %1936 = vmatpush.bf16.msra.mxu0 0
          %1937 = vmatpush.bf16.msra.mxu0 0
          %1938 = vmatpush.bf16.msra.mxu0 0
          %1939 = vmatpush.bf16.msra.mxu0 0
          %1940 = vmatpush.bf16.msra.mxu0 %v1858
          %1941 = vmatpush.bf16.msra.mxu0 %v1850
          %1942 = vmatmul.bf16.gmra.mxu0 %v1880
          %v1943 = vpop.f32.mrf.mxu0
          %v1944 = vadd.f32 %v1786, %v1943
          %v1945 = vpop.f32.mrf.mxu0
          %1946 = vdwg.mxu0
          %1947 = vmatpush.bf16.msra.mxu0 0
          %1948 = vmatpush.bf16.msra.mxu0 0
          %1949 = vmatpush.bf16.msra.mxu0 0
          %1950 = vmatpush.bf16.msra.mxu0 0
          %1951 = vmatpush.bf16.msra.mxu0 0
          %1952 = vmatpush.bf16.msra.mxu0 0
          %1953 = vmatpush.bf16.msra.mxu0 %v1859
          %1954 = vmatpush.bf16.msra.mxu0 %v1851
          %1955 = vmatmul.bf16.gmra.mxu0 %v1880
          %v1956 = vpop.f32.mrf.mxu0
          %v1957 = vadd.f32 %v1787, %v1956
          %v1958 = vpop.f32.mrf.mxu0
          %1959 = vdwg.mxu0
          %1960 = vmatpush.bf16.msra.mxu0 0
          %1961 = vmatpush.bf16.msra.mxu0 0
          %1962 = vmatpush.bf16.msra.mxu0 0
          %1963 = vmatpush.bf16.msra.mxu0 0
          %1964 = vmatpush.bf16.msra.mxu0 0
          %1965 = vmatpush.bf16.msra.mxu0 0
          %1966 = vmatpush.bf16.msra.mxu0 %v1860
          %1967 = vmatpush.bf16.msra.mxu0 %v1852
          %1968 = vmatmul.bf16.gmra.mxu0 %v1880
          %v1969 = vpop.f32.mrf.mxu0
          %v1970 = vadd.f32 %v1788, %v1969
          %v1971 = vpop.f32.mrf.mxu0
          %1972 = vdwg.mxu0
          %1973 = vmatpush.bf16.msra.mxu0 0
          %1974 = vmatpush.bf16.msra.mxu0 0
          %1975 = vmatpush.bf16.msra.mxu0 0
          %1976 = vmatpush.bf16.msra.mxu0 0
          %1977 = vmatpush.bf16.msra.mxu0 0
          %1978 = vmatpush.bf16.msra.mxu0 0
          %1979 = vmatpush.bf16.msra.mxu0 %v1861
          %1980 = vmatpush.bf16.msra.mxu0 %v1853
          %1981 = vmatmul.bf16.gmra.mxu0 %v1880
          %v1982 = vpop.f32.mrf.mxu0
          %v1983 = vadd.f32 %v1789, %v1982
          %v1984 = vpop.f32.mrf.mxu0
          %1985 = vdwg.mxu0
          %v1986 = vmul.f32 %v1892, 0.5
          %v1987 = vmul.f32 %v1905, 0.5
          %v1988 = vmul.f32 %v1918, 0.5
          %v1989 = vmul.f32 %v1931, 0.5
          %v1990 = vmul.f32 %v1944, 0.5
          %v1991 = vmul.f32 %v1957, 0.5
          %v1992 = vmul.f32 %v1970, 0.5
          %v1993 = vmul.f32 %v1983, 0.5
          %v1994 = vmul.f32 %v1892, 0.70710677
          %v1995 = vmul.f32 %v1905, 0.70710677
          %v1996 = vmul.f32 %v1918, 0.70710677
          %v1997 = vmul.f32 %v1931, 0.70710677
          %v1998 = vmul.f32 %v1944, 0.70710677
          %v1999 = vmul.f32 %v1957, 0.70710677
          %v2000 = vmul.f32 %v1970, 0.70710677
          %v2001 = vmul.f32 %v1983, 0.70710677
          %v2002 = vmul.f32 %v1994, %v1994
          %v2003 = vmin.f32 16.0, %v2002
          %v2004 = vmul.f32 %v2003, 2.1237322e-06
          %v2005 = vadd.f32 %v2004, 0.00028619796
          %v2006 = vmul.f32 %v2003, %v2005
          %v2007 = vadd.f32 %v2006, 0.0036580483
          %v2008 = vmul.f32 %v2003, %v2007
          %v2009 = vadd.f32 %v2008, 0.05243302
          %v2010 = vmul.f32 %v2003, %v2009
          %v2011 = vadd.f32 %v2010, 0.18741608
          %v2012 = vmul.f32 %v2003, %v2011
          %v2013 = vadd.f32 %v2012, 1.1283791
          %v2014 = vmul.f32 %v1994, %v2013
          %v2015 = vmul.f32 %v2003, 3.8918573e-05
          %v2016 = vadd.f32 %v2015, 0.001143296
          %v2017 = vmul.f32 %v2003, %v2016
          %v2018 = vadd.f32 %v2017, 0.014752088
          %v2019 = vmul.f32 %v2003, %v2018
          %v2020 = vadd.f32 %v2019, 0.112945676
          %v2021 = vmul.f32 %v2003, %v2020
          %v2022 = vadd.f32 %v2021, 0.4994258
          %v2023 = vmul.f32 %v2003, %v2022
          %v2024 = vadd.f32 %v2023, 1.0
          %v2025 = vrcp.pop %v2024
          %v2026 = vmul.f32 %v2024, %v2025
          %v2027 = vsub.f32 1.0, %v2026
          %v2028 = vmul.f32 %v2025, %v2027
          %v2029 = vadd.f32 %v2025, %v2028
          %vm2030 = vweird.f32 %v2024
          %vm2031 = vweird.f32 %v2025
          %vm2032 = vmor %vm2030, %vm2031
          %v2033 = vsel %vm2032, %v2025, %v2029
          %v2034 = vand.u32 2147483647, %v2024
          %vm2035 = vcmp.eq.f32.partialorder %v2034, 8.507059e+37
          %v2036 = vand.u32 %v2024, 2147483648
          %v2037 = vor.u32 1.1754944e-38, %v2036
          %v2038 = vsel %vm2035, %v2037, %v2033
          %v2039 = vmul.f32 %v2014, %v2038
          %v2040 = vmin.f32 %v2039, 1.0
          %v2041 = vmax.f32 %v2040, -1.0
          %v2042 = vmul.f32 %v1995, %v1995
          %v2043 = vmin.f32 16.0, %v2042
          %v2044 = vmul.f32 %v2043, 2.1237322e-06
          %v2045 = vadd.f32 %v2044, 0.00028619796
          %v2046 = vmul.f32 %v2043, %v2045
          %v2047 = vadd.f32 %v2046, 0.0036580483
          %v2048 = vmul.f32 %v2043, %v2047
          %v2049 = vadd.f32 %v2048, 0.05243302
          %v2050 = vmul.f32 %v2043, %v2049
          %v2051 = vadd.f32 %v2050, 0.18741608
          %v2052 = vmul.f32 %v2043, %v2051
          %v2053 = vadd.f32 %v2052, 1.1283791
          %v2054 = vmul.f32 %v1995, %v2053
          %v2055 = vmul.f32 %v2043, 3.8918573e-05
          %v2056 = vadd.f32 %v2055, 0.001143296
          %v2057 = vmul.f32 %v2043, %v2056
          %v2058 = vadd.f32 %v2057, 0.014752088
          %v2059 = vmul.f32 %v2043, %v2058
          %v2060 = vadd.f32 %v2059, 0.112945676
          %v2061 = vmul.f32 %v2043, %v2060
          %v2062 = vadd.f32 %v2061, 0.4994258
          %v2063 = vmul.f32 %v2043, %v2062
          %v2064 = vadd.f32 %v2063, 1.0
          %v2065 = vrcp.pop %v2064
          %v2066 = vmul.f32 %v2064, %v2065
          %v2067 = vsub.f32 1.0, %v2066
          %v2068 = vmul.f32 %v2065, %v2067
          %v2069 = vadd.f32 %v2065, %v2068
          %vm2070 = vweird.f32 %v2064
          %vm2071 = vweird.f32 %v2065
          %vm2072 = vmor %vm2070, %vm2071
          %v2073 = vsel %vm2072, %v2065, %v2069
          %v2074 = vand.u32 2147483647, %v2064
          %vm2075 = vcmp.eq.f32.partialorder %v2074, 8.507059e+37
          %v2076 = vand.u32 %v2064, 2147483648
          %v2077 = vor.u32 1.1754944e-38, %v2076
          %v2078 = vsel %vm2075, %v2077, %v2073
          %v2079 = vmul.f32 %v2054, %v2078
          %v2080 = vmin.f32 %v2079, 1.0
          %v2081 = vmax.f32 %v2080, -1.0
          %v2082 = vmul.f32 %v1996, %v1996
          %v2083 = vmin.f32 16.0, %v2082
          %v2084 = vmul.f32 %v2083, 2.1237322e-06
          %v2085 = vadd.f32 %v2084, 0.00028619796
          %v2086 = vmul.f32 %v2083, %v2085
          %v2087 = vadd.f32 %v2086, 0.0036580483
          %v2088 = vmul.f32 %v2083, %v2087
          %v2089 = vadd.f32 %v2088, 0.05243302
          %v2090 = vmul.f32 %v2083, %v2089
          %v2091 = vadd.f32 %v2090, 0.18741608
          %v2092 = vmul.f32 %v2083, %v2091
          %v2093 = vadd.f32 %v2092, 1.1283791
          %v2094 = vmul.f32 %v1996, %v2093
          %v2095 = vmul.f32 %v2083, 3.8918573e-05
          %v2096 = vadd.f32 %v2095, 0.001143296
          %v2097 = vmul.f32 %v2083, %v2096
          %v2098 = vadd.f32 %v2097, 0.014752088
          %v2099 = vmul.f32 %v2083, %v2098
          %v2100 = vadd.f32 %v2099, 0.112945676
          %v2101 = vmul.f32 %v2083, %v2100
          %v2102 = vadd.f32 %v2101, 0.4994258
          %v2103 = vmul.f32 %v2083, %v2102
          %v2104 = vadd.f32 %v2103, 1.0
          %v2105 = vrcp.pop %v2104
          %v2106 = vmul.f32 %v2104, %v2105
          %v2107 = vsub.f32 1.0, %v2106
          %v2108 = vmul.f32 %v2105, %v2107
          %v2109 = vadd.f32 %v2105, %v2108
          %vm2110 = vweird.f32 %v2104
          %vm2111 = vweird.f32 %v2105
          %vm2112 = vmor %vm2110, %vm2111
          %v2113 = vsel %vm2112, %v2105, %v2109
          %v2114 = vand.u32 2147483647, %v2104
          %vm2115 = vcmp.eq.f32.partialorder %v2114, 8.507059e+37
          %v2116 = vand.u32 %v2104, 2147483648
          %v2117 = vor.u32 1.1754944e-38, %v2116
          %v2118 = vsel %vm2115, %v2117, %v2113
          %v2119 = vmul.f32 %v2094, %v2118
          %v2120 = vmin.f32 %v2119, 1.0
          %v2121 = vmax.f32 %v2120, -1.0
          %v2122 = vmul.f32 %v1997, %v1997
          %v2123 = vmin.f32 16.0, %v2122
          %v2124 = vmul.f32 %v2123, 2.1237322e-06
          %v2125 = vadd.f32 %v2124, 0.00028619796
          %v2126 = vmul.f32 %v2123, %v2125
          %v2127 = vadd.f32 %v2126, 0.0036580483
          %v2128 = vmul.f32 %v2123, %v2127
          %v2129 = vadd.f32 %v2128, 0.05243302
          %v2130 = vmul.f32 %v2123, %v2129
          %v2131 = vadd.f32 %v2130, 0.18741608
          %v2132 = vmul.f32 %v2123, %v2131
          %v2133 = vadd.f32 %v2132, 1.1283791
          %v2134 = vmul.f32 %v1997, %v2133
          %v2135 = vmul.f32 %v2123, 3.8918573e-05
          %v2136 = vadd.f32 %v2135, 0.001143296
          %v2137 = vmul.f32 %v2123, %v2136
          %v2138 = vadd.f32 %v2137, 0.014752088
          %v2139 = vmul.f32 %v2123, %v2138
          %v2140 = vadd.f32 %v2139, 0.112945676
          %v2141 = vmul.f32 %v2123, %v2140
          %v2142 = vadd.f32 %v2141, 0.4994258
          %v2143 = vmul.f32 %v2123, %v2142
          %v2144 = vadd.f32 %v2143, 1.0
          %v2145 = vrcp.pop %v2144
          %v2146 = vmul.f32 %v2144, %v2145
          %v2147 = vsub.f32 1.0, %v2146
          %v2148 = vmul.f32 %v2145, %v2147
          %v2149 = vadd.f32 %v2145, %v2148
          %vm2150 = vweird.f32 %v2144
          %vm2151 = vweird.f32 %v2145
          %vm2152 = vmor %vm2150, %vm2151
          %v2153 = vsel %vm2152, %v2145, %v2149
          %v2154 = vand.u32 2147483647, %v2144
          %vm2155 = vcmp.eq.f32.partialorder %v2154, 8.507059e+37
          %v2156 = vand.u32 %v2144, 2147483648
          %v2157 = vor.u32 1.1754944e-38, %v2156
          %v2158 = vsel %vm2155, %v2157, %v2153
          %v2159 = vmul.f32 %v2134, %v2158
          %v2160 = vmin.f32 %v2159, 1.0
          %v2161 = vmax.f32 %v2160, -1.0
          %v2162 = vmul.f32 %v1998, %v1998
          %v2163 = vmin.f32 16.0, %v2162
          %v2164 = vmul.f32 %v2163, 2.1237322e-06
          %v2165 = vadd.f32 %v2164, 0.00028619796
          %v2166 = vmul.f32 %v2163, %v2165
          %v2167 = vadd.f32 %v2166, 0.0036580483
          %v2168 = vmul.f32 %v2163, %v2167
          %v2169 = vadd.f32 %v2168, 0.05243302
          %v2170 = vmul.f32 %v2163, %v2169
          %v2171 = vadd.f32 %v2170, 0.18741608
          %v2172 = vmul.f32 %v2163, %v2171
          %v2173 = vadd.f32 %v2172, 1.1283791
          %v2174 = vmul.f32 %v1998, %v2173
          %v2175 = vmul.f32 %v2163, 3.8918573e-05
          %v2176 = vadd.f32 %v2175, 0.001143296
          %v2177 = vmul.f32 %v2163, %v2176
          %v2178 = vadd.f32 %v2177, 0.014752088
          %v2179 = vmul.f32 %v2163, %v2178
          %v2180 = vadd.f32 %v2179, 0.112945676
          %v2181 = vmul.f32 %v2163, %v2180
          %v2182 = vadd.f32 %v2181, 0.4994258
          %v2183 = vmul.f32 %v2163, %v2182
          %v2184 = vadd.f32 %v2183, 1.0
          %v2185 = vrcp.pop %v2184
          %v2186 = vmul.f32 %v2184, %v2185
          %v2187 = vsub.f32 1.0, %v2186
          %v2188 = vmul.f32 %v2185, %v2187
          %v2189 = vadd.f32 %v2185, %v2188
          %vm2190 = vweird.f32 %v2184
          %vm2191 = vweird.f32 %v2185
          %vm2192 = vmor %vm2190, %vm2191
          %v2193 = vsel %vm2192, %v2185, %v2189
          %v2194 = vand.u32 2147483647, %v2184
          %vm2195 = vcmp.eq.f32.partialorder %v2194, 8.507059e+37
          %v2196 = vand.u32 %v2184, 2147483648
          %v2197 = vor.u32 1.1754944e-38, %v2196
          %v2198 = vsel %vm2195, %v2197, %v2193
          %v2199 = vmul.f32 %v2174, %v2198
          %v2200 = vmin.f32 %v2199, 1.0
          %v2201 = vmax.f32 %v2200, -1.0
          %v2202 = vmul.f32 %v1999, %v1999
          %v2203 = vmin.f32 16.0, %v2202
          %v2204 = vmul.f32 %v2203, 2.1237322e-06
          %v2205 = vadd.f32 %v2204, 0.00028619796
          %v2206 = vmul.f32 %v2203, %v2205
          %v2207 = vadd.f32 %v2206, 0.0036580483
          %v2208 = vmul.f32 %v2203, %v2207
          %v2209 = vadd.f32 %v2208, 0.05243302
          %v2210 = vmul.f32 %v2203, %v2209
          %v2211 = vadd.f32 %v2210, 0.18741608
          %v2212 = vmul.f32 %v2203, %v2211
          %v2213 = vadd.f32 %v2212, 1.1283791
          %v2214 = vmul.f32 %v1999, %v2213
          %v2215 = vmul.f32 %v2203, 3.8918573e-05
          %v2216 = vadd.f32 %v2215, 0.001143296
          %v2217 = vmul.f32 %v2203, %v2216
          %v2218 = vadd.f32 %v2217, 0.014752088
          %v2219 = vmul.f32 %v2203, %v2218
          %v2220 = vadd.f32 %v2219, 0.112945676
          %v2221 = vmul.f32 %v2203, %v2220
          %v2222 = vadd.f32 %v2221, 0.4994258
          %v2223 = vmul.f32 %v2203, %v2222
          %v2224 = vadd.f32 %v2223, 1.0
          %v2225 = vrcp.pop %v2224
          %v2226 = vmul.f32 %v2224, %v2225
          %v2227 = vsub.f32 1.0, %v2226
          %v2228 = vmul.f32 %v2225, %v2227
          %v2229 = vadd.f32 %v2225, %v2228
          %vm2230 = vweird.f32 %v2224
          %vm2231 = vweird.f32 %v2225
          %vm2232 = vmor %vm2230, %vm2231
          %v2233 = vsel %vm2232, %v2225, %v2229
          %v2234 = vand.u32 2147483647, %v2224
          %vm2235 = vcmp.eq.f32.partialorder %v2234, 8.507059e+37
          %v2236 = vand.u32 %v2224, 2147483648
          %v2237 = vor.u32 1.1754944e-38, %v2236
          %v2238 = vsel %vm2235, %v2237, %v2233
          %v2239 = vmul.f32 %v2214, %v2238
          %v2240 = vmin.f32 %v2239, 1.0
          %v2241 = vmax.f32 %v2240, -1.0
          %v2242 = vmul.f32 %v2000, %v2000
          %v2243 = vmin.f32 16.0, %v2242
          %v2244 = vmul.f32 %v2243, 2.1237322e-06
          %v2245 = vadd.f32 %v2244, 0.00028619796
          %v2246 = vmul.f32 %v2243, %v2245
          %v2247 = vadd.f32 %v2246, 0.0036580483
          %v2248 = vmul.f32 %v2243, %v2247
          %v2249 = vadd.f32 %v2248, 0.05243302
          %v2250 = vmul.f32 %v2243, %v2249
          %v2251 = vadd.f32 %v2250, 0.18741608
          %v2252 = vmul.f32 %v2243, %v2251
          %v2253 = vadd.f32 %v2252, 1.1283791
          %v2254 = vmul.f32 %v2000, %v2253
          %v2255 = vmul.f32 %v2243, 3.8918573e-05
          %v2256 = vadd.f32 %v2255, 0.001143296
          %v2257 = vmul.f32 %v2243, %v2256
          %v2258 = vadd.f32 %v2257, 0.014752088
          %v2259 = vmul.f32 %v2243, %v2258
          %v2260 = vadd.f32 %v2259, 0.112945676
          %v2261 = vmul.f32 %v2243, %v2260
          %v2262 = vadd.f32 %v2261, 0.4994258
          %v2263 = vmul.f32 %v2243, %v2262
          %v2264 = vadd.f32 %v2263, 1.0
          %v2265 = vrcp.pop %v2264
          %v2266 = vmul.f32 %v2264, %v2265
          %v2267 = vsub.f32 1.0, %v2266
          %v2268 = vmul.f32 %v2265, %v2267
          %v2269 = vadd.f32 %v2265, %v2268
          %vm2270 = vweird.f32 %v2264
          %vm2271 = vweird.f32 %v2265
          %vm2272 = vmor %vm2270, %vm2271
          %v2273 = vsel %vm2272, %v2265, %v2269
          %v2274 = vand.u32 2147483647, %v2264
          %vm2275 = vcmp.eq.f32.partialorder %v2274, 8.507059e+37
          %v2276 = vand.u32 %v2264, 2147483648
          %v2277 = vor.u32 1.1754944e-38, %v2276
          %v2278 = vsel %vm2275, %v2277, %v2273
          %v2279 = vmul.f32 %v2254, %v2278
          %v2280 = vmin.f32 %v2279, 1.0
          %v2281 = vmax.f32 %v2280, -1.0
          %v2282 = vmul.f32 %v2001, %v2001
          %v2283 = vmin.f32 16.0, %v2282
          %v2284 = vmul.f32 %v2283, 2.1237322e-06
          %v2285 = vadd.f32 %v2284, 0.00028619796
          %v2286 = vmul.f32 %v2283, %v2285
          %v2287 = vadd.f32 %v2286, 0.0036580483
          %v2288 = vmul.f32 %v2283, %v2287
          %v2289 = vadd.f32 %v2288, 0.05243302
          %v2290 = vmul.f32 %v2283, %v2289
          %v2291 = vadd.f32 %v2290, 0.18741608
          %v2292 = vmul.f32 %v2283, %v2291
          %v2293 = vadd.f32 %v2292, 1.1283791
          %v2294 = vmul.f32 %v2001, %v2293
          %v2295 = vmul.f32 %v2283, 3.8918573e-05
          %v2296 = vadd.f32 %v2295, 0.001143296
          %v2297 = vmul.f32 %v2283, %v2296
          %v2298 = vadd.f32 %v2297, 0.014752088
          %v2299 = vmul.f32 %v2283, %v2298
          %v2300 = vadd.f32 %v2299, 0.112945676
          %v2301 = vmul.f32 %v2283, %v2300
          %v2302 = vadd.f32 %v2301, 0.4994258
          %v2303 = vmul.f32 %v2283, %v2302
          %v2304 = vadd.f32 %v2303, 1.0
          %v2305 = vrcp.pop %v2304
          %v2306 = vmul.f32 %v2304, %v2305
          %v2307 = vsub.f32 1.0, %v2306
          %v2308 = vmul.f32 %v2305, %v2307
          %v2309 = vadd.f32 %v2305, %v2308
          %vm2310 = vweird.f32 %v2304
          %vm2311 = vweird.f32 %v2305
          %vm2312 = vmor %vm2310, %vm2311
          %v2313 = vsel %vm2312, %v2305, %v2309
          %v2314 = vand.u32 2147483647, %v2304
          %vm2315 = vcmp.eq.f32.partialorder %v2314, 8.507059e+37
          %v2316 = vand.u32 %v2304, 2147483648
          %v2317 = vor.u32 1.1754944e-38, %v2316
          %v2318 = vsel %vm2315, %v2317, %v2313
          %v2319 = vmul.f32 %v2294, %v2318
          %v2320 = vmin.f32 %v2319, 1.0
          %v2321 = vmax.f32 %v2320, -1.0
          %v2322 = vadd.f32 %v2041, 1.0
          %v2323 = vadd.f32 %v2081, 1.0
          %v2324 = vadd.f32 %v2121, 1.0
          %v2325 = vadd.f32 %v2161, 1.0
          %v2326 = vadd.f32 %v2201, 1.0
          %v2327 = vadd.f32 %v2241, 1.0
          %v2328 = vadd.f32 %v2281, 1.0
          %v2329 = vadd.f32 %v2321, 1.0
          %v2330 = vmul.f32 %v1986, %v2322
          %v2331 = vmul.f32 %v1987, %v2323
          %v2332 = vmul.f32 %v1988, %v2324
          %v2333 = vmul.f32 %v1989, %v2325
          %v2334 = vmul.f32 %v1990, %v2326
          %v2335 = vmul.f32 %v1991, %v2327
          %v2336 = vmul.f32 %v1992, %v2328
          %v2337 = vmul.f32 %v1993, %v2329
          %v2338 = vpack.c.bf16 %v2330, %v2330
          %v2339 = vpack.c.bf16 %v2331, %v2331
          %v2340 = vpack.c.bf16 %v2332, %v2332
          %v2341 = vpack.c.bf16 %v2333, %v2333
          %v2342 = vpack.c.bf16 %v2334, %v2334
          %v2343 = vpack.c.bf16 %v2335, %v2335
          %v2344 = vpack.c.bf16 %v2336, %v2336
          %v2345 = vpack.c.bf16 %v2337, %v2337
          %v2346 = vld [vmem:[#allocation7] sm:$0xf]
          %v2347 = vld [vmem:[#allocation7 + $0x4] sm:$0xf]
          %v2348 = vld [vmem:[#allocation7 + $0x8] sm:$0xf]
          %v2349 = vld [vmem:[#allocation7 + $0xc] sm:$0xf]
          %v2350 = vld [vmem:[#allocation7 + $0x10] sm:$0xf]
          %v2351 = vld [vmem:[#allocation7 + $0x14] sm:$0xf]
          %v2352 = vld [vmem:[#allocation7 + $0x18] sm:$0xf]
          %v2353 = vld [vmem:[#allocation7 + $0x1c] sm:$0xf]
          %v2354 = vld [vmem:[#allocation7 + $0x20] sm:$0xf]
          %v2355 = vld [vmem:[#allocation7 + $0x24] sm:$0xf]
          %v2356 = vld [vmem:[#allocation7 + $0x28] sm:$0xf]
          %v2357 = vld [vmem:[#allocation7 + $0x2c] sm:$0xf]
          %v2358 = vld [vmem:[#allocation7 + $0x30] sm:$0xf]
          %v2359 = vld [vmem:[#allocation7 + $0x34] sm:$0xf]
          %v2360 = vld [vmem:[#allocation7 + $0x38] sm:$0xf]
          %v2361 = vld [vmem:[#allocation7 + $0x3c] sm:$0xf]
          %v2362 = vld [vmem:[#allocation7 + $0x40] sm:$0xf]
          %v2363 = vld [vmem:[#allocation7 + $0x44] sm:$0xf]
          %v2364 = vld [vmem:[#allocation7 + $0x48] sm:$0xf]
          %v2365 = vld [vmem:[#allocation7 + $0x4c] sm:$0xf]
          %v2366 = vld [vmem:[#allocation7 + $0x50] sm:$0xf]
          %v2367 = vld [vmem:[#allocation7 + $0x54] sm:$0xf]
          %v2368 = vld [vmem:[#allocation7 + $0x58] sm:$0xf]
          %v2369 = vld [vmem:[#allocation7 + $0x5c] sm:$0xf]
          %v2370 = vld [vmem:[#allocation7 + $0x60] sm:$0xf]
          %v2371 = vld [vmem:[#allocation7 + $0x64] sm:$0xf]
          %v2372 = vld [vmem:[#allocation7 + $0x68] sm:$0xf]
          %v2373 = vld [vmem:[#allocation7 + $0x6c] sm:$0xf]
          %v2374 = vld [vmem:[#allocation7 + $0x70] sm:$0xf]
          %v2375 = vld [vmem:[#allocation7 + $0x74] sm:$0xf]
          %v2376 = vld [vmem:[#allocation7 + $0x78] sm:$0xf]
          %v2377 = vld [vmem:[#allocation7 + $0x7c] sm:$0xf]
          %v2378 = vld [vmem:[#allocation7 + $0x80] sm:$0xf]
          %v2379 = vld [vmem:[#allocation7 + $0x84] sm:$0xf]
          %v2380 = vld [vmem:[#allocation7 + $0x88] sm:$0xf]
          %v2381 = vld [vmem:[#allocation7 + $0x8c] sm:$0xf]
          %v2382 = vld [vmem:[#allocation7 + $0x90] sm:$0xf]
          %v2383 = vld [vmem:[#allocation7 + $0x94] sm:$0xf]
          %v2384 = vld [vmem:[#allocation7 + $0x98] sm:$0xf]
          %v2385 = vld [vmem:[#allocation7 + $0x9c] sm:$0xf]
          %v2386 = vld [vmem:[#allocation7 + $0xa0] sm:$0xf]
          %v2387 = vld [vmem:[#allocation7 + $0xa4] sm:$0xf]
          %v2388 = vld [vmem:[#allocation7 + $0xa8] sm:$0xf]
          %v2389 = vld [vmem:[#allocation7 + $0xac] sm:$0xf]
          %v2390 = vld [vmem:[#allocation7 + $0xb0] sm:$0xf]
          %v2391 = vld [vmem:[#allocation7 + $0xb4] sm:$0xf]
          %v2392 = vld [vmem:[#allocation7 + $0xb8] sm:$0xf]
          %v2393 = vld [vmem:[#allocation7 + $0xbc] sm:$0xf]
          %v2394 = vld [vmem:[#allocation7 + $0xc0] sm:$0xf]
          %v2395 = vld [vmem:[#allocation7 + $0xc4] sm:$0xf]
          %v2396 = vld [vmem:[#allocation7 + $0xc8] sm:$0xf]
          %v2397 = vld [vmem:[#allocation7 + $0xcc] sm:$0xf]
          %v2398 = vld [vmem:[#allocation7 + $0xd0] sm:$0xf]
          %v2399 = vld [vmem:[#allocation7 + $0xd4] sm:$0xf]
          %v2400 = vld [vmem:[#allocation7 + $0xd8] sm:$0xf]
          %v2401 = vld [vmem:[#allocation7 + $0xdc] sm:$0xf]
          %v2402 = vld [vmem:[#allocation7 + $0xe0] sm:$0xf]
          %v2403 = vld [vmem:[#allocation7 + $0xe4] sm:$0xf]
          %v2404 = vld [vmem:[#allocation7 + $0xe8] sm:$0xf]
          %v2405 = vld [vmem:[#allocation7 + $0xec] sm:$0xf]
          %v2406 = vld [vmem:[#allocation7 + $0xf0] sm:$0xf]
          %v2407 = vld [vmem:[#allocation7 + $0xf4] sm:$0xf]
          %v2408 = vld [vmem:[#allocation7 + $0xf8] sm:$0xf]
          %v2409 = vld [vmem:[#allocation7 + $0xfc] sm:$0xf]
          %v2410 = vld [vmem:[#allocation7 + $0x100] sm:$0xf]
          %v2411 = vld [vmem:[#allocation7 + $0x104] sm:$0xf]
          %v2412 = vld [vmem:[#allocation7 + $0x108] sm:$0xf]
          %v2413 = vld [vmem:[#allocation7 + $0x10c] sm:$0xf]
          %v2414 = vld [vmem:[#allocation7 + $0x110] sm:$0xf]
          %v2415 = vld [vmem:[#allocation7 + $0x114] sm:$0xf]
          %v2416 = vld [vmem:[#allocation7 + $0x118] sm:$0xf]
          %v2417 = vld [vmem:[#allocation7 + $0x11c] sm:$0xf]
          %v2418 = vld [vmem:[#allocation7 + $0x120] sm:$0xf]
          %v2419 = vld [vmem:[#allocation7 + $0x124] sm:$0xf]
          %v2420 = vld [vmem:[#allocation7 + $0x128] sm:$0xf]
          %v2421 = vld [vmem:[#allocation7 + $0x12c] sm:$0xf]
          %v2422 = vld [vmem:[#allocation7 + $0x130] sm:$0xf]
          %v2423 = vld [vmem:[#allocation7 + $0x134] sm:$0xf]
          %v2424 = vld [vmem:[#allocation7 + $0x138] sm:$0xf]
          %v2425 = vld [vmem:[#allocation7 + $0x13c] sm:$0xf]
          %v2426 = vld [vmem:[#allocation7 + $0x140] sm:$0xf]
          %v2427 = vld [vmem:[#allocation7 + $0x144] sm:$0xf]
          %v2428 = vld [vmem:[#allocation7 + $0x148] sm:$0xf]
          %v2429 = vld [vmem:[#allocation7 + $0x14c] sm:$0xf]
          %v2430 = vld [vmem:[#allocation7 + $0x150] sm:$0xf]
          %v2431 = vld [vmem:[#allocation7 + $0x154] sm:$0xf]
          %v2432 = vld [vmem:[#allocation7 + $0x158] sm:$0xf]
          %v2433 = vld [vmem:[#allocation7 + $0x15c] sm:$0xf]
          %v2434 = vld [vmem:[#allocation7 + $0x160] sm:$0xf]
          %v2435 = vld [vmem:[#allocation7 + $0x164] sm:$0xf]
          %v2436 = vld [vmem:[#allocation7 + $0x168] sm:$0xf]
          %v2437 = vld [vmem:[#allocation7 + $0x16c] sm:$0xf]
          %v2438 = vld [vmem:[#allocation7 + $0x170] sm:$0xf]
          %v2439 = vld [vmem:[#allocation7 + $0x174] sm:$0xf]
          %v2440 = vld [vmem:[#allocation7 + $0x178] sm:$0xf]
          %v2441 = vld [vmem:[#allocation7 + $0x17c] sm:$0xf]
          %v2442 = vld [vmem:[#allocation7 + $0x180] sm:$0xf]
          %v2443 = vld [vmem:[#allocation7 + $0x184] sm:$0xf]
          %v2444 = vld [vmem:[#allocation7 + $0x188] sm:$0xf]
          %v2445 = vld [vmem:[#allocation7 + $0x18c] sm:$0xf]
          %v2446 = vld [vmem:[#allocation7 + $0x190] sm:$0xf]
          %v2447 = vld [vmem:[#allocation7 + $0x194] sm:$0xf]
          %v2448 = vld [vmem:[#allocation7 + $0x198] sm:$0xf]
          %v2449 = vld [vmem:[#allocation7 + $0x19c] sm:$0xf]
          %v2450 = vld [vmem:[#allocation7 + $0x1a0] sm:$0xf]
          %v2451 = vld [vmem:[#allocation7 + $0x1a4] sm:$0xf]
          %v2452 = vld [vmem:[#allocation7 + $0x1a8] sm:$0xf]
          %v2453 = vld [vmem:[#allocation7 + $0x1ac] sm:$0xf]
          %v2454 = vld [vmem:[#allocation7 + $0x1b0] sm:$0xf]
          %v2455 = vld [vmem:[#allocation7 + $0x1b4] sm:$0xf]
          %v2456 = vld [vmem:[#allocation7 + $0x1b8] sm:$0xf]
          %v2457 = vld [vmem:[#allocation7 + $0x1bc] sm:$0xf]
          %v2458 = vld [vmem:[#allocation7 + $0x1c0] sm:$0xf]
          %v2459 = vld [vmem:[#allocation7 + $0x1c4] sm:$0xf]
          %v2460 = vld [vmem:[#allocation7 + $0x1c8] sm:$0xf]
          %v2461 = vld [vmem:[#allocation7 + $0x1cc] sm:$0xf]
          %v2462 = vld [vmem:[#allocation7 + $0x1d0] sm:$0xf]
          %v2463 = vld [vmem:[#allocation7 + $0x1d4] sm:$0xf]
          %v2464 = vld [vmem:[#allocation7 + $0x1d8] sm:$0xf]
          %v2465 = vld [vmem:[#allocation7 + $0x1dc] sm:$0xf]
          %v2466 = vld [vmem:[#allocation7 + $0x1e0] sm:$0xf]
          %v2467 = vld [vmem:[#allocation7 + $0x1e4] sm:$0xf]
          %v2468 = vld [vmem:[#allocation7 + $0x1e8] sm:$0xf]
          %v2469 = vld [vmem:[#allocation7 + $0x1ec] sm:$0xf]
          %v2470 = vld [vmem:[#allocation7 + $0x1f0] sm:$0xf]
          %v2471 = vld [vmem:[#allocation7 + $0x1f4] sm:$0xf]
          %v2472 = vld [vmem:[#allocation7 + $0x1f8] sm:$0xf]
          %v2473 = vld [vmem:[#allocation7 + $0x1fc] sm:$0xf]
          %v2474 = vld [vmem:[%s6] sm:$0x1]
          %v2476 = vperm.slane %v2474, 0
          %v2606 = vunpack.c.l.b16 %v2346
          %v2607 = vunpack.c.l.b16 %v2347
          %v2608 = vunpack.c.l.b16 %v2348
          %v2609 = vunpack.c.l.b16 %v2349
          %v2610 = vunpack.c.l.b16 %v2350
          %v2611 = vunpack.c.l.b16 %v2351
          %v2612 = vunpack.c.l.b16 %v2352
          %v2613 = vunpack.c.l.b16 %v2353
          %v2614 = vunpack.c.l.b16 %v2354
          %v2615 = vunpack.c.l.b16 %v2355
          %v2616 = vunpack.c.l.b16 %v2356
          %v2617 = vunpack.c.l.b16 %v2357
          %v2618 = vunpack.c.l.b16 %v2358
          %v2619 = vunpack.c.l.b16 %v2359
          %v2620 = vunpack.c.l.b16 %v2360
          %v2621 = vunpack.c.l.b16 %v2361
          %v2622 = vunpack.c.l.b16 %v2362
          %v2623 = vunpack.c.l.b16 %v2363
          %v2624 = vunpack.c.l.b16 %v2364
          %v2625 = vunpack.c.l.b16 %v2365
          %v2626 = vunpack.c.l.b16 %v2366
          %v2627 = vunpack.c.l.b16 %v2367
          %v2628 = vunpack.c.l.b16 %v2368
          %v2629 = vunpack.c.l.b16 %v2369
          %v2630 = vunpack.c.l.b16 %v2370
          %v2631 = vunpack.c.l.b16 %v2371
          %v2632 = vunpack.c.l.b16 %v2372
          %v2633 = vunpack.c.l.b16 %v2373
          %v2634 = vunpack.c.l.b16 %v2374
          %v2635 = vunpack.c.l.b16 %v2375
          %v2636 = vunpack.c.l.b16 %v2376
          %v2637 = vunpack.c.l.b16 %v2377
          %v2638 = vunpack.c.l.b16 %v2378
          %v2639 = vunpack.c.l.b16 %v2379
          %v2640 = vunpack.c.l.b16 %v2380
          %v2641 = vunpack.c.l.b16 %v2381
          %v2642 = vunpack.c.l.b16 %v2382
          %v2643 = vunpack.c.l.b16 %v2383
          %v2644 = vunpack.c.l.b16 %v2384
          %v2645 = vunpack.c.l.b16 %v2385
          %v2646 = vunpack.c.l.b16 %v2386
          %v2647 = vunpack.c.l.b16 %v2387
          %v2648 = vunpack.c.l.b16 %v2388
          %v2649 = vunpack.c.l.b16 %v2389
          %v2650 = vunpack.c.l.b16 %v2390
          %v2651 = vunpack.c.l.b16 %v2391
          %v2652 = vunpack.c.l.b16 %v2392
          %v2653 = vunpack.c.l.b16 %v2393
          %v2654 = vunpack.c.l.b16 %v2394
          %v2655 = vunpack.c.l.b16 %v2395
          %v2656 = vunpack.c.l.b16 %v2396
          %v2657 = vunpack.c.l.b16 %v2397
          %v2658 = vunpack.c.l.b16 %v2398
          %v2659 = vunpack.c.l.b16 %v2399
          %v2660 = vunpack.c.l.b16 %v2400
          %v2661 = vunpack.c.l.b16 %v2401
          %v2662 = vunpack.c.l.b16 %v2402
          %v2663 = vunpack.c.l.b16 %v2403
          %v2664 = vunpack.c.l.b16 %v2404
          %v2665 = vunpack.c.l.b16 %v2405
          %v2666 = vunpack.c.l.b16 %v2406
          %v2667 = vunpack.c.l.b16 %v2407
          %v2668 = vunpack.c.l.b16 %v2408
          %v2669 = vunpack.c.l.b16 %v2409
          %v2670 = vunpack.c.l.b16 %v2410
          %v2671 = vunpack.c.l.b16 %v2411
          %v2672 = vunpack.c.l.b16 %v2412
          %v2673 = vunpack.c.l.b16 %v2413
          %v2674 = vunpack.c.l.b16 %v2414
          %v2675 = vunpack.c.l.b16 %v2415
          %v2676 = vunpack.c.l.b16 %v2416
          %v2677 = vunpack.c.l.b16 %v2417
          %v2678 = vunpack.c.l.b16 %v2418
          %v2679 = vunpack.c.l.b16 %v2419
          %v2680 = vunpack.c.l.b16 %v2420
          %v2681 = vunpack.c.l.b16 %v2421
          %v2682 = vunpack.c.l.b16 %v2422
          %v2683 = vunpack.c.l.b16 %v2423
          %v2684 = vunpack.c.l.b16 %v2424
          %v2685 = vunpack.c.l.b16 %v2425
          %v2686 = vunpack.c.l.b16 %v2426
          %v2687 = vunpack.c.l.b16 %v2427
          %v2688 = vunpack.c.l.b16 %v2428
          %v2689 = vunpack.c.l.b16 %v2429
          %v2690 = vunpack.c.l.b16 %v2430
          %v2691 = vunpack.c.l.b16 %v2431
          %v2692 = vunpack.c.l.b16 %v2432
          %v2693 = vunpack.c.l.b16 %v2433
          %v2694 = vunpack.c.l.b16 %v2434
          %v2695 = vunpack.c.l.b16 %v2435
          %v2696 = vunpack.c.l.b16 %v2436
          %v2697 = vunpack.c.l.b16 %v2437
          %v2698 = vunpack.c.l.b16 %v2438
          %v2699 = vunpack.c.l.b16 %v2439
          %v2700 = vunpack.c.l.b16 %v2440
          %v2701 = vunpack.c.l.b16 %v2441
          %v2702 = vunpack.c.l.b16 %v2442
          %v2703 = vunpack.c.l.b16 %v2443
          %v2704 = vunpack.c.l.b16 %v2444
          %v2705 = vunpack.c.l.b16 %v2445
          %v2706 = vunpack.c.l.b16 %v2446
          %v2707 = vunpack.c.l.b16 %v2447
          %v2708 = vunpack.c.l.b16 %v2448
          %v2709 = vunpack.c.l.b16 %v2449
          %v2710 = vunpack.c.l.b16 %v2450
          %v2711 = vunpack.c.l.b16 %v2451
          %v2712 = vunpack.c.l.b16 %v2452
          %v2713 = vunpack.c.l.b16 %v2453
          %v2714 = vunpack.c.l.b16 %v2454
          %v2715 = vunpack.c.l.b16 %v2455
          %v2716 = vunpack.c.l.b16 %v2456
          %v2717 = vunpack.c.l.b16 %v2457
          %v2718 = vunpack.c.l.b16 %v2458
          %v2719 = vunpack.c.l.b16 %v2459
          %v2720 = vunpack.c.l.b16 %v2460
          %v2721 = vunpack.c.l.b16 %v2461
          %v2722 = vunpack.c.l.b16 %v2462
          %v2723 = vunpack.c.l.b16 %v2463
          %v2724 = vunpack.c.l.b16 %v2464
          %v2725 = vunpack.c.l.b16 %v2465
          %v2726 = vunpack.c.l.b16 %v2466
          %v2727 = vunpack.c.l.b16 %v2467
          %v2728 = vunpack.c.l.b16 %v2468
          %v2729 = vunpack.c.l.b16 %v2469
          %v2730 = vunpack.c.l.b16 %v2470
          %v2731 = vunpack.c.l.b16 %v2471
          %v2732 = vunpack.c.l.b16 %v2472
          %v2733 = vunpack.c.l.b16 %v2473
          %v2734 = vpack.c.b16 %v2607, %v2606
          %v2735 = vpack.c.b16 %v2609, %v2608
          %v2736 = vpack.c.b16 %v2611, %v2610
          %v2737 = vpack.c.b16 %v2613, %v2612
          %v2738 = vpack.c.b16 %v2615, %v2614
          %v2739 = vpack.c.b16 %v2617, %v2616
          %v2740 = vpack.c.b16 %v2619, %v2618
          %v2741 = vpack.c.b16 %v2621, %v2620
          %v2742 = vpack.c.b16 %v2623, %v2622
          %v2743 = vpack.c.b16 %v2625, %v2624
          %v2744 = vpack.c.b16 %v2627, %v2626
          %v2745 = vpack.c.b16 %v2629, %v2628
          %v2746 = vpack.c.b16 %v2631, %v2630
          %v2747 = vpack.c.b16 %v2633, %v2632
          %v2748 = vpack.c.b16 %v2635, %v2634
          %v2749 = vpack.c.b16 %v2637, %v2636
          %v2750 = vpack.c.b16 %v2639, %v2638
          %v2751 = vpack.c.b16 %v2641, %v2640
          %v2752 = vpack.c.b16 %v2643, %v2642
          %v2753 = vpack.c.b16 %v2645, %v2644
          %v2754 = vpack.c.b16 %v2647, %v2646
          %v2755 = vpack.c.b16 %v2649, %v2648
          %v2756 = vpack.c.b16 %v2651, %v2650
          %v2757 = vpack.c.b16 %v2653, %v2652
          %v2758 = vpack.c.b16 %v2655, %v2654
          %v2759 = vpack.c.b16 %v2657, %v2656
          %v2760 = vpack.c.b16 %v2659, %v2658
          %v2761 = vpack.c.b16 %v2661, %v2660
          %v2762 = vpack.c.b16 %v2663, %v2662
          %v2763 = vpack.c.b16 %v2665, %v2664
          %v2764 = vpack.c.b16 %v2667, %v2666
          %v2765 = vpack.c.b16 %v2669, %v2668
          %v2766 = vpack.c.b16 %v2671, %v2670
          %v2767 = vpack.c.b16 %v2673, %v2672
          %v2768 = vpack.c.b16 %v2675, %v2674
          %v2769 = vpack.c.b16 %v2677, %v2676
          %v2770 = vpack.c.b16 %v2679, %v2678
          %v2771 = vpack.c.b16 %v2681, %v2680
          %v2772 = vpack.c.b16 %v2683, %v2682
          %v2773 = vpack.c.b16 %v2685, %v2684
          %v2774 = vpack.c.b16 %v2687, %v2686
          %v2775 = vpack.c.b16 %v2689, %v2688
          %v2776 = vpack.c.b16 %v2691, %v2690
          %v2777 = vpack.c.b16 %v2693, %v2692
          %v2778 = vpack.c.b16 %v2695, %v2694
          %v2779 = vpack.c.b16 %v2697, %v2696
          %v2780 = vpack.c.b16 %v2699, %v2698
          %v2781 = vpack.c.b16 %v2701, %v2700
          %v2782 = vpack.c.b16 %v2703, %v2702
          %v2783 = vpack.c.b16 %v2705, %v2704
          %v2784 = vpack.c.b16 %v2707, %v2706
          %v2785 = vpack.c.b16 %v2709, %v2708
          %v2786 = vpack.c.b16 %v2711, %v2710
          %v2787 = vpack.c.b16 %v2713, %v2712
          %v2788 = vpack.c.b16 %v2715, %v2714
          %v2789 = vpack.c.b16 %v2717, %v2716
          %v2790 = vpack.c.b16 %v2719, %v2718
          %v2791 = vpack.c.b16 %v2721, %v2720
          %v2792 = vpack.c.b16 %v2723, %v2722
          %v2793 = vpack.c.b16 %v2725, %v2724
          %v2794 = vpack.c.b16 %v2727, %v2726
          %v2795 = vpack.c.b16 %v2729, %v2728
          %v2796 = vpack.c.b16 %v2731, %v2730
          %v2797 = vpack.c.b16 %v2733, %v2732
          %2862 = vmatpush.bf16.msra.mxu0 %v2741
          %2863 = vmatpush.bf16.msra.mxu0 %v2740
          %2864 = vmatpush.bf16.msra.mxu0 %v2739
          %2865 = vmatpush.bf16.msra.mxu0 %v2738
          %2866 = vmatpush.bf16.msra.mxu0 %v2737
          %2867 = vmatpush.bf16.msra.mxu0 %v2736
          %2868 = vmatpush.bf16.msra.mxu0 %v2735
          %2869 = vmatpush.bf16.msra.mxu0 %v2734
          %2870 = vmatmul.bf16.gmra.mxu0 %v2338
          %v2871 = vpop.f32.mrf.mxu0
          %v2872 = vadd.f32 %v2476, %v2871
          %v2873 = vpop.f32.mrf.mxu0
          %2874 = vdwg.mxu0
          %2875 = vmatpush.bf16.msra.mxu0 %v2749
          %2876 = vmatpush.bf16.msra.mxu0 %v2748
          %2877 = vmatpush.bf16.msra.mxu0 %v2747
          %2878 = vmatpush.bf16.msra.mxu0 %v2746
          %2879 = vmatpush.bf16.msra.mxu0 %v2745
          %2880 = vmatpush.bf16.msra.mxu0 %v2744
          %2881 = vmatpush.bf16.msra.mxu0 %v2743
          %2882 = vmatpush.bf16.msra.mxu0 %v2742
          %2883 = vmatmul.bf16.gmra.mxu0 %v2339
          %v2884 = vpop.f32.mrf.mxu0
          %v2885 = vadd.f32 %v2872, %v2884
          %v2886 = vpop.f32.mrf.mxu0
          %2887 = vdwg.mxu0
          %2888 = vmatpush.bf16.msra.mxu0 %v2757
          %2889 = vmatpush.bf16.msra.mxu0 %v2756
          %2890 = vmatpush.bf16.msra.mxu0 %v2755
          %2891 = vmatpush.bf16.msra.mxu0 %v2754
          %2892 = vmatpush.bf16.msra.mxu0 %v2753
          %2893 = vmatpush.bf16.msra.mxu0 %v2752
          %2894 = vmatpush.bf16.msra.mxu0 %v2751
          %2895 = vmatpush.bf16.msra.mxu0 %v2750
          %2896 = vmatmul.bf16.gmra.mxu0 %v2340
          %v2897 = vpop.f32.mrf.mxu0
          %v2898 = vadd.f32 %v2885, %v2897
          %v2899 = vpop.f32.mrf.mxu0
          %2900 = vdwg.mxu0
          %2901 = vmatpush.bf16.msra.mxu0 %v2765
          %2902 = vmatpush.bf16.msra.mxu0 %v2764
          %2903 = vmatpush.bf16.msra.mxu0 %v2763
          %2904 = vmatpush.bf16.msra.mxu0 %v2762
          %2905 = vmatpush.bf16.msra.mxu0 %v2761
          %2906 = vmatpush.bf16.msra.mxu0 %v2760
          %2907 = vmatpush.bf16.msra.mxu0 %v2759
          %2908 = vmatpush.bf16.msra.mxu0 %v2758
          %2909 = vmatmul.bf16.gmra.mxu0 %v2341
          %v2910 = vpop.f32.mrf.mxu0
          %v2911 = vadd.f32 %v2898, %v2910
          %v2912 = vpop.f32.mrf.mxu0
          %2913 = vdwg.mxu0
          %2914 = vmatpush.bf16.msra.mxu0 %v2773
          %2915 = vmatpush.bf16.msra.mxu0 %v2772
          %2916 = vmatpush.bf16.msra.mxu0 %v2771
          %2917 = vmatpush.bf16.msra.mxu0 %v2770
          %2918 = vmatpush.bf16.msra.mxu0 %v2769
          %2919 = vmatpush.bf16.msra.mxu0 %v2768
          %2920 = vmatpush.bf16.msra.mxu0 %v2767
          %2921 = vmatpush.bf16.msra.mxu0 %v2766
          %2922 = vmatmul.bf16.gmra.mxu0 %v2342
          %v2923 = vpop.f32.mrf.mxu0
          %v2924 = vadd.f32 %v2911, %v2923
          %v2925 = vpop.f32.mrf.mxu0
          %2926 = vdwg.mxu0
          %2927 = vmatpush.bf16.msra.mxu0 %v2781
          %2928 = vmatpush.bf16.msra.mxu0 %v2780
          %2929 = vmatpush.bf16.msra.mxu0 %v2779
          %2930 = vmatpush.bf16.msra.mxu0 %v2778
          %2931 = vmatpush.bf16.msra.mxu0 %v2777
          %2932 = vmatpush.bf16.msra.mxu0 %v2776
          %2933 = vmatpush.bf16.msra.mxu0 %v2775
          %2934 = vmatpush.bf16.msra.mxu0 %v2774
          %2935 = vmatmul.bf16.gmra.mxu0 %v2343
          %v2936 = vpop.f32.mrf.mxu0
          %v2937 = vadd.f32 %v2924, %v2936
          %v2938 = vpop.f32.mrf.mxu0
          %2939 = vdwg.mxu0
          %2940 = vmatpush.bf16.msra.mxu0 %v2789
          %2941 = vmatpush.bf16.msra.mxu0 %v2788
          %2942 = vmatpush.bf16.msra.mxu0 %v2787
          %2943 = vmatpush.bf16.msra.mxu0 %v2786
          %2944 = vmatpush.bf16.msra.mxu0 %v2785
          %2945 = vmatpush.bf16.msra.mxu0 %v2784
          %2946 = vmatpush.bf16.msra.mxu0 %v2783
          %2947 = vmatpush.bf16.msra.mxu0 %v2782
          %2948 = vmatmul.bf16.gmra.mxu0 %v2344
          %v2949 = vpop.f32.mrf.mxu0
          %v2950 = vadd.f32 %v2937, %v2949
          %v2951 = vpop.f32.mrf.mxu0
          %2952 = vdwg.mxu0
          %2953 = vmatpush.bf16.msra.mxu0 %v2797
          %2954 = vmatpush.bf16.msra.mxu0 %v2796
          %2955 = vmatpush.bf16.msra.mxu0 %v2795
          %2956 = vmatpush.bf16.msra.mxu0 %v2794
          %2957 = vmatpush.bf16.msra.mxu0 %v2793
          %2958 = vmatpush.bf16.msra.mxu0 %v2792
          %2959 = vmatpush.bf16.msra.mxu0 %v2791
          %2960 = vmatpush.bf16.msra.mxu0 %v2790
          %2961 = vmatmul.bf16.gmra.mxu0 %v2345
          %v2962 = vpop.f32.mrf.mxu0
          %v2963 = vadd.f32 %v2950, %v2962
          %v2964 = vpop.f32.mrf.mxu0
          %2965 = vdwg.mxu0
          %2966 = vst [vmem:[#allocation9] sm:$0x3] %v2963
        $region102: #{tpu_custom_call.1} parent=81 // pred_fallthru
          _
        // Predicated region
        $region103: #{tpu_custom_call.1} parent=81 // pred_check
          %p2967 = pneg %p205
        $region104: #{tpu_custom_call.1} parent=81 // pred_check_branch
          %2969 = sbr.rel (%p2967) target = $region106
        $region105: #{tpu_custom_call.1} parent=81 // pred_region
          %2971 = vsyncadd [#allocation6], 0
          %s2972 = smul.addr %s25, 2
          %s2973 = scalar_lea.hbm %s7, %s2972
          %s2975 = sshll.u32 [#allocation9], 4
          %s2976 = int_to_ptr.vmem [resolvable:$true] %s2975
          %s2977 = sshll.u32 %s2973, 4
          %s2978 = int_to_ptr.hbm [resolvable:$true] %s2977
          %2980 = dma.vmem_to_hbm [thread:$0]  %s2976, 32, %s2978, [#allocation6]
        $region106: #{tpu_custom_call.1} parent=81 // pred_fallthru
          _
        // Predicated region
        $region107: #{tpu_custom_call.1} parent=81 // pred_check
          %p2981 = pneg %p205
        $region108: #{tpu_custom_call.1} parent=81 // pred_check_branch
          %2983 = sbr.rel (%p2981) target = $region110
        $region109: #{tpu_custom_call.1} parent=81 // pred_region
          %2985 = dma.done [#allocation6], 32
        $region110: #{tpu_custom_call.1} parent=81 // pred_fallthru
          _
      $region82: #{tpu_custom_call.1} parent=5 // pred_fallthru
        _
      %p2986 = scmp.le.s32.totalorder 2, %s16
      // Predicated region
      $region111: #{tpu_custom_call.1} parent=5 // pred_check
        %p2987 = pneg %p2986
      $region112: #{tpu_custom_call.1} parent=5 // pred_check_branch
        %2989 = sbr.rel (%p2987) target = $region114
      $region113: #{tpu_custom_call.1} parent=5 // pred_region
        %s2990 = ssub.s32 %s16, 2
      $region114: #{tpu_custom_call.1} parent=5 // pred_fallthru
        _
    $region6: #{tpu_custom_call.1} parent=1 // loop_footer
      %s20 = sadd.s32 1, %s16
    $region7: #{tpu_custom_call.1} parent=1 // loop_footer_branch
      %15 = sbr.rel target = $region3
    $region8: #{tpu_custom_call.1} parent=1 // loop_exit
      _
    %2991 = vsyncpa [#allocation5], 1
    %s2992 = scalar_lea.sflag [#allocation5], 1
    %2993 = vsyncpa %s2992, 1
    %2994 = vsyncpa [#allocation8], 1
    %2995 = vsyncpa [#allocation6], 1
    %s2996 = scalar_lea.sflag [#allocation6], 1
    %2997 = vsyncpa %s2996, 1

</llo_original>
